<compile_context>
chip_gen: v7x
topology: tpu7x:2x2x1
jax: 0.10.0
libtpu: 0.0.40
codegen_flags: <defaults>
</compile_context>

<pallas_src>
import functools

import jax
import jax.numpy as jnp
from jax.experimental import pallas as pl
from jax.experimental.pallas import tpu as pltpu

LANE = 128


def _round_up(x, m):
    return (x + m - 1) // m * m


def _pick_tile(n, max_tile=256, multiple=8):
    """Largest tile <= max_tile that divides n and is a multiple of `multiple`;
    falls back to the full extent (always a legal block dim)."""
    for t in range(min(n, max_tile), multiple - 1, -1):
        if t % multiple == 0 and n % t == 0:
            return t
    return n


# ------------------------------ Pallas kernels -------------------------------


def _layer_norm(x, w, b, e_real, eps=1e-5):
    # Padded feature lanes of `x` are zero by construction, so reducing over
    # all Ep lanes but dividing by the real E gives exact statistics, and the
    # zero-padded gamma/beta keep the padded lanes at zero.
    inv_e = 1.0 / e_real
    mean = jnp.sum(x, axis=-1, keepdims=True) * inv_e
    var = jnp.sum(x * x, axis=-1, keepdims=True) * inv_e - mean * mean
    return (x - mean) * jax.lax.rsqrt(var + eps) * w + b


def encoder_block_kernel(
    x_ref,     # (1, S, Ep)    full-sequence layer input (resident per batch)
    wqT_ref, wkT_ref, wvT_ref,     # (Ep, H*dp)   (wq already scaled by 1/sqrt(hd))
    bq_ref, bk_ref, bv_ref,        # (1, H*dp)
    wo_ref,    # (H, dp, Ep)   out-projection, per-head slabs
    bo_ref,    # (1, Ep)
    ln1w_ref, ln1b_ref,            # (1, Ep)
    w1T_ref,   # (Ep, Fp)
    b1_ref,    # (1, Fp)
    w2T_ref,   # (Fp, Ep)
    b2_ref,    # (1, Ep)
    ln2w_ref, ln2b_ref,            # (1, Ep)
    out_ref,   # (1, TQ, Ep)
    k_scr,     # (H, S, dp)  VMEM scratch, persists across seq tiles
    v_scr,     # (H, S, dp)
    *,
    num_heads, head_dim_p, e_real, compute_dtype,
):
    H, dp = num_heads, head_dim_p
    cdt = compute_dtype
    TQ = out_ref.shape[1]

    # --- K/V projection for the whole sequence: once per batch element -------
    # TODO(synk): for very long sequences, stream K/V tiles with an online
    # softmax (flash pattern) instead of holding (H, S, dp) scratch.
    @pl.when(pl.program_id(1) == 0)
    def _():
        xf = x_ref[0].astype(cdt)                                # (S, Ep)
        k2d = jnp.dot(xf, wkT_ref[...].astype(cdt),
                      preferred_element_type=jnp.float32) + bk_ref[...]
        v2d = jnp.dot(xf, wvT_ref[...].astype(cdt),
                      preferred_element_type=jnp.float32) + bv_ref[...]
        for h in range(H):                   # lane-aligned (128-mult) slices
            k_scr[h] = k2d[:, h * dp:(h + 1) * dp]
            v_scr[h] = v2d[:, h * dp:(h + 1) * dp]

    # --- query rows for this tile, sliced from the resident full-seq block ---
    q_start = pl.multiple_of(pl.program_id(1) * TQ, TQ)
    x = x_ref[0, pl.ds(q_start, TQ), :]                          # (TQ, Ep) f32
    xc = x.astype(cdt)

    # --- Q projection: all heads in a single wide MXU matmul (pre-scaled) ----
    q2d = jnp.dot(xc, wqT_ref[...].astype(cdt),
                  preferred_element_type=jnp.float32) + bq_ref[...]
    qh = jnp.stack([q2d[:, h * dp:(h + 1) * dp] for h in range(H)], axis=0)

    # --- head-batched attention (single einsum per contraction) --------------
    s = jnp.einsum("hqd,hkd->hqk", qh.astype(cdt), k_scr[...].astype(cdt),
                   preferred_element_type=jnp.float32)           # (H, TQ, S)
    s = s - jnp.max(s, axis=-1, keepdims=True)
    p = jnp.exp(s)
    p = p * pl.reciprocal(jnp.sum(p, axis=-1, keepdims=True), approx=True)
    ctx = jnp.einsum("hqk,hkd->hqd", p.astype(cdt), v_scr[...].astype(cdt),
                     preferred_element_type=jnp.float32)         # (H, TQ, dp)

    # --- output projection: batched over heads, summed (no concat) -----------
    o = jnp.einsum("hqd,hde->hqe", ctx.astype(cdt), wo_ref[...].astype(cdt),
                   preferred_element_type=jnp.float32)           # (H, TQ, Ep)
    attn = jnp.sum(o, axis=0) + bo_ref[...]                      # (TQ, Ep)

    # --- residual + LayerNorm 1 (post-norm, PyTorch default) -----------------
    y = _layer_norm(x + attn, ln1w_ref[...], ln1b_ref[...], e_real)

    # --- feed-forward: Linear -> ReLU -> Linear -------------------------------
    h1 = jnp.dot(y.astype(cdt), w1T_ref[...].astype(cdt),
                 preferred_element_type=jnp.float32) + b1_ref[...]
    h1 = jnp.maximum(h1, 0.0)
    h2 = jnp.dot(h1.astype(cdt), w2T_ref[...].astype(cdt),
                 preferred_element_type=jnp.float32) + b2_ref[...]

    # --- residual + LayerNorm 2 ----------------------------------------------
    out_ref[0] = _layer_norm(y + h2, ln2w_ref[...], ln2b_ref[...], e_real)


def fc_out_kernel(x_ref, wT_ref, b_ref, out_ref, *, compute_dtype):
    out_ref[...] = (
        jnp.dot(x_ref[0].astype(compute_dtype),
                wT_ref[...].astype(compute_dtype),
                preferred_element_type=jnp.float32)
        + b_ref[...])


# ------------------------------ kernel wrappers -------------------------------


def encoder_layer(x, lp, cfg, q_tile):
    """x: (B, S, Ep) float32 -> (B, S, Ep) float32."""
    B, S, Ep = x.shape
    H = cfg["num_heads"]
    dp = cfg["head_dim_p"]
    Hdp = H * dp
    Fp = cfg["f_pad"]
    nQ = S // q_tile

    def wspec(shape):
        return pl.BlockSpec(shape, lambda b, qi: (0,) * len(shape))

    kernel = functools.partial(
        encoder_block_kernel,
        num_heads=H, head_dim_p=dp,
        e_real=cfg["embed_size"], compute_dtype=cfg["compute_dtype"])

    return pl.pallas_call(
        kernel,
        out_shape=jax.ShapeDtypeStruct((B, S, Ep), jnp.float32),
        grid=(B, nQ),
        in_specs=[
            pl.BlockSpec((1, S, Ep), lambda b, qi: (b, 0, 0)),   # full-seq x
            wspec((Ep, Hdp)), wspec((Ep, Hdp)), wspec((Ep, Hdp)),
            wspec((1, Hdp)), wspec((1, Hdp)), wspec((1, Hdp)),
            wspec((H, dp, Ep)), wspec((1, Ep)),
            wspec((1, Ep)), wspec((1, Ep)),
            wspec((Ep, Fp)), wspec((1, Fp)),
            wspec((Fp, Ep)), wspec((1, Ep)),
            wspec((1, Ep)), wspec((1, Ep)),
        ],
        out_specs=pl.BlockSpec((1, q_tile, Ep), lambda b, qi: (b, qi, 0)),
        scratch_shapes=[pltpu.VMEM((H, S, dp), jnp.float32),
                        pltpu.VMEM((H, S, dp), jnp.float32)],
        compiler_params=pltpu.CompilerParams(
            # batch axis parallel (megacore); seq-tile axis sequential because
            # the K/V scratch is filled at qi == 0 and reused by later tiles.
            dimension_semantics=("parallel", "arbitrary"),
            vmem_limit_bytes=64 * 1024 * 1024),
    )(x,
      lp["wqT"], lp["wkT"], lp["wvT"], lp["bq"], lp["bk"], lp["bv"],
      lp["wo3"], lp["bo"], lp["ln1w"], lp["ln1b"],
      lp["w1T"], lp["b1"], lp["w2T"], lp["b2"], lp["ln2w"], lp["ln2b"])


def fc_out(x, wT, b, *, s_tile, v_tile, compute_dtype):
    """x: (B, S, Ep) -> lane-dense (S, B*Vp) logits slab."""
    B, S, Ep = x.shape
    Vp = wT.shape[1]
    nS, nV = S // s_tile, Vp // v_tile
    kernel = functools.partial(fc_out_kernel, compute_dtype=compute_dtype)
    return pl.pallas_call(
        kernel,
        out_shape=jax.ShapeDtypeStruct((S, B * Vp), jnp.float32),
        grid=(B, nS, nV),
        in_specs=[
            pl.BlockSpec((1, s_tile, Ep), lambda bi, si, vi: (bi, si, 0)),
            pl.BlockSpec((Ep, v_tile), lambda bi, si, vi: (0, vi)),
            pl.BlockSpec((1, v_tile), lambda bi, si, vi: (0, vi)),
        ],
        out_specs=pl.BlockSpec((s_tile, v_tile),
                               lambda bi, si, vi: (si, bi * nV + vi)),
        compiler_params=pltpu.CompilerParams(
            dimension_semantics=("parallel", "parallel", "parallel"),
            vmem_limit_bytes=64 * 1024 * 1024),
    )(x, wT, b)


# ------------------------------- forward pass --------------------------------


def music_transformer_forward(tokens, padded, cfg):
    """tokens: (S, B) int32 -> logits (S, B, vocab) float32."""
    S, B = tokens.shape
    V, Vp = cfg["vocab_size"], cfg["v_pad"]

    # Token + positional embedding, gathered batch-first so the encoder stack
    # never needs a hidden-state transpose (only the tiny id tensor moves).
    tok_bs = tokens.T                                            # (B, S)
    h = jnp.take(padded["embedding"], tok_bs, axis=0)            # (B, S, Ep)
    h = (h + padded["pos_embedding"][None, :S, :]).astype(jnp.float32)
    # TODO(synk): dropout (training-mode stochastic masking) not reproduced;
    # identity / eval semantics.

    q_tile = _pick_tile(S, max_tile=256, multiple=8)
    for lp in padded["layers"]:
        h = encoder_layer(h, lp, cfg, q_tile)

    v_tile = _pick_tile(Vp, max_tile=256, multiple=LANE)
    logits = fc_out(h, padded["fcT"], padded["fcb"], s_tile=q_tile,
                    v_tile=v_tile, compute_dtype=cfg["compute_dtype"])
    # (S, B*Vp) -> (S, B, Vp) is a free reshape; drop the vocab padding.
    return logits.reshape(S, B, Vp)[:, :, :V]


# --------------------------- parameter construction --------------------------


def init_params(key, vocab_size, embed_size, num_heads, num_layers, seq_length,
                dim_feedforward=2048):
    """Parameters in the same layout as the PyTorch module."""
    E, F, V = embed_size, dim_feedforward, vocab_size

    def w(k, shape, scale=0.02):
        return (scale * jax.random.normal(k, shape)).astype(jnp.float32)

    keys = jax.random.split(key, 4 + 8 * num_layers)
    ki = iter(keys)
    params = {
        "embedding": w(next(ki), (V, E)),
        "pos_embedding": w(next(ki), (seq_length, E)),
        "fc_w": w(next(ki), (V, E)),
        "fc_b": w(next(ki), (V,)),
        "layers": [],
    }
    for _ in range(num_layers):
        params["layers"].append({
            "in_proj_w": w(next(ki), (3 * E, E)),
            "in_proj_b": w(next(ki), (3 * E,)),
            "out_proj_w": w(next(ki), (E, E)),
            "out_proj_b": w(next(ki), (E,)),
            "linear1_w": w(next(ki), (F, E)),
            "linear1_b": w(next(ki), (F,)),
            "linear2_w": w(next(ki), (E, F)),
            "linear2_b": w(next(ki), (E,)),
            "ln1_w": jnp.ones((E,), jnp.float32),
            "ln1_b": jnp.zeros((E,), jnp.float32),
            "ln2_w": jnp.ones((E,), jnp.float32),
            "ln2_b": jnp.zeros((E,), jnp.float32),
        })
    return params


def prepare_params(params, num_heads):
    """Zero-pad / repack PyTorch-layout params into the lane-aligned kernel
    layout.  Padded rows/cols are zero so the padded math stays exact.  The
    1/sqrt(head_dim) attention scale is folded into Wq / bq."""
    V, E = params["embedding"].shape
    F = params["layers"][0]["linear1_w"].shape[0]
    assert E % num_heads == 0
    H = num_heads
    hd = E // H
    Ep = _round_up(E, LANE)
    dp = _round_up(hd, LANE)
    Fp = _round_up(F, LANE)
    Vp = _round_up(V, LANE)
    q_scale = 1.0 / (hd ** 0.5)

    def pad2(a, rows, cols):
        return jnp.pad(a, ((0, rows - a.shape[0]), (0, cols - a.shape[1])))

    def row_vec(a, cols):
        return jnp.pad(a, (0, cols - a.shape[0])).reshape(1, cols)

    def pack_head_wT(wmat):          # (H*hd, E_in) -> (Ep, H*dp)
        wt = wmat.T.reshape(E, H, hd)
        wt = jnp.pad(wt, ((0, Ep - E), (0, 0), (0, dp - hd)))
        return wt.reshape(Ep, H * dp)

    def pack_head_b(bvec):           # (H*hd,) -> (1, H*dp)
        bb = jnp.pad(bvec.reshape(H, hd), ((0, 0), (0, dp - hd)))
        return bb.reshape(1, H * dp)

    padded = {
        "embedding": pad2(params["embedding"], V, Ep),
        "pos_embedding": pad2(params["pos_embedding"],
                              params["pos_embedding"].shape[0], Ep),
        "fcT": pad2(params["fc_w"].T, Ep, Vp),
        "fcb": row_vec(params["fc_b"], Vp),
        "layers": [],
    }
    for lp in params["layers"]:
        wq, wk, wv = jnp.split(lp["in_proj_w"], 3, axis=0)
        bq, bk, bv = jnp.split(lp["in_proj_b"], 3)
        wo3 = jnp.pad(lp["out_proj_w"].T.reshape(H, hd, E),
                      ((0, 0), (0, dp - hd), (0, Ep - E)))
        padded["layers"].append({
            "wqT": pack_head_wT(wq) * q_scale,      # scale folded into Q proj
            "wkT": pack_head_wT(wk),
            "wvT": pack_head_wT(wv),
            "bq": pack_head_b(bq) * q_scale,
            "bk": pack_head_b(bk), "bv": pack_head_b(bv),
            "wo3": wo3,
            "bo": row_vec(lp["out_proj_b"], Ep),
            "ln1w": row_vec(lp["ln1_w"], Ep),
            "ln1b": row_vec(lp["ln1_b"], Ep),
            "w1T": pad2(lp["linear1_w"].T, Ep, Fp),
            "b1": row_vec(lp["linear1_b"], Fp),
            "w2T": pad2(lp["linear2_w"].T, Fp, Ep),
            "b2": row_vec(lp["linear2_b"], Ep),
            "ln2w": row_vec(lp["ln2_w"], Ep),
            "ln2b": row_vec(lp["ln2_b"], Ep),
        })

    cfg = {
        "num_heads": H, "head_dim": hd, "head_dim_p": dp,
        "embed_size": E, "e_pad": Ep, "f_pad": Fp,
        "vocab_size": V, "v_pad": Vp,
        # Set to jnp.bfloat16 for production (halves HBM/VMEM traffic, bf16 MXU
        # rate; accumulation stays f32).  Kept f32 here for exact parity with
        # the PyTorch reference module.
        "compute_dtype": jnp.float32,
    }
    return padded, cfg


# ---------------------------------- main --------------------------------------

if __name__ == "__main__":
    vocab_size = 64
    embed_size = 32
    num_heads = 4
    num_layers = 2
    seq_length = 8
    batch_size = 2

    key = jax.random.PRNGKey(0)
    pkey, xkey = jax.random.split(key)
    torch_like_params = init_params(pkey, vocab_size, embed_size, num_heads,
                                    num_layers, seq_length)
    padded_params, cfg = prepare_params(torch_like_params, num_heads)

    # tokens: (seq, batch) int32, same convention as the PyTorch module
    tokens = jax.random.randint(xkey, (seq_length, batch_size), 0, vocab_size,
                                dtype=jnp.int32)

    fwd = jax.jit(functools.partial(music_transformer_forward, cfg=cfg))
    logits = fwd(tokens, padded_params)
    jax.block_until_ready(logits)

    assert logits.shape == (seq_length, batch_size, vocab_size)
    assert logits.dtype == jnp.float32
    print("KERNEL_OK")
</pallas_src>

<mosaic_0001>
module attributes {stable_mosaic.version = 11 : i64} {
  func.func @fc_out_kernel(%arg0: i32, %arg1: i32, %arg2: i32, %arg3: memref<1x8x128xf32, #tpu.memory_space<vmem>>, %arg4: memref<128x128xf32, #tpu.memory_space<vmem>>, %arg5: memref<1x128xf32, #tpu.memory_space<vmem>>, %arg6: memref<8x128xf32, #tpu.memory_space<vmem>>) attributes {dimension_semantics = [#tpu.dimension_semantics<parallel>, #tpu.dimension_semantics<parallel>, #tpu.dimension_semantics<parallel>], iteration_bounds = array<i64: 2, 1, 1>, scalar_prefetch = 0 : i64, scratch_operands = 0 : i64, tpu.core_type = #tpu.core_type<tc>, window_params = [{transform_indices = @transform_0, window_bounds = array<i64: 1, 8, 128>}, {transform_indices = @transform_1, window_bounds = array<i64: 128, 128>}, {transform_indices = @transform_2, window_bounds = array<i64: 1, 128>}, {transform_indices = @transform_3, window_bounds = array<i64: 8, 128>}]} {
    %c0 = arith.constant 0 : index
    %c0_0 = arith.constant 0 : index
    %c0_1 = arith.constant 0 : index
    %0 = vector.load %arg3[%c0, %c0_0, %c0_1] : memref<1x8x128xf32, #tpu.memory_space<vmem>>, vector<1x8x128xf32>
    %1 = vector.shape_cast %0 : vector<1x8x128xf32> to vector<8x128xf32>
    %c0_2 = arith.constant 0 : index
    %c0_3 = arith.constant 0 : index
    %2 = vector.load %arg4[%c0_2, %c0_3] : memref<128x128xf32, #tpu.memory_space<vmem>>, vector<128x128xf32>
    %cst = arith.constant dense<0.000000e+00> : vector<8x128xf32>
    %3 = tpu.matmul %1, %2, %cst {dimension_numbers = #tpu.dot_dimension_numbers<[1], [0], [0], [1], [0, 0, 1, 1], [], []>} : vector<8x128xf32>, vector<128x128xf32>, vector<8x128xf32> -> vector<8x128xf32>
    %c0_4 = arith.constant 0 : index
    %c0_5 = arith.constant 0 : index
    %4 = vector.load %arg5[%c0_4, %c0_5] : memref<1x128xf32, #tpu.memory_space<vmem>>, vector<1x128xf32>
    %5 = vector.broadcast %4 : vector<1x128xf32> to vector<8x128xf32>
    %6 = arith.addf %3, %5 : vector<8x128xf32>
    %c0_6 = arith.constant 0 : index
    %c0_7 = arith.constant 0 : index
    %7 = vector.load %arg6[%c0_6, %c0_7] : memref<8x128xf32, #tpu.memory_space<vmem>>, vector<8x128xf32>
    tpu.vector_store %arg6[%c0_6, %c0_7], %6 {strides = array<i32>} : memref<8x128xf32, #tpu.memory_space<vmem>>, vector<8x128xf32>,
    return
  }
  func.func @transform_0(%arg0: i32, %arg1: i32, %arg2: i32) -> (i32, i32, i32) {
    %c0_i32 = arith.constant 0 : i32
    %c0_i32_0 = arith.constant 0 : i32
    return %arg0, %arg1, %c0_i32 : i32, i32, i32
  }
  func.func @transform_1(%arg0: i32, %arg1: i32, %arg2: i32) -> (i32, i32) {
    %c0_i32 = arith.constant 0 : i32
    %c0_i32_0 = arith.constant 0 : i32
    return %c0_i32, %arg2 : i32, i32
  }
  func.func @transform_2(%arg0: i32, %arg1: i32, %arg2: i32) -> (i32, i32) {
    %c0_i32 = arith.constant 0 : i32
    %c0_i32_0 = arith.constant 0 : i32
    return %c0_i32, %arg2 : i32, i32
  }
  func.func @transform_3(%arg0: i32, %arg1: i32, %arg2: i32) -> (i32, i32) {
    %c1_i32 = arith.constant 1 : i32
    %0 = arith.muli %arg0, %c1_i32 : i32
    %1 = arith.addi %0, %arg2 : i32
    %c0_i32 = arith.constant 0 : i32
    return %arg1, %1 : i32, i32
  }
}

module attributes {stable_mosaic.version = 11 : i64} {
  func.func @encoder_block_kernel(%arg0: i32, %arg1: i32, %arg2: memref<1x8x128xf32, #tpu.memory_space<vmem>>, %arg3: memref<128x512xf32, #tpu.memory_space<vmem>>, %arg4: memref<128x512xf32, #tpu.memory_space<vmem>>, %arg5: memref<128x512xf32, #tpu.memory_space<vmem>>, %arg6: memref<1x512xf32, #tpu.memory_space<vmem>>, %arg7: memref<1x512xf32, #tpu.memory_space<vmem>>, %arg8: memref<1x512xf32, #tpu.memory_space<vmem>>, %arg9: memref<4x128x128xf32, #tpu.memory_space<vmem>>, %arg10: memref<1x128xf32, #tpu.memory_space<vmem>>, %arg11: memref<1x128xf32, #tpu.memory_space<vmem>>, %arg12: memref<1x128xf32, #tpu.memory_space<vmem>>, %arg13: memref<128x2048xf32, #tpu.memory_space<vmem>>, %arg14: memref<1x2048xf32, #tpu.memory_space<vmem>>, %arg15: memref<2048x128xf32, #tpu.memory_space<vmem>>, %arg16: memref<1x128xf32, #tpu.memory_space<vmem>>, %arg17: memref<1x128xf32, #tpu.memory_space<vmem>>, %arg18: memref<1x128xf32, #tpu.memory_space<vmem>>, %arg19: memref<1x8x128xf32, #tpu.memory_space<vmem>>, %arg20: memref<4x8x128xf32, #tpu.memory_space<vmem>>, %arg21: memref<4x8x128xf32, #tpu.memory_space<vmem>>) attributes {dimension_semantics = [#tpu.dimension_semantics<parallel>, #tpu.dimension_semantics<arbitrary>], iteration_bounds = array<i64: 2, 1>, scalar_prefetch = 0 : i64, scratch_operands = 2 : i64, tpu.core_type = #tpu.core_type<tc>, window_params = [{transform_indices = @transform_0, window_bounds = array<i64: 1, 8, 128>}, {pipeline_mode = #tpu.pipeline_mode<synchronous>, transform_indices = @transform_1, window_bounds = array<i64: 128, 512>}, {pipeline_mode = #tpu.pipeline_mode<synchronous>, transform_indices = @transform_2, window_bounds = array<i64: 128, 512>}, {pipeline_mode = #tpu.pipeline_mode<synchronous>, transform_indices = @transform_3, window_bounds = array<i64: 128, 512>}, {pipeline_mode = #tpu.pipeline_mode<synchronous>, transform_indices = @transform_4, window_bounds = array<i64: 1, 512>}, {pipeline_mode = #tpu.pipeline_mode<synchronous>, transform_indices = @transform_5, window_bounds = array<i64: 1, 512>}, {pipeline_mode = #tpu.pipeline_mode<synchronous>, transform_indices = @transform_6, window_bounds = array<i64: 1, 512>}, {pipeline_mode = #tpu.pipeline_mode<synchronous>, transform_indices = @transform_7, window_bounds = array<i64: 4, 128, 128>}, {pipeline_mode = #tpu.pipeline_mode<synchronous>, transform_indices = @transform_8, window_bounds = array<i64: 1, 128>}, {pipeline_mode = #tpu.pipeline_mode<synchronous>, transform_indices = @transform_9, window_bounds = array<i64: 1, 128>}, {pipeline_mode = #tpu.pipeline_mode<synchronous>, transform_indices = @transform_10, window_bounds = array<i64: 1, 128>}, {pipeline_mode = #tpu.pipeline_mode<synchronous>, transform_indices = @transform_11, window_bounds = array<i64: 128, 2048>}, {pipeline_mode = #tpu.pipeline_mode<synchronous>, transform_indices = @transform_12, window_bounds = array<i64: 1, 2048>}, {pipeline_mode = #tpu.pipeline_mode<synchronous>, transform_indices = @transform_13, window_bounds = array<i64: 2048, 128>}, {pipeline_mode = #tpu.pipeline_mode<synchronous>, transform_indices = @transform_14, window_bounds = array<i64: 1, 128>}, {pipeline_mode = #tpu.pipeline_mode<synchronous>, transform_indices = @transform_15, window_bounds = array<i64: 1, 128>}, {pipeline_mode = #tpu.pipeline_mode<synchronous>, transform_indices = @transform_16, window_bounds = array<i64: 1, 128>}, {transform_indices = @transform_17, window_bounds = array<i64: 1, 8, 128>}]} {
    %c0_i32 = arith.constant 0 : i32
    %0 = arith.cmpi eq, %arg1, %c0_i32 : i32
    %1 = arith.extui %0 : i1 to i32
    %c0_i32_0 = arith.constant 0 : i32
    %2 = arith.cmpi ne, %1, %c0_i32_0 : i32
    scf.if %2 {
      %c0_55 = arith.constant 0 : index
      %c0_56 = arith.constant 0 : index
      %c0_57 = arith.constant 0 : index
      %107 = vector.load %arg2[%c0_55, %c0_56, %c0_57] : memref<1x8x128xf32, #tpu.memory_space<vmem>>, vector<1x8x128xf32>
      %108 = vector.shape_cast %107 : vector<1x8x128xf32> to vector<8x128xf32>
      %c0_58 = arith.constant 0 : index
      %c0_59 = arith.constant 0 : index
      %109 = vector.load %arg4[%c0_58, %c0_59] : memref<128x512xf32, #tpu.memory_space<vmem>>, vector<128x512xf32>
      %cst_60 = arith.constant dense<0.000000e+00> : vector<8x512xf32>
      %110 = tpu.matmul %108, %109, %cst_60 {dimension_numbers = #tpu.dot_dimension_numbers<[1], [0], [0], [1], [0, 0, 1, 1], [], []>} : vector<8x128xf32>, vector<128x512xf32>, vector<8x512xf32> -> vector<8x512xf32>
      %c0_61 = arith.constant 0 : index
      %c0_62 = arith.constant 0 : index
      %111 = vector.load %arg7[%c0_61, %c0_62] : memref<1x512xf32, #tpu.memory_space<vmem>>, vector<1x512xf32>
      %112 = vector.broadcast %111 : vector<1x512xf32> to vector<8x512xf32>
      %113 = arith.addf %110, %112 : vector<8x512xf32>
      %c0_63 = arith.constant 0 : index
      %c0_64 = arith.constant 0 : index
      %114 = vector.load %arg5[%c0_63, %c0_64] : memref<128x512xf32, #tpu.memory_space<vmem>>, vector<128x512xf32>
      %cst_65 = arith.constant dense<0.000000e+00> : vector<8x512xf32>
      %115 = tpu.matmul %108, %114, %cst_65 {dimension_numbers = #tpu.dot_dimension_numbers<[1], [0], [0], [1], [0, 0, 1, 1], [], []>} : vector<8x128xf32>, vector<128x512xf32>, vector<8x512xf32> -> vector<8x512xf32>
      %c0_66 = arith.constant 0 : index
      %c0_67 = arith.constant 0 : index
      %116 = vector.load %arg8[%c0_66, %c0_67] : memref<1x512xf32, #tpu.memory_space<vmem>>, vector<1x512xf32>
      %117 = vector.broadcast %116 : vector<1x512xf32> to vector<8x512xf32>
      %118 = arith.addf %115, %117 : vector<8x512xf32>
      %119 = vector.extract_strided_slice %113 {offsets = [0, 0], sizes = [8, 128], strides = [1, 1]} : vector<8x512xf32> to vector<8x128xf32>
      %c0_68 = arith.constant 0 : index
      %c0_69 = arith.constant 0 : index
      %c0_70 = arith.constant 0 : index
      %120 = vector.load %arg20[%c0_68, %c0_69, %c0_70] : memref<4x8x128xf32, #tpu.memory_space<vmem>>, vector<1x8x128xf32>
      %121 = vector.shape_cast %120 : vector<1x8x128xf32> to vector<8x128xf32>
      %122 = vector.shape_cast %119 : vector<8x128xf32> to vector<1x8x128xf32>
      tpu.vector_store %arg20[%c0_68, %c0_69, %c0_70], %122 {strides = array<i32>} : memref<4x8x128xf32, #tpu.memory_space<vmem>>, vector<1x8x128xf32>,
      %123 = vector.extract_strided_slice %118 {offsets = [0, 0], sizes = [8, 128], strides = [1, 1]} : vector<8x512xf32> to vector<8x128xf32>
      %c0_71 = arith.constant 0 : index
      %c0_72 = arith.constant 0 : index
      %c0_73 = arith.constant 0 : index
      %124 = vector.load %arg21[%c0_71, %c0_72, %c0_73] : memref<4x8x128xf32, #tpu.memory_space<vmem>>, vector<1x8x128xf32>
      %125 = vector.shape_cast %124 : vector<1x8x128xf32> to vector<8x128xf32>
      %126 = vector.shape_cast %123 : vector<8x128xf32> to vector<1x8x128xf32>
      tpu.vector_store %arg21[%c0_71, %c0_72, %c0_73], %126 {strides = array<i32>} : memref<4x8x128xf32, #tpu.memory_space<vmem>>, vector<1x8x128xf32>,
      %127 = vector.extract_strided_slice %113 {offsets = [0, 128], sizes = [8, 128], strides = [1, 1]} : vector<8x512xf32> to vector<8x128xf32>
      %c1 = arith.constant 1 : index
      %c0_74 = arith.constant 0 : index
      %c0_75 = arith.constant 0 : index
      %128 = vector.load %arg20[%c1, %c0_74, %c0_75] : memref<4x8x128xf32, #tpu.memory_space<vmem>>, vector<1x8x128xf32>
      %129 = vector.shape_cast %128 : vector<1x8x128xf32> to vector<8x128xf32>
      %130 = vector.shape_cast %127 : vector<8x128xf32> to vector<1x8x128xf32>
      tpu.vector_store %arg20[%c1, %c0_74, %c0_75], %130 {strides = array<i32>} : memref<4x8x128xf32, #tpu.memory_space<vmem>>, vector<1x8x128xf32>,
      %131 = vector.extract_strided_slice %118 {offsets = [0, 128], sizes = [8, 128], strides = [1, 1]} : vector<8x512xf32> to vector<8x128xf32>
      %c1_76 = arith.constant 1 : index
      %c0_77 = arith.constant 0 : index
      %c0_78 = arith.constant 0 : index
      %132 = vector.load %arg21[%c1_76, %c0_77, %c0_78] : memref<4x8x128xf32, #tpu.memory_space<vmem>>, vector<1x8x128xf32>
      %133 = vector.shape_cast %132 : vector<1x8x128xf32> to vector<8x128xf32>
      %134 = vector.shape_cast %131 : vector<8x128xf32> to vector<1x8x128xf32>
      tpu.vector_store %arg21[%c1_76, %c0_77, %c0_78], %134 {strides = array<i32>} : memref<4x8x128xf32, #tpu.memory_space<vmem>>, vector<1x8x128xf32>,
      %135 = vector.extract_strided_slice %113 {offsets = [0, 256], sizes = [8, 128], strides = [1, 1]} : vector<8x512xf32> to vector<8x128xf32>
      %c2 = arith.constant 2 : index
      %c0_79 = arith.constant 0 : index
      %c0_80 = arith.constant 0 : index
      %136 = vector.load %arg20[%c2, %c0_79, %c0_80] : memref<4x8x128xf32, #tpu.memory_space<vmem>>, vector<1x8x128xf32>
      %137 = vector.shape_cast %136 : vector<1x8x128xf32> to vector<8x128xf32>
      %138 = vector.shape_cast %135 : vector<8x128xf32> to vector<1x8x128xf32>
      tpu.vector_store %arg20[%c2, %c0_79, %c0_80], %138 {strides = array<i32>} : memref<4x8x128xf32, #tpu.memory_space<vmem>>, vector<1x8x128xf32>,
      %139 = vector.extract_strided_slice %118 {offsets = [0, 256], sizes = [8, 128], strides = [1, 1]} : vector<8x512xf32> to vector<8x128xf32>
      %c2_81 = arith.constant 2 : index
      %c0_82 = arith.constant 0 : index
      %c0_83 = arith.constant 0 : index
      %140 = vector.load %arg21[%c2_81, %c0_82, %c0_83] : memref<4x8x128xf32, #tpu.memory_space<vmem>>, vector<1x8x128xf32>
      %141 = vector.shape_cast %140 : vector<1x8x128xf32> to vector<8x128xf32>
      %142 = vector.shape_cast %139 : vector<8x128xf32> to vector<1x8x128xf32>
      tpu.vector_store %arg21[%c2_81, %c0_82, %c0_83], %142 {strides = array<i32>} : memref<4x8x128xf32, #tpu.memory_space<vmem>>, vector<1x8x128xf32>,
      %143 = vector.extract_strided_slice %113 {offsets = [0, 384], sizes = [8, 128], strides = [1, 1]} : vector<8x512xf32> to vector<8x128xf32>
      %c3 = arith.constant 3 : index
      %c0_84 = arith.constant 0 : index
      %c0_85 = arith.constant 0 : index
      %144 = vector.load %arg20[%c3, %c0_84, %c0_85] : memref<4x8x128xf32, #tpu.memory_space<vmem>>, vector<1x8x128xf32>
      %145 = vector.shape_cast %144 : vector<1x8x128xf32> to vector<8x128xf32>
      %146 = vector.shape_cast %143 : vector<8x128xf32> to vector<1x8x128xf32>
      tpu.vector_store %arg20[%c3, %c0_84, %c0_85], %146 {strides = array<i32>} : memref<4x8x128xf32, #tpu.memory_space<vmem>>, vector<1x8x128xf32>,
      %147 = vector.extract_strided_slice %118 {offsets = [0, 384], sizes = [8, 128], strides = [1, 1]} : vector<8x512xf32> to vector<8x128xf32>
      %c3_86 = arith.constant 3 : index
      %c0_87 = arith.constant 0 : index
      %c0_88 = arith.constant 0 : index
      %148 = vector.load %arg21[%c3_86, %c0_87, %c0_88] : memref<4x8x128xf32, #tpu.memory_space<vmem>>, vector<1x8x128xf32>
      %149 = vector.shape_cast %148 : vector<1x8x128xf32> to vector<8x128xf32>
      %150 = vector.shape_cast %147 : vector<8x128xf32> to vector<1x8x128xf32>
      tpu.vector_store %arg21[%c3_86, %c0_87, %c0_88], %150 {strides = array<i32>} : memref<4x8x128xf32, #tpu.memory_space<vmem>>, vector<1x8x128xf32>,
    } else {
    }
    %c8_i32 = arith.constant 8 : i32
    %3 = arith.muli %arg1, %c8_i32 : i32
    %4 = tpu.assume_multiple %3, 8 : i32
    %c0 = arith.constant 0 : index
    %5 = arith.index_cast %4 : i32 to index
    %c0_1 = arith.constant 0 : index
    %6 = vector.load %arg2[%c0, %5, %c0_1] : memref<1x8x128xf32, #tpu.memory_space<vmem>>, vector<1x8x128xf32>
    %7 = vector.shape_cast %6 : vector<1x8x128xf32> to vector<8x128xf32>
    %c0_2 = arith.constant 0 : index
    %c0_3 = arith.constant 0 : index
    %8 = vector.load %arg3[%c0_2, %c0_3] : memref<128x512xf32, #tpu.memory_space<vmem>>, vector<128x512xf32>
    %cst = arith.constant dense<0.000000e+00> : vector<8x512xf32>
    %9 = tpu.matmul %7, %8, %cst {dimension_numbers = #tpu.dot_dimension_numbers<[1], [0], [0], [1], [0, 0, 1, 1], [], []>} : vector<8x128xf32>, vector<128x512xf32>, vector<8x512xf32> -> vector<8x512xf32>
    %c0_4 = arith.constant 0 : index
    %c0_5 = arith.constant 0 : index
    %10 = vector.load %arg6[%c0_4, %c0_5] : memref<1x512xf32, #tpu.memory_space<vmem>>, vector<1x512xf32>
    %11 = vector.broadcast %10 : vector<1x512xf32> to vector<8x512xf32>
    %12 = arith.addf %9, %11 : vector<8x512xf32>
    %13 = vector.extract_strided_slice %12 {offsets = [0, 0], sizes = [8, 128], strides = [1, 1]} : vector<8x512xf32> to vector<8x128xf32>
    %14 = vector.extract_strided_slice %12 {offsets = [0, 128], sizes = [8, 128], strides = [1, 1]} : vector<8x512xf32> to vector<8x128xf32>
    %15 = vector.extract_strided_slice %12 {offsets = [0, 256], sizes = [8, 128], strides = [1, 1]} : vector<8x512xf32> to vector<8x128xf32>
    %16 = vector.extract_strided_slice %12 {offsets = [0, 384], sizes = [8, 128], strides = [1, 1]} : vector<8x512xf32> to vector<8x128xf32>
    %17 = vector.shape_cast %13 : vector<8x128xf32> to vector<1x8x128xf32>
    %18 = vector.shape_cast %14 : vector<8x128xf32> to vector<1x8x128xf32>
    %19 = vector.shape_cast %15 : vector<8x128xf32> to vector<1x8x128xf32>
    %20 = vector.shape_cast %16 : vector<8x128xf32> to vector<1x8x128xf32>
    %21 = tpu.concatenate %17, %18, %19, %20 in 0 : vector<1x8x128xf32>, vector<1x8x128xf32>, vector<1x8x128xf32>, vector<1x8x128xf32> -> vector<4x8x128xf32>
    %c0_6 = arith.constant 0 : index
    %c0_7 = arith.constant 0 : index
    %c0_8 = arith.constant 0 : index
    %22 = vector.load %arg20[%c0_6, %c0_7, %c0_8] : memref<4x8x128xf32, #tpu.memory_space<vmem>>, vector<4x8x128xf32>
    "tpu.trace_start"() <{level = 10 : i32, message = "hqd,hkd->hqk"}> : () -> ()
    %cst_9 = arith.constant dense<0.000000e+00> : vector<4x8x8xf32>
    %23 = tpu.matmul %21, %22, %cst_9 {dimension_numbers = #tpu.dot_dimension_numbers<[2], [2], [1], [1], [0, 0, 0, 1, 1, 1], [0], [0]>} : vector<4x8x128xf32>, vector<4x8x128xf32>, vector<4x8x8xf32> -> vector<4x8x8xf32>
    "tpu.trace_stop"() : () -> ()
    %cst_10 = arith.constant dense<0xFF800000> : vector<4x8xf32>
    %24 = vector.multi_reduction <maximumf>, %23, %cst_10 [2] : vector<4x8x8xf32> to vector<4x8xf32>
    %25 = vector.shape_cast %24 : vector<4x8xf32> to vector<4x8x1xf32>
    %26 = vector.broadcast %25 : vector<4x8x1xf32> to vector<4x8x8xf32>
    %27 = arith.subf %23, %26 : vector<4x8x8xf32>
    %28 = math.exp %27 : vector<4x8x8xf32>
    %cst_11 = arith.constant dense<0.000000e+00> : vector<4x8xf32>
    %29 = vector.multi_reduction <add>, %28, %cst_11 [2] : vector<4x8x8xf32> to vector<4x8xf32>
    %30 = vector.shape_cast %29 : vector<4x8xf32> to vector<4x8x1xf32>
    %31 = tpu.reciprocal %30 {approx = true} : vector<4x8x1xf32> -> vector<4x8x1xf32>
    %32 = vector.broadcast %31 : vector<4x8x1xf32> to vector<4x8x8xf32>
    %33 = arith.mulf %28, %32 : vector<4x8x8xf32>
    %c0_12 = arith.constant 0 : index
    %c0_13 = arith.constant 0 : index
    %c0_14 = arith.constant 0 : index
    %34 = vector.load %arg21[%c0_12, %c0_13, %c0_14] : memref<4x8x128xf32, #tpu.memory_space<vmem>>, vector<4x8x128xf32>
    "tpu.trace_start"() <{level = 10 : i32, message = "hqk,hkd->hqd"}> : () -> ()
    %cst_15 = arith.constant dense<0.000000e+00> : vector<4x8x128xf32>
    %35 = tpu.matmul %33, %34, %cst_15 {dimension_numbers = #tpu.dot_dimension_numbers<[2], [1], [1], [2], [0, 0, 0, 1, 1, 2], [0], [0]>} : vector<4x8x8xf32>, vector<4x8x128xf32>, vector<4x8x128xf32> -> vector<4x8x128xf32>
    "tpu.trace_stop"() : () -> ()
    %c0_16 = arith.constant 0 : index
    %c0_17 = arith.constant 0 : index
    %c0_18 = arith.constant 0 : index
    %36 = vector.load %arg9[%c0_16, %c0_17, %c0_18] : memref<4x128x128xf32, #tpu.memory_space<vmem>>, vector<4x128x128xf32>
    "tpu.trace_start"() <{level = 10 : i32, message = "hqd,hde->hqe"}> : () -> ()
    %cst_19 = arith.constant dense<0.000000e+00> : vector<4x8x128xf32>
    %37 = tpu.matmul %35, %36, %cst_19 {dimension_numbers = #tpu.dot_dimension_numbers<[2], [1], [1], [2], [0, 0, 0, 1, 1, 2], [0], [0]>} : vector<4x8x128xf32>, vector<4x128x128xf32>, vector<4x8x128xf32> -> vector<4x8x128xf32>
    "tpu.trace_stop"() : () -> ()
    %cst_20 = arith.constant dense<0.000000e+00> : vector<8x128xf32>
    %38 = vector.multi_reduction <add>, %37, %cst_20 [0] : vector<4x8x128xf32> to vector<8x128xf32>
    %c0_21 = arith.constant 0 : index
    %c0_22 = arith.constant 0 : index
    %39 = vector.load %arg10[%c0_21, %c0_22] : memref<1x128xf32, #tpu.memory_space<vmem>>, vector<1x128xf32>
    %40 = vector.broadcast %39 : vector<1x128xf32> to vector<8x128xf32>
    %41 = arith.addf %38, %40 : vector<8x128xf32>
    %42 = arith.addf %7, %41 : vector<8x128xf32>
    %c0_23 = arith.constant 0 : index
    %c0_24 = arith.constant 0 : index
    %43 = vector.load %arg11[%c0_23, %c0_24] : memref<1x128xf32, #tpu.memory_space<vmem>>, vector<1x128xf32>
    %c0_25 = arith.constant 0 : index
    %c0_26 = arith.constant 0 : index
    %44 = vector.load %arg12[%c0_25, %c0_26] : memref<1x128xf32, #tpu.memory_space<vmem>>, vector<1x128xf32>
    %cst_27 = arith.constant dense<0.000000e+00> : vector<8xf32>
    %45 = vector.multi_reduction <add>, %42, %cst_27 [1] : vector<8x128xf32> to vector<8xf32>
    %46 = vector.shape_cast %45 : vector<8xf32> to vector<8x1xf32>
    %cst_28 = arith.constant 3.125000e-02 : f32
    %47 = vector.broadcast %cst_28 : f32 to vector<8x1xf32>
    %48 = arith.mulf %46, %47 : vector<8x1xf32>
    %49 = arith.mulf %42, %42 : vector<8x128xf32>
    %cst_29 = arith.constant dense<0.000000e+00> : vector<8xf32>
    %50 = vector.multi_reduction <add>, %49, %cst_29 [1] : vector<8x128xf32> to vector<8xf32>
    %51 = vector.shape_cast %50 : vector<8xf32> to vector<8x1xf32>
    %cst_30 = arith.constant 3.125000e-02 : f32
    %52 = vector.broadcast %cst_30 : f32 to vector<8x1xf32>
    %53 = arith.mulf %51, %52 : vector<8x1xf32>
    %54 = arith.mulf %48, %48 : vector<8x1xf32>
    %55 = arith.subf %53, %54 : vector<8x1xf32>
    %56 = vector.broadcast %48 : vector<8x1xf32> to vector<8x128xf32>
    %57 = arith.subf %42, %56 : vector<8x128xf32>
    %cst_31 = arith.constant 9.99999974E-6 : f32
    %58 = vector.broadcast %cst_31 : f32 to vector<8x1xf32>
    %59 = arith.addf %55, %58 : vector<8x1xf32>
    %60 = math.rsqrt %59 : vector<8x1xf32>
    %61 = vector.broadcast %60 : vector<8x1xf32> to vector<8x128xf32>
    %62 = arith.mulf %57, %61 : vector<8x128xf32>
    %63 = vector.broadcast %43 : vector<1x128xf32> to vector<8x128xf32>
    %64 = arith.mulf %62, %63 : vector<8x128xf32>
    %65 = vector.broadcast %44 : vector<1x128xf32> to vector<8x128xf32>
    %66 = arith.addf %64, %65 : vector<8x128xf32>
    %c0_32 = arith.constant 0 : index
    %c0_33 = arith.constant 0 : index
    %67 = vector.load %arg13[%c0_32, %c0_33] : memref<128x2048xf32, #tpu.memory_space<vmem>>, vector<128x2048xf32>
    %cst_34 = arith.constant dense<0.000000e+00> : vector<8x2048xf32>
    %68 = tpu.matmul %66, %67, %cst_34 {dimension_numbers = #tpu.dot_dimension_numbers<[1], [0], [0], [1], [0, 0, 1, 1], [], []>} : vector<8x128xf32>, vector<128x2048xf32>, vector<8x2048xf32> -> vector<8x2048xf32>
    %c0_35 = arith.constant 0 : index
    %c0_36 = arith.constant 0 : index
    %69 = vector.load %arg14[%c0_35, %c0_36] : memref<1x2048xf32, #tpu.memory_space<vmem>>, vector<1x2048xf32>
    %70 = vector.broadcast %69 : vector<1x2048xf32> to vector<8x2048xf32>
    %71 = arith.addf %68, %70 : vector<8x2048xf32>
    %cst_37 = arith.constant 0.000000e+00 : f32
    %72 = vector.broadcast %cst_37 : f32 to vector<8x2048xf32>
    %73 = arith.maximumf %71, %72 : vector<8x2048xf32>
    %c0_38 = arith.constant 0 : index
    %c0_39 = arith.constant 0 : index
    %74 = vector.load %arg15[%c0_38, %c0_39] : memref<2048x128xf32, #tpu.memory_space<vmem>>, vector<2048x128xf32>
    %cst_40 = arith.constant dense<0.000000e+00> : vector<8x128xf32>
    %75 = tpu.matmul %73, %74, %cst_40 {dimension_numbers = #tpu.dot_dimension_numbers<[1], [0], [0], [1], [0, 0, 1, 1], [], []>} : vector<8x2048xf32>, vector<2048x128xf32>, vector<8x128xf32> -> vector<8x128xf32>
    %c0_41 = arith.constant 0 : index
    %c0_42 = arith.constant 0 : index
    %76 = vector.load %arg16[%c0_41, %c0_42] : memref<1x128xf32, #tpu.memory_space<vmem>>, vector<1x128xf32>
    %77 = vector.broadcast %76 : vector<1x128xf32> to vector<8x128xf32>
    %78 = arith.addf %75, %77 : vector<8x128xf32>
    %79 = arith.addf %66, %78 : vector<8x128xf32>
    %c0_43 = arith.constant 0 : index
    %c0_44 = arith.constant 0 : index
    %80 = vector.load %arg17[%c0_43, %c0_44] : memref<1x128xf32, #tpu.memory_space<vmem>>, vector<1x128xf32>
    %c0_45 = arith.constant 0 : index
    %c0_46 = arith.constant 0 : index
    %81 = vector.load %arg18[%c0_45, %c0_46] : memref<1x128xf32, #tpu.memory_space<vmem>>, vector<1x128xf32>
    %cst_47 = arith.constant dense<0.000000e+00> : vector<8xf32>
    %82 = vector.multi_reduction <add>, %79, %cst_47 [1] : vector<8x128xf32> to vector<8xf32>
    %83 = vector.shape_cast %82 : vector<8xf32> to vector<8x1xf32>
    %cst_48 = arith.constant 3.125000e-02 : f32
    %84 = vector.broadcast %cst_48 : f32 to vector<8x1xf32>
    %85 = arith.mulf %83, %84 : vector<8x1xf32>
    %86 = arith.mulf %79, %79 : vector<8x128xf32>
    %cst_49 = arith.constant dense<0.000000e+00> : vector<8xf32>
    %87 = vector.multi_reduction <add>, %86, %cst_49 [1] : vector<8x128xf32> to vector<8xf32>
    %88 = vector.shape_cast %87 : vector<8xf32> to vector<8x1xf32>
    %cst_50 = arith.constant 3.125000e-02 : f32
    %89 = vector.broadcast %cst_50 : f32 to vector<8x1xf32>
    %90 = arith.mulf %88, %89 : vector<8x1xf32>
    %91 = arith.mulf %85, %85 : vector<8x1xf32>
    %92 = arith.subf %90, %91 : vector<8x1xf32>
    %93 = vector.broadcast %85 : vector<8x1xf32> to vector<8x128xf32>
    %94 = arith.subf %79, %93 : vector<8x128xf32>
    %cst_51 = arith.constant 9.99999974E-6 : f32
    %95 = vector.broadcast %cst_51 : f32 to vector<8x1xf32>
    %96 = arith.addf %92, %95 : vector<8x1xf32>
    %97 = math.rsqrt %96 : vector<8x1xf32>
    %98 = vector.broadcast %97 : vector<8x1xf32> to vector<8x128xf32>
    %99 = arith.mulf %94, %98 : vector<8x128xf32>
    %100 = vector.broadcast %80 : vector<1x128xf32> to vector<8x128xf32>
    %101 = arith.mulf %99, %100 : vector<8x128xf32>
    %102 = vector.broadcast %81 : vector<1x128xf32> to vector<8x128xf32>
    %103 = arith.addf %101, %102 : vector<8x128xf32>
    %c0_52 = arith.constant 0 : index
    %c0_53 = arith.constant 0 : index
    %c0_54 = arith.constant 0 : index
    %104 = vector.load %arg19[%c0_52, %c0_53, %c0_54] : memref<1x8x128xf32, #tpu.memory_space<vmem>>, vector<1x8x128xf32>
    %105 = vector.shape_cast %104 : vector<1x8x128xf32> to vector<8x128xf32>
    %106 = vector.shape_cast %103 : vector<8x128xf32> to vector<1x8x128xf32>
    tpu.vector_store %arg19[%c0_52, %c0_53, %c0_54], %106 {strides = array<i32>} : memref<1x8x128xf32, #tpu.memory_space<vmem>>, vector<1x8x128xf32>,
    return
  }
  func.func @transform_0(%arg0: i32, %arg1: i32) -> (i32, i32, i32) {
    %c0_i32 = arith.constant 0 : i32
    %c0_i32_0 = arith.constant 0 : i32
    %c0_i32_1 = arith.constant 0 : i32
    return %arg0, %c0_i32, %c0_i32_0 : i32, i32, i32
  }
  func.func @transform_1(%arg0: i32, %arg1: i32) -> (i32, i32) {
    %c0_i32 = arith.constant 0 : i32
    %c0_i32_0 = arith.constant 0 : i32
    %c0_i32_1 = arith.constant 0 : i32
    return %c0_i32, %c0_i32_0 : i32, i32
  }
  func.func @transform_2(%arg0: i32, %arg1: i32) -> (i32, i32) {
    %c0_i32 = arith.constant 0 : i32
    %c0_i32_0 = arith.constant 0 : i32
    %c0_i32_1 = arith.constant 0 : i32
    return %c0_i32, %c0_i32_0 : i32, i32
  }
  func.func @transform_3(%arg0: i32, %arg1: i32) -> (i32, i32) {
    %c0_i32 = arith.constant 0 : i32
    %c0_i32_0 = arith.constant 0 : i32
    %c0_i32_1 = arith.constant 0 : i32
    return %c0_i32, %c0_i32_0 : i32, i32
  }
  func.func @transform_4(%arg0: i32, %arg1: i32) -> (i32, i32) {
    %c0_i32 = arith.constant 0 : i32
    %c0_i32_0 = arith.constant 0 : i32
    %c0_i32_1 = arith.constant 0 : i32
    return %c0_i32, %c0_i32_0 : i32, i32
  }
  func.func @transform_5(%arg0: i32, %arg1: i32) -> (i32, i32) {
    %c0_i32 = arith.constant 0 : i32
    %c0_i32_0 = arith.constant 0 : i32
    %c0_i32_1 = arith.constant 0 : i32
    return %c0_i32, %c0_i32_0 : i32, i32
  }
  func.func @transform_6(%arg0: i32, %arg1: i32) -> (i32, i32) {
    %c0_i32 = arith.constant 0 : i32
    %c0_i32_0 = arith.constant 0 : i32
    %c0_i32_1 = arith.constant 0 : i32
    return %c0_i32, %c0_i32_0 : i32, i32
  }
  func.func @transform_7(%arg0: i32, %arg1: i32) -> (i32, i32, i32) {
    %c0_i32 = arith.constant 0 : i32
    %c0_i32_0 = arith.constant 0 : i32
    %c0_i32_1 = arith.constant 0 : i32
    %c0_i32_2 = arith.constant 0 : i32
    return %c0_i32, %c0_i32_0, %c0_i32_1 : i32, i32, i32
  }
  func.func @transform_8(%arg0: i32, %arg1: i32) -> (i32, i32) {
    %c0_i32 = arith.constant 0 : i32
    %c0_i32_0 = arith.constant 0 : i32
    %c0_i32_1 = arith.constant 0 : i32
    return %c0_i32, %c0_i32_0 : i32, i32
  }
  func.func @transform_9(%arg0: i32, %arg1: i32) -> (i32, i32) {
    %c0_i32 = arith.constant 0 : i32
    %c0_i32_0 = arith.constant 0 : i32
    %c0_i32_1 = arith.constant 0 : i32
    return %c0_i32, %c0_i32_0 : i32, i32
  }
  func.func @transform_10(%arg0: i32, %arg1: i32) -> (i32, i32) {
    %c0_i32 = arith.constant 0 : i32
    %c0_i32_0 = arith.constant 0 : i32
    %c0_i32_1 = arith.constant 0 : i32
    return %c0_i32, %c0_i32_0 : i32, i32
  }
  func.func @transform_11(%arg0: i32, %arg1: i32) -> (i32, i32) {
    %c0_i32 = arith.constant 0 : i32
    %c0_i32_0 = arith.constant 0 : i32
    %c0_i32_1 = arith.constant 0 : i32
    return %c0_i32, %c0_i32_0 : i32, i32
  }
  func.func @transform_12(%arg0: i32, %arg1: i32) -> (i32, i32) {
    %c0_i32 = arith.constant 0 : i32
    %c0_i32_0 = arith.constant 0 : i32
    %c0_i32_1 = arith.constant 0 : i32
    return %c0_i32, %c0_i32_0 : i32, i32
  }
  func.func @transform_13(%arg0: i32, %arg1: i32) -> (i32, i32) {
    %c0_i32 = arith.constant 0 : i32
    %c0_i32_0 = arith.constant 0 : i32
    %c0_i32_1 = arith.constant 0 : i32
    return %c0_i32, %c0_i32_0 : i32, i32
  }
  func.func @transform_14(%arg0: i32, %arg1: i32) -> (i32, i32) {
    %c0_i32 = arith.constant 0 : i32
    %c0_i32_0 = arith.constant 0 : i32
    %c0_i32_1 = arith.constant 0 : i32
    return %c0_i32, %c0_i32_0 : i32, i32
  }
  func.func @transform_15(%arg0: i32, %arg1: i32) -> (i32, i32) {
    %c0_i32 = arith.constant 0 : i32
    %c0_i32_0 = arith.constant 0 : i32
    %c0_i32_1 = arith.constant 0 : i32
    return %c0_i32, %c0_i32_0 : i32, i32
  }
  func.func @transform_16(%arg0: i32, %arg1: i32) -> (i32, i32) {
    %c0_i32 = arith.constant 0 : i32
    %c0_i32_0 = arith.constant 0 : i32
    %c0_i32_1 = arith.constant 0 : i32
    return %c0_i32, %c0_i32_0 : i32, i32
  }
  func.func @transform_17(%arg0: i32, %arg1: i32) -> (i32, i32, i32) {
    %c0_i32 = arith.constant 0 : i32
    %c0_i32_0 = arith.constant 0 : i32
    return %arg0, %arg1, %c0_i32 : i32, i32, i32
  }
}

</mosaic_0001>

<llo_original>
// kernel: music_transformer_forward.5
$region0: #{music_transformer_forward.5}
  #allocation0 [shape = 'u32[]', space=smem, size = 0x4, offset = 0x4, fixed_abs, tag = 'smem constant byte address 0x4 - core index']
  #allocation1 [shape = 'u32[144,128]{1,0:T(1,128)}', space=vmem, size = 0x12000, scoped, tag = 'internal scratch']
  %s0 = inlined_call_operand.hbm [shape: f32[2,8,128], index: 0, kind: input, shape index: {}]
  %s1 = inlined_call_operand.hbm [shape: f32[128,128], index: 1, kind: input, shape index: {}]
  %s2 = inlined_call_operand.hbm [shape: f32[1,128], index: 2, kind: input, shape index: {}]
  %s3 = inlined_call_operand.hbm [shape: f32[8,256], index: 3, kind: output, shape index: {}]
  %s4 = sld [smem:[#allocation0]]
  $region57: #{music_transformer_forward.5} parent=0
    _
  %s6 = ssub.s32 1, %s4
  %s7 = scalar_select 0, %s6, %s4
  $region1: #{music_transformer_forward.5} parent=0
    #allocation2 [shape = 'u8[8192]{0}', space=vmem, size = 0x2000, scoped, tag = 'input window, operand 0']
    #allocation3 [shape = 's32[2]{0}', space=sflag, size = 0x8, scoped, tag = 'scoped memory for music_transformer_forward.5']
    #allocation4 [shape = 's32[2]{0}', space=sflag, size = 0x8, scoped, tag = 'scoped memory for music_transformer_forward.5']
    #allocation5 [shape = 'u8[65536]{0}', space=vmem, size = 0x10000, scoped, tag = 'input window, operand 1, single buffered']
    #allocation6 [shape = 's32[1]{0}', space=sflag, size = 0x4, scoped, tag = 'scoped memory for music_transformer_forward.5']
    #allocation7 [shape = 'u8[512]{0}', space=vmem, size = 0x400, scoped, tag = 'input window, operand 2, single buffered']
    #allocation8 [shape = 'u8[8192]{0}', space=vmem, size = 0x2000, scoped, tag = 'output window, operand 0']
    %8 = vsyncpa [#allocation3], 0
    %s9 = scalar_lea.sflag [#allocation3], 1
    %10 = vsyncpa %s9, 0
    %11 = vsyncpa [#allocation6], 0
    %12 = vsyncpa [#allocation4], 0
    %s13 = scalar_lea.sflag [#allocation4], 1
    %14 = vsyncpa %s13, 0
    loop: start=0, step=1, limit=4
    $region2: #{music_transformer_forward.5} parent=1 // loop_pre_header
      _
    $region3: #{music_transformer_forward.5} parent=1 // loop_header
      %s16 = sphi 0, %s20
      %p17 = scmp.ge.s32.totalorder %s16, 4
      %s23 = sphi 0, %s42
      %s24 = sphi 0, %s38
      %s25 = sphi 0, %s34
      %s26 = sphi 0, %s23
      %s27 = sphi 0, %s24
      %s28 = sphi 0, %s25
      %s29 = sphi 0, %s26
      %s30 = sphi 0, %s27
      %s31 = sphi 0, %s28
      %s47 = sphi 0, %s49
      %s50 = sphi 0, %s47
      %s51 = sphi 0, %s50
      %s67 = sphi 0, %s51
      %s73 = sphi 0, %s75
      %s76 = sphi 0, %s73
      %s77 = sphi 0, %s76
      %s93 = sphi 0, %s77
      %s99 = sphi 0, %s101
      %s102 = sphi 0, %s99
      %s103 = sphi 0, %s102
      %s119 = sphi 0, %s103
      %s129 = sphi 0, %s131
      %s132 = sphi 0, %s129
      %s133 = sphi 0, %s132
      %s149 = sphi 0, %s133
    $region4: #{music_transformer_forward.5} parent=1 // loop_header_branch
      %19 = sbr.rel (%p17) target = $region8
    $region5: #{music_transformer_forward.5} parent=1 // loop_body
      %s21 = ssub.s32 %s16, 1
      %s22 = ssub.s32 %s16, 2
      %s32 = sadd.s32 1, %s25
      %p33 = scmp.ge.s32.totalorder %s32, 1
      %s34 = scalar_select %p33, 0, %s32
      %s35 = sadd.s32 1, %s24
      %s36 = scalar_select %p33, %s35, %s24
      %p37 = scmp.ge.s32.totalorder %s36, 1
      %s38 = scalar_select %p37, 0, %s36
      %s39 = sadd.s32 1, %s23
      %s40 = scalar_select %p37, %s39, %s23
      %p41 = scmp.ge.s32.totalorder %s40, 2
      %s42 = scalar_select %p41, 0, %s40
      %s43 = ssub.s32 %s23, %s42
      %s44 = ssub.s32 %s24, %s38
      %s45 = sor.u32 %s43, %s44
      %p46 = scmp.eq.s32.totalorder %s45, 0
      %s48 = sadd.s32 %s47, 1
      %s49 = scalar_select %p46, %s47, %s48
      %p52 = pneg %p46
      %p53 = scmp.eq.s32.totalorder %s16, 1
      %p54 = por %p52, %p53
      %p55 = scmp.ne.s32.totalorder %s47, %s50
      %p56 = scmp.eq.s32.totalorder %s16, 0
      %p57 = por %p55, %p56
      %p58 = scmp.ne.s32.totalorder %s47, %s50
      %p59 = scmp.eq.s32.totalorder %s21, 1
      %p60 = por %p58, %p59
      %p61 = scmp.ne.s32.totalorder %s50, %s51
      %p62 = scmp.eq.s32.totalorder %s21, 0
      %p63 = por %p61, %p62
      %p64 = scmp.ne.s32.totalorder %s50, %s51
      %p65 = scmp.eq.s32.totalorder %s22, 1
      %p66 = por %p64, %p65
      %p68 = scmp.ne.s32.totalorder %s51, %s67
      %p69 = scmp.eq.s32.totalorder %s22, 0
      %p70 = por %p68, %p69
      %s71 = ssub.s32 %s25, %s34
      %p72 = scmp.eq.s32.totalorder %s71, 0
      %s74 = sadd.s32 %s73, 1
      %s75 = scalar_select %p72, %s73, %s74
      %p78 = pneg %p72
      %p79 = scmp.eq.s32.totalorder %s16, 1
      %p80 = por %p78, %p79
      %p81 = scmp.ne.s32.totalorder %s73, %s76
      %p82 = scmp.eq.s32.totalorder %s16, 0
      %p83 = por %p81, %p82
      %p84 = scmp.ne.s32.totalorder %s73, %s76
      %p85 = scmp.eq.s32.totalorder %s21, 1
      %p86 = por %p84, %p85
      %p87 = scmp.ne.s32.totalorder %s76, %s77
      %p88 = scmp.eq.s32.totalorder %s21, 0
      %p89 = por %p87, %p88
      %p90 = scmp.ne.s32.totalorder %s76, %s77
      %p91 = scmp.eq.s32.totalorder %s22, 1
      %p92 = por %p90, %p91
      %p94 = scmp.ne.s32.totalorder %s77, %s93
      %p95 = scmp.eq.s32.totalorder %s22, 0
      %p96 = por %p94, %p95
      %s97 = ssub.s32 %s25, %s34
      %p98 = scmp.eq.s32.totalorder %s97, 0
      %s100 = sadd.s32 %s99, 1
      %s101 = scalar_select %p98, %s99, %s100
      %p104 = pneg %p98
      %p105 = scmp.eq.s32.totalorder %s16, 1
      %p106 = por %p104, %p105
      %p107 = scmp.ne.s32.totalorder %s99, %s102
      %p108 = scmp.eq.s32.totalorder %s16, 0
      %p109 = por %p107, %p108
      %p110 = scmp.ne.s32.totalorder %s99, %s102
      %p111 = scmp.eq.s32.totalorder %s21, 1
      %p112 = por %p110, %p111
      %p113 = scmp.ne.s32.totalorder %s102, %s103
      %p114 = scmp.eq.s32.totalorder %s21, 0
      %p115 = por %p113, %p114
      %p116 = scmp.ne.s32.totalorder %s102, %s103
      %p117 = scmp.eq.s32.totalorder %s22, 1
      %p118 = por %p116, %p117
      %p120 = scmp.ne.s32.totalorder %s103, %s119
      %p121 = scmp.eq.s32.totalorder %s22, 0
      %p122 = por %p120, %p121
      %s123 = sadd.s32 %s23, %s25
      %s124 = sadd.s32 %s42, %s34
      %s125 = ssub.s32 %s24, %s38
      %s126 = ssub.s32 %s123, %s124
      %s127 = sor.u32 %s125, %s126
      %p128 = scmp.eq.s32.totalorder %s127, 0
      %s130 = sadd.s32 %s129, 1
      %s131 = scalar_select %p128, %s129, %s130
      %p134 = pneg %p128
      %p135 = scmp.eq.s32.totalorder %s16, 1
      %p136 = por %p134, %p135
      %p137 = scmp.ne.s32.totalorder %s129, %s132
      %p138 = scmp.eq.s32.totalorder %s16, 0
      %p139 = por %p137, %p138
      %p140 = scmp.ne.s32.totalorder %s129, %s132
      %p141 = scmp.eq.s32.totalorder %s21, 1
      %p142 = por %p140, %p141
      %p143 = scmp.ne.s32.totalorder %s132, %s133
      %p144 = scmp.eq.s32.totalorder %s21, 0
      %p145 = por %p143, %p144
      %p146 = scmp.ne.s32.totalorder %s132, %s133
      %p147 = scmp.eq.s32.totalorder %s22, 1
      %p148 = por %p146, %p147
      %p150 = scmp.ne.s32.totalorder %s133, %s149
      %p151 = scmp.eq.s32.totalorder %s22, 0
      %p152 = por %p150, %p151
      %p153 = scmp.le.s32.totalorder 1, %s16
      %p154 = scmp.lt.s32.totalorder %s16, 3
      %p155 = pnand %p153, %p154
      %p156 = pneg %p155
      // Predicated region
      $region9: #{music_transformer_forward.5} parent=5 // pred_check
        _
      $region10: #{music_transformer_forward.5} parent=5 // pred_check_branch
        %158 = sbr.rel (%p155) target = $region12
      $region11: #{music_transformer_forward.5} parent=5 // pred_region
        %s159 = ssub.s32 %s16, 1
        // Predicated region
        $region13: #{music_transformer_forward.5} parent=11 // pred_check
          %p160 = pneg %p89
        $region14: #{music_transformer_forward.5} parent=11 // pred_check_branch
          %162 = sbr.rel (%p160) target = $region16
        $region15: #{music_transformer_forward.5} parent=11 // pred_region
          %s164 = ssub.s32 2048, 2048
          %165 = vsyncadd [#allocation6], %s164
          %s166 = smul.addr %s28, 128
          %s167 = scalar_lea.hbm %s1, %s166
          %s168 = sshll.u32 [#allocation5], 4
          %s169 = int_to_ptr.vmem [resolvable:$true] %s168
          %174 = dma.hbm_to_vmem [thread:$0]  %s167, 2048, %s169, [#allocation6], 128, 128, 8
        $region16: #{music_transformer_forward.5} parent=11 // pred_fallthru
          _
        // Predicated region
        $region17: #{music_transformer_forward.5} parent=11 // pred_check
          %p175 = pneg %p115
        $region18: #{music_transformer_forward.5} parent=11 // pred_check_branch
          %177 = sbr.rel (%p175) target = $region20
        $region19: #{music_transformer_forward.5} parent=11 // pred_region
          %s179 = ssub.s32 16, 16
          %180 = vsyncadd [#allocation6], %s179
          %s181 = smul.addr %s28, 16
          %s182 = scalar_lea.hbm %s2, %s181
          %s184 = sshll.u32 [#allocation7], 4
          %s185 = int_to_ptr.vmem [resolvable:$true] %s184
          %187 = dma.hbm_to_vmem [thread:$0]  %s182, 16, %s185, [#allocation6]
        $region20: #{music_transformer_forward.5} parent=11 // pred_fallthru
          _
      $region12: #{music_transformer_forward.5} parent=5 // pred_fallthru
        _
      %p188 = scmp.lt.s32.totalorder %s16, 2
      // Predicated region
      $region21: #{music_transformer_forward.5} parent=5 // pred_check
        %p189 = pneg %p188
      $region22: #{music_transformer_forward.5} parent=5 // pred_check_branch
        %191 = sbr.rel (%p189) target = $region24
      $region23: #{music_transformer_forward.5} parent=5 // pred_region
        // Predicated region
        $region25: #{music_transformer_forward.5} parent=23 // pred_check
          %p192 = pneg %p57
        $region26: #{music_transformer_forward.5} parent=23 // pred_check_branch
          %194 = sbr.rel (%p192) target = $region28
        $region27: #{music_transformer_forward.5} parent=23 // pred_region
          %s195 = sand.u32 %s47, 1
          %s196 = scalar_lea.sflag [#allocation3], %s195
          %s197 = sand.u32 %s47, 1
          %s198 = smul.addr %s197, 8
          %s199 = scalar_lea.vmem [#allocation2], %s198
          %s201 = ssub.s32 128, 128
          %202 = vsyncadd %s196, %s201
          %s203 = sadd.s32 %s24, %s23
          %s204 = smul.addr %s203, 128
          %s205 = scalar_lea.hbm %s0, %s204
          %s207 = sshll.u32 %s199, 4
          %s208 = int_to_ptr.vmem [resolvable:$true] %s207
          %210 = dma.hbm_to_vmem [thread:$0]  %s205, 128, %s208, %s196
        $region28: #{music_transformer_forward.5} parent=23 // pred_fallthru
          _
      $region24: #{music_transformer_forward.5} parent=5 // pred_fallthru
        _
      %p211 = scmp.le.s32.totalorder 1, %s16
      %p212 = scmp.lt.s32.totalorder %s16, 3
      %p213 = pnand %p211, %p212
      %p214 = pneg %p213
      // Predicated region
      $region29: #{music_transformer_forward.5} parent=5 // pred_check
        _
      $region30: #{music_transformer_forward.5} parent=5 // pred_check_branch
        %216 = sbr.rel (%p213) target = $region32
      $region31: #{music_transformer_forward.5} parent=5 // pred_region
        %s217 = ssub.s32 %s16, 1
        %s218 = sand.u32 %s50, 1
        %s219 = scalar_lea.sflag [#allocation3], %s218
        %s220 = sand.u32 %s50, 1
        %s221 = smul.addr %s220, 8
        %s222 = scalar_lea.vmem [#allocation2], %s221
        // Predicated region
        $region33: #{music_transformer_forward.5} parent=31 // pred_check
          %p223 = pneg %p63
        $region34: #{music_transformer_forward.5} parent=31 // pred_check_branch
          %225 = sbr.rel (%p223) target = $region36
        $region35: #{music_transformer_forward.5} parent=31 // pred_region
          %226 = dma.done %s219, 128
        $region36: #{music_transformer_forward.5} parent=31 // pred_fallthru
          _
        // Predicated region
        $region37: #{music_transformer_forward.5} parent=31 // pred_check
          %p227 = pneg %p89
        $region38: #{music_transformer_forward.5} parent=31 // pred_check_branch
          %229 = sbr.rel (%p227) target = $region40
        $region39: #{music_transformer_forward.5} parent=31 // pred_region
          %230 = dma.done [#allocation6], 2048
        $region40: #{music_transformer_forward.5} parent=31 // pred_fallthru
          _
        // Predicated region
        $region41: #{music_transformer_forward.5} parent=31 // pred_check
          %p231 = pneg %p115
        $region42: #{music_transformer_forward.5} parent=31 // pred_check_branch
          %233 = sbr.rel (%p231) target = $region44
        $region43: #{music_transformer_forward.5} parent=31 // pred_region
          %234 = dma.done [#allocation6], 16
        $region44: #{music_transformer_forward.5} parent=31 // pred_fallthru
          _
        %s235 = sand.u32 %s50, 1
        %s236 = scalar_lea.sflag [#allocation3], %s235
        %s237 = sand.u32 %s50, 1
        %s238 = smul.addr %s237, 8
        %s239 = scalar_lea.vmem [#allocation2], %s238
        %p240 = pneg %p63
        %p241 = pneg %p60
        %p242 = pneg %p89
        %p243 = pneg %p86
        %p244 = pneg %p115
        %p245 = pneg %p112
        %p246 = pneg %p145
        %p247 = pneg %p142
        %s248 = sand.u32 %s132, 1
        %s249 = scalar_lea.sflag [#allocation4], %s248
        %s250 = sand.u32 %s132, 1
        %s251 = smul.addr %s250, 8
        %s252 = scalar_lea.vmem [#allocation8], %s251
        %s253 = sadd.s32 %s26, %s28
        %v254 = vld [vmem:[%s222] sm:$0xff]
        %v255 = vld [vmem:[#allocation5] sm:$0xff]
        %v256 = vld [vmem:[#allocation5 + $0x8] sm:$0xff]
        %v257 = vld [vmem:[#allocation5 + $0x10] sm:$0xff]
        %v258 = vld [vmem:[#allocation5 + $0x18] sm:$0xff]
        %v259 = vld [vmem:[#allocation5 + $0x20] sm:$0xff]
        %v260 = vld [vmem:[#allocation5 + $0x28] sm:$0xff]
        %v261 = vld [vmem:[#allocation5 + $0x30] sm:$0xff]
        %v262 = vld [vmem:[#allocation5 + $0x38] sm:$0xff]
        %v263 = vld [vmem:[#allocation5 + $0x40] sm:$0xff]
        %v264 = vld [vmem:[#allocation5 + $0x48] sm:$0xff]
        %v265 = vld [vmem:[#allocation5 + $0x50] sm:$0xff]
        %v266 = vld [vmem:[#allocation5 + $0x58] sm:$0xff]
        %v267 = vld [vmem:[#allocation5 + $0x60] sm:$0xff]
        %v268 = vld [vmem:[#allocation5 + $0x68] sm:$0xff]
        %v269 = vld [vmem:[#allocation5 + $0x70] sm:$0xff]
        %v270 = vld [vmem:[#allocation5 + $0x78] sm:$0xff]
        %v271 = vld [vmem:[#allocation7] sm:$0x1]
        %v273 = vlaneseq
        %v274 = vshrl.u32 %v273, 7
        %v275 = vsub.s32 0, %v274
        %v276 = vrot.slane %v271, %v275
        %278 = vmatprep.subr.mxu0 0.0
        %279 = vmatpush1.msra.mxu0 %v255
        %280 = vmatprep.subr.mxu0 0.0
        %281 = vmatpush1.msra.mxu0 %v256
        %282 = vmatprep.subr.mxu0 0.0
        %283 = vmatpush1.msra.mxu0 %v257
        %284 = vmatprep.subr.mxu0 0.0
        %285 = vmatpush1.msra.mxu0 %v258
        %286 = vmatprep.subr.mxu0 0.0
        %287 = vmatpush1.msra.mxu0 %v259
        %288 = vmatprep.subr.mxu0 0.0
        %289 = vmatpush1.msra.mxu0 %v260
        %290 = vmatprep.subr.mxu0 0.0
        %291 = vmatpush1.msra.mxu0 %v261
        %292 = vmatprep.subr.mxu0 0.0
        %293 = vmatpush1.msra.mxu0 %v262
        %294 = vmatprep.subr.mxu0 0.0
        %295 = vmatpush1.msra.mxu0 %v263
        %296 = vmatprep.subr.mxu0 0.0
        %297 = vmatpush1.msra.mxu0 %v264
        %298 = vmatprep.subr.mxu0 0.0
        %299 = vmatpush1.msra.mxu0 %v265
        %300 = vmatprep.subr.mxu0 0.0
        %301 = vmatpush1.msra.mxu0 %v266
        %302 = vmatprep.subr.mxu0 0.0
        %303 = vmatpush1.msra.mxu0 %v267
        %304 = vmatprep.subr.mxu0 0.0
        %305 = vmatpush1.msra.mxu0 %v268
        %306 = vmatprep.subr.mxu0 0.0
        %307 = vmatpush1.msra.mxu0 %v269
        %308 = vmatprep.subr.mxu0 0.0
        %309 = vmatpush1.msra.mxu0 %v270
        %310 = vmatprep.subr.mxu0 0.0
        %311 = vmatpush1.msra.mxu0 0.0
        %312 = vmatprep.subr.mxu0 0.0
        %313 = vmatpush1.msra.mxu0 0.0
        %314 = vmatprep.subr.mxu0 0.0
        %315 = vmatpush1.msra.mxu0 0.0
        %316 = vmatprep.subr.mxu0 0.0
        %317 = vmatpush1.msra.mxu0 0.0
        %318 = vmatprep.subr.mxu0 0.0
        %319 = vmatpush1.msra.mxu0 0.0
        %320 = vmatprep.subr.mxu0 0.0
        %321 = vmatpush1.msra.mxu0 0.0
        %322 = vmatprep.subr.mxu0 0.0
        %323 = vmatpush1.msra.mxu0 0.0
        %324 = vmatprep.subr.mxu0 0.0
        %325 = vmatpush1.msra.mxu0 0.0
        %326 = vmatprep.subr.mxu0 0.0
        %327 = vmatpush1.msra.mxu0 0.0
        %328 = vmatprep.subr.mxu0 0.0
        %329 = vmatpush1.msra.mxu0 0.0
        %330 = vmatprep.subr.mxu0 0.0
        %331 = vmatpush1.msra.mxu0 0.0
        %332 = vmatprep.subr.mxu0 0.0
        %333 = vmatpush1.msra.mxu0 0.0
        %334 = vmatprep.subr.mxu0 0.0
        %335 = vmatpush1.msra.mxu0 0.0
        %336 = vmatprep.subr.mxu0 0.0
        %337 = vmatpush1.msra.mxu0 0.0
        %338 = vmatprep.subr.mxu0 0.0
        %339 = vmatpush1.msra.mxu0 0.0
        %340 = vmatprep.subr.mxu0 0.0
        %341 = vmatpush1.msra.mxu0 0.0
        %342 = vmatprep.mubr.f32.mxu0 0.0
        %343 = vmatmul.mubr.f32.gmra.mrb[0].mxu0 %v254
        %v344 = vpop.f32.mrb[0].mxu0
        %v345 = vadd.f32 %v276, %v344
        %v346 = vpop.f32.mrb[0].mxu0
        %347 = vdwg.mxu0
        %348 = vst [vmem:[%s252] sm:$0xff] %v345
        %s349 = sand.u32 %s132, 1
        %s350 = scalar_lea.sflag [#allocation4], %s349
        %s351 = sand.u32 %s132, 1
        %s352 = smul.addr %s351, 8
        %s353 = scalar_lea.vmem [#allocation8], %s352
        // Predicated region
        $region45: #{music_transformer_forward.5} parent=31 // pred_check
          %p354 = pneg %p142
        $region46: #{music_transformer_forward.5} parent=31 // pred_check_branch
          %356 = sbr.rel (%p354) target = $region48
        $region47: #{music_transformer_forward.5} parent=31 // pred_region
          %s357 = sadd.s32 %s26, %s28
          %s359 = ssub.s32 128, 128
          %360 = vsyncadd %s350, %s359
          %s361 = smul.addr %s27, 2
          %s362 = sadd.s32 %s357, %s361
          %s363 = smul.addr %s362, 128
          %s364 = scalar_lea.hbm %s3, %s363
          %s366 = sshll.u32 %s353, 4
          %s367 = int_to_ptr.vmem [resolvable:$true] %s366
          %369 = dma.vmem_to_hbm [thread:$0]  %s367, 128, %s364, %s350
        $region48: #{music_transformer_forward.5} parent=31 // pred_fallthru
          _
      $region32: #{music_transformer_forward.5} parent=5 // pred_fallthru
        _
      %p370 = scmp.le.s32.totalorder 2, %s16
      // Predicated region
      $region49: #{music_transformer_forward.5} parent=5 // pred_check
        %p371 = pneg %p370
      $region50: #{music_transformer_forward.5} parent=5 // pred_check_branch
        %373 = sbr.rel (%p371) target = $region52
      $region51: #{music_transformer_forward.5} parent=5 // pred_region
        %s374 = ssub.s32 %s16, 2
        // Predicated region
        $region53: #{music_transformer_forward.5} parent=51 // pred_check
          %p375 = pneg %p148
        $region54: #{music_transformer_forward.5} parent=51 // pred_check_branch
          %377 = sbr.rel (%p375) target = $region56
        $region55: #{music_transformer_forward.5} parent=51 // pred_region
          %s378 = sand.u32 %s133, 1
          %s379 = scalar_lea.sflag [#allocation4], %s378
          %s380 = sand.u32 %s133, 1
          %s381 = smul.addr %s380, 8
          %s382 = scalar_lea.vmem [#allocation8], %s381
          %383 = dma.done %s379, 128
        $region56: #{music_transformer_forward.5} parent=51 // pred_fallthru
          _
      $region52: #{music_transformer_forward.5} parent=5 // pred_fallthru
        _
    $region6: #{music_transformer_forward.5} parent=1 // loop_footer
      %s20 = sadd.s32 1, %s16
    $region7: #{music_transformer_forward.5} parent=1 // loop_footer_branch
      %15 = sbr.rel target = $region3
    $region8: #{music_transformer_forward.5} parent=1 // loop_exit
      _
    %384 = vsyncpa [#allocation3], 1
    %s385 = scalar_lea.sflag [#allocation3], 1
    %386 = vsyncpa %s385, 1
    %387 = vsyncpa [#allocation6], 1
    %388 = vsyncpa [#allocation4], 1
    %s389 = scalar_lea.sflag [#allocation4], 1
    %390 = vsyncpa %s389, 1

// kernel: music_transformer_forward.3
$region0: #{music_transformer_forward.3}
  #allocation0 [shape = 'u32[]', space=smem, size = 0x4, offset = 0x4, fixed_abs, tag = 'smem constant byte address 0x4 - core index']
  #allocation1 [shape = 'u32[144,128]{1,0:T(1,128)}', space=vmem, size = 0x12000, scoped, tag = 'internal scratch']
  #allocation2 [shape = 'f32[4,8,128]{2,1,0:T(8,128)}', space=vmem, size = 0x4000, scoped, tag = 'scratch operand']
  #allocation3 [shape = 'f32[4,8,128]{2,1,0:T(8,128)}', space=vmem, size = 0x4000, scoped, tag = 'scratch operand']
  %s0 = inlined_call_operand.hbm [shape: f32[2,8,128], index: 0, kind: input, shape index: {}]
  %s1 = inlined_call_operand.hbm [shape: f32[128,512], index: 1, kind: input, shape index: {}]
  %s2 = inlined_call_operand.hbm [shape: f32[128,512], index: 2, kind: input, shape index: {}]
  %s3 = inlined_call_operand.hbm [shape: f32[128,512], index: 3, kind: input, shape index: {}]
  %s4 = inlined_call_operand.hbm [shape: f32[1,512], index: 4, kind: input, shape index: {}]
  %s5 = inlined_call_operand.hbm [shape: f32[1,512], index: 5, kind: input, shape index: {}]
  %s6 = inlined_call_operand.hbm [shape: f32[1,512], index: 6, kind: input, shape index: {}]
  %s7 = inlined_call_operand.hbm [shape: f32[4,128,128], index: 7, kind: input, shape index: {}]
  %s8 = inlined_call_operand.hbm [shape: f32[1,128], index: 8, kind: input, shape index: {}]
  %s9 = inlined_call_operand.hbm [shape: f32[1,128], index: 9, kind: input, shape index: {}]
  %s10 = inlined_call_operand.hbm [shape: f32[1,128], index: 10, kind: input, shape index: {}]
  %s11 = inlined_call_operand.hbm [shape: f32[128,2048], index: 11, kind: input, shape index: {}]
  %s12 = inlined_call_operand.hbm [shape: f32[1,2048], index: 12, kind: input, shape index: {}]
  %s13 = inlined_call_operand.hbm [shape: f32[2048,128], index: 13, kind: input, shape index: {}]
  %s14 = inlined_call_operand.hbm [shape: f32[1,128], index: 14, kind: input, shape index: {}]
  %s15 = inlined_call_operand.hbm [shape: f32[1,128], index: 15, kind: input, shape index: {}]
  %s16 = inlined_call_operand.hbm [shape: f32[1,128], index: 16, kind: input, shape index: {}]
  %s17 = inlined_call_operand.hbm [shape: f32[2,8,128], index: 17, kind: output, shape index: {}]
  %s18 = sld [smem:[#allocation0]]
  $region173: #{music_transformer_forward.3} parent=0
    _
  %s20 = ssub.s32 1, %s18
  %s21 = scalar_select 0, %s20, %s18
  $region1: #{music_transformer_forward.3} parent=0
    #allocation4 [shape = 'u8[8192]{0}', space=vmem, size = 0x2000, scoped, tag = 'input window, operand 0']
    #allocation5 [shape = 's32[2]{0}', space=sflag, size = 0x8, scoped, tag = 'scoped memory for music_transformer_forward.3']
    #allocation6 [shape = 's32[2]{0}', space=sflag, size = 0x8, scoped, tag = 'scoped memory for music_transformer_forward.3']
    #allocation7 [shape = 'u8[262144]{0}', space=vmem, size = 0x40000, scoped, tag = 'input window, operand 1, single buffered']
    #allocation8 [shape = 's32[1]{0}', space=sflag, size = 0x4, scoped, tag = 'scoped memory for music_transformer_forward.3']
    #allocation9 [shape = 'u8[262144]{0}', space=vmem, size = 0x40000, scoped, tag = 'input window, operand 2, single buffered']
    #allocation10 [shape = 'u8[262144]{0}', space=vmem, size = 0x40000, scoped, tag = 'input window, operand 3, single buffered']
    #allocation11 [shape = 's32[1]{0}', space=sflag, size = 0x4, scoped, tag = 'scoped memory for music_transformer_forward.3']
    #allocation12 [shape = 'u8[2048]{0}', space=vmem, size = 0x800, scoped, tag = 'input window, operand 4, single buffered']
    #allocation13 [shape = 'u8[2048]{0}', space=vmem, size = 0x800, scoped, tag = 'input window, operand 5, single buffered']
    #allocation14 [shape = 's32[1]{0}', space=sflag, size = 0x4, scoped, tag = 'scoped memory for music_transformer_forward.3']
    #allocation15 [shape = 'u8[2048]{0}', space=vmem, size = 0x800, scoped, tag = 'input window, operand 6, single buffered']
    #allocation16 [shape = 'u8[262144]{0}', space=vmem, size = 0x40000, scoped, tag = 'input window, operand 7, single buffered']
    #allocation17 [shape = 's32[1]{0}', space=sflag, size = 0x4, scoped, tag = 'scoped memory for music_transformer_forward.3']
    #allocation18 [shape = 'u8[512]{0}', space=vmem, size = 0x400, scoped, tag = 'input window, operand 8, single buffered']
    #allocation19 [shape = 'u8[512]{0}', space=vmem, size = 0x400, scoped, tag = 'input window, operand 9, single buffered']
    #allocation20 [shape = 's32[1]{0}', space=sflag, size = 0x4, scoped, tag = 'scoped memory for music_transformer_forward.3']
    #allocation21 [shape = 'u8[512]{0}', space=vmem, size = 0x400, scoped, tag = 'input window, operand 10, single buffered']
    #allocation22 [shape = 'u8[1048576]{0}', space=vmem, size = 0x100000, scoped, tag = 'input window, operand 11, single buffered']
    #allocation23 [shape = 's32[1]{0}', space=sflag, size = 0x4, scoped, tag = 'scoped memory for music_transformer_forward.3']
    #allocation24 [shape = 'u8[8192]{0}', space=vmem, size = 0x2000, scoped, tag = 'input window, operand 12, single buffered']
    #allocation25 [shape = 'u8[1048576]{0}', space=vmem, size = 0x100000, scoped, tag = 'input window, operand 13, single buffered']
    #allocation26 [shape = 's32[1]{0}', space=sflag, size = 0x4, scoped, tag = 'scoped memory for music_transformer_forward.3']
    #allocation27 [shape = 'u8[512]{0}', space=vmem, size = 0x400, scoped, tag = 'input window, operand 14, single buffered']
    #allocation28 [shape = 'u8[512]{0}', space=vmem, size = 0x400, scoped, tag = 'input window, operand 15, single buffered']
    #allocation29 [shape = 's32[1]{0}', space=sflag, size = 0x4, scoped, tag = 'scoped memory for music_transformer_forward.3']
    #allocation30 [shape = 'u8[512]{0}', space=vmem, size = 0x400, scoped, tag = 'input window, operand 16, single buffered']
    #allocation31 [shape = 'u8[8192]{0}', space=vmem, size = 0x2000, scoped, tag = 'output window, operand 0']
    %22 = vsyncpa [#allocation5], 0
    %s23 = scalar_lea.sflag [#allocation5], 1
    %24 = vsyncpa %s23, 0
    %25 = vsyncpa [#allocation8], 0
    %26 = vsyncpa [#allocation11], 0
    %27 = vsyncpa [#allocation14], 0
    %28 = vsyncpa [#allocation17], 0
    %29 = vsyncpa [#allocation20], 0
    %30 = vsyncpa [#allocation23], 0
    %31 = vsyncpa [#allocation26], 0
    %32 = vsyncpa [#allocation29], 0
    %33 = vsyncpa [#allocation6], 0
    %s34 = scalar_lea.sflag [#allocation6], 1
    %35 = vsyncpa %s34, 0
    loop: start=0, step=1, limit=4
    $region2: #{music_transformer_forward.3} parent=1 // loop_pre_header
      _
    $region3: #{music_transformer_forward.3} parent=1 // loop_header
      %s37 = sphi 0, %s41
      %p38 = scmp.ge.s32.totalorder %s37, 4
      %s44 = sphi 0, %s56
      %s45 = sphi 0, %s52
      %s46 = sphi 0, %s44
      %s47 = sphi 0, %s45
      %s48 = sphi 0, %s46
      %s49 = sphi 0, %s47
      %s59 = sphi 0, %s61
      %s62 = sphi 0, %s59
      %s63 = sphi 0, %s62
      %s79 = sphi 0, %s63
      %s83 = sphi 0, %s83
      %s85 = sphi 0, %s83
      %s86 = sphi 0, %s85
      %s100 = sphi 0, %s86
      %s104 = sphi 0, %s104
      %s106 = sphi 0, %s104
      %s107 = sphi 0, %s106
      %s121 = sphi 0, %s107
      %s125 = sphi 0, %s125
      %s127 = sphi 0, %s125
      %s128 = sphi 0, %s127
      %s142 = sphi 0, %s128
      %s146 = sphi 0, %s146
      %s148 = sphi 0, %s146
      %s149 = sphi 0, %s148
      %s163 = sphi 0, %s149
      %s167 = sphi 0, %s167
      %s169 = sphi 0, %s167
      %s170 = sphi 0, %s169
      %s184 = sphi 0, %s170
      %s188 = sphi 0, %s188
      %s190 = sphi 0, %s188
      %s191 = sphi 0, %s190
      %s205 = sphi 0, %s191
      %s209 = sphi 0, %s209
      %s211 = sphi 0, %s209
      %s212 = sphi 0, %s211
      %s226 = sphi 0, %s212
      %s230 = sphi 0, %s230
      %s232 = sphi 0, %s230
      %s233 = sphi 0, %s232
      %s247 = sphi 0, %s233
      %s251 = sphi 0, %s251
      %s253 = sphi 0, %s251
      %s254 = sphi 0, %s253
      %s268 = sphi 0, %s254
      %s272 = sphi 0, %s272
      %s274 = sphi 0, %s272
      %s275 = sphi 0, %s274
      %s289 = sphi 0, %s275
      %s293 = sphi 0, %s293
      %s295 = sphi 0, %s293
      %s296 = sphi 0, %s295
      %s310 = sphi 0, %s296
      %s314 = sphi 0, %s314
      %s316 = sphi 0, %s314
      %s317 = sphi 0, %s316
      %s331 = sphi 0, %s317
      %s335 = sphi 0, %s335
      %s337 = sphi 0, %s335
      %s338 = sphi 0, %s337
      %s352 = sphi 0, %s338
      %s356 = sphi 0, %s356
      %s358 = sphi 0, %s356
      %s359 = sphi 0, %s358
      %s373 = sphi 0, %s359
      %s377 = sphi 0, %s377
      %s379 = sphi 0, %s377
      %s380 = sphi 0, %s379
      %s394 = sphi 0, %s380
      %s398 = sphi 0, %s398
      %s400 = sphi 0, %s398
      %s401 = sphi 0, %s400
      %s415 = sphi 0, %s401
      %s423 = sphi 0, %s425
      %s426 = sphi 0, %s423
      %s427 = sphi 0, %s426
      %s443 = sphi 0, %s427
    $region4: #{music_transformer_forward.3} parent=1 // loop_header_branch
      %40 = sbr.rel (%p38) target = $region8
    $region5: #{music_transformer_forward.3} parent=1 // loop_body
      %s42 = ssub.s32 %s37, 1
      %s43 = ssub.s32 %s37, 2
      %s50 = sadd.s32 1, %s45
      %p51 = scmp.ge.s32.totalorder %s50, 1
      %s52 = scalar_select %p51, 0, %s50
      %s53 = sadd.s32 1, %s44
      %s54 = scalar_select %p51, %s53, %s44
      %p55 = scmp.ge.s32.totalorder %s54, 2
      %s56 = scalar_select %p55, 0, %s54
      %s57 = ssub.s32 %s44, %s56
      %p58 = scmp.eq.s32.totalorder %s57, 0
      %s60 = sadd.s32 %s59, 1
      %s61 = scalar_select %p58, %s59, %s60
      %p64 = pneg %p58
      %p65 = scmp.eq.s32.totalorder %s37, 1
      %p66 = por %p64, %p65
      %p67 = scmp.ne.s32.totalorder %s59, %s62
      %p68 = scmp.eq.s32.totalorder %s37, 0
      %p69 = por %p67, %p68
      %p70 = scmp.ne.s32.totalorder %s59, %s62
      %p71 = scmp.eq.s32.totalorder %s42, 1
      %p72 = por %p70, %p71
      %p73 = scmp.ne.s32.totalorder %s62, %s63
      %p74 = scmp.eq.s32.totalorder %s42, 0
      %p75 = por %p73, %p74
      %p76 = scmp.ne.s32.totalorder %s62, %s63
      %p77 = scmp.eq.s32.totalorder %s43, 1
      %p78 = por %p76, %p77
      %p80 = scmp.ne.s32.totalorder %s63, %s79
      %p81 = scmp.eq.s32.totalorder %s43, 0
      %p82 = por %p80, %p81
      %s84 = sadd.s32 %s83, 1
      %p87 = scmp.eq.s32.totalorder %s37, 1
      %p88 = scmp.ne.s32.totalorder %s83, %s85
      %p89 = scmp.eq.s32.totalorder %s37, 0
      %p90 = por %p88, %p89
      %p91 = scmp.ne.s32.totalorder %s83, %s85
      %p92 = scmp.eq.s32.totalorder %s42, 1
      %p93 = por %p91, %p92
      %p94 = scmp.ne.s32.totalorder %s85, %s86
      %p95 = scmp.eq.s32.totalorder %s42, 0
      %p96 = por %p94, %p95
      %p97 = scmp.ne.s32.totalorder %s85, %s86
      %p98 = scmp.eq.s32.totalorder %s43, 1
      %p99 = por %p97, %p98
      %p101 = scmp.ne.s32.totalorder %s86, %s100
      %p102 = scmp.eq.s32.totalorder %s43, 0
      %p103 = por %p101, %p102
      %s105 = sadd.s32 %s104, 1
      %p108 = scmp.eq.s32.totalorder %s37, 1
      %p109 = scmp.ne.s32.totalorder %s104, %s106
      %p110 = scmp.eq.s32.totalorder %s37, 0
      %p111 = por %p109, %p110
      %p112 = scmp.ne.s32.totalorder %s104, %s106
      %p113 = scmp.eq.s32.totalorder %s42, 1
      %p114 = por %p112, %p113
      %p115 = scmp.ne.s32.totalorder %s106, %s107
      %p116 = scmp.eq.s32.totalorder %s42, 0
      %p117 = por %p115, %p116
      %p118 = scmp.ne.s32.totalorder %s106, %s107
      %p119 = scmp.eq.s32.totalorder %s43, 1
      %p120 = por %p118, %p119
      %p122 = scmp.ne.s32.totalorder %s107, %s121
      %p123 = scmp.eq.s32.totalorder %s43, 0
      %p124 = por %p122, %p123
      %s126 = sadd.s32 %s125, 1
      %p129 = scmp.eq.s32.totalorder %s37, 1
      %p130 = scmp.ne.s32.totalorder %s125, %s127
      %p131 = scmp.eq.s32.totalorder %s37, 0
      %p132 = por %p130, %p131
      %p133 = scmp.ne.s32.totalorder %s125, %s127
      %p134 = scmp.eq.s32.totalorder %s42, 1
      %p135 = por %p133, %p134
      %p136 = scmp.ne.s32.totalorder %s127, %s128
      %p137 = scmp.eq.s32.totalorder %s42, 0
      %p138 = por %p136, %p137
      %p139 = scmp.ne.s32.totalorder %s127, %s128
      %p140 = scmp.eq.s32.totalorder %s43, 1
      %p141 = por %p139, %p140
      %p143 = scmp.ne.s32.totalorder %s128, %s142
      %p144 = scmp.eq.s32.totalorder %s43, 0
      %p145 = por %p143, %p144
      %s147 = sadd.s32 %s146, 1
      %p150 = scmp.eq.s32.totalorder %s37, 1
      %p151 = scmp.ne.s32.totalorder %s146, %s148
      %p152 = scmp.eq.s32.totalorder %s37, 0
      %p153 = por %p151, %p152
      %p154 = scmp.ne.s32.totalorder %s146, %s148
      %p155 = scmp.eq.s32.totalorder %s42, 1
      %p156 = por %p154, %p155
      %p157 = scmp.ne.s32.totalorder %s148, %s149
      %p158 = scmp.eq.s32.totalorder %s42, 0
      %p159 = por %p157, %p158
      %p160 = scmp.ne.s32.totalorder %s148, %s149
      %p161 = scmp.eq.s32.totalorder %s43, 1
      %p162 = por %p160, %p161
      %p164 = scmp.ne.s32.totalorder %s149, %s163
      %p165 = scmp.eq.s32.totalorder %s43, 0
      %p166 = por %p164, %p165
      %s168 = sadd.s32 %s167, 1
      %p171 = scmp.eq.s32.totalorder %s37, 1
      %p172 = scmp.ne.s32.totalorder %s167, %s169
      %p173 = scmp.eq.s32.totalorder %s37, 0
      %p174 = por %p172, %p173
      %p175 = scmp.ne.s32.totalorder %s167, %s169
      %p176 = scmp.eq.s32.totalorder %s42, 1
      %p177 = por %p175, %p176
      %p178 = scmp.ne.s32.totalorder %s169, %s170
      %p179 = scmp.eq.s32.totalorder %s42, 0
      %p180 = por %p178, %p179
      %p181 = scmp.ne.s32.totalorder %s169, %s170
      %p182 = scmp.eq.s32.totalorder %s43, 1
      %p183 = por %p181, %p182
      %p185 = scmp.ne.s32.totalorder %s170, %s184
      %p186 = scmp.eq.s32.totalorder %s43, 0
      %p187 = por %p185, %p186
      %s189 = sadd.s32 %s188, 1
      %p192 = scmp.eq.s32.totalorder %s37, 1
      %p193 = scmp.ne.s32.totalorder %s188, %s190
      %p194 = scmp.eq.s32.totalorder %s37, 0
      %p195 = por %p193, %p194
      %p196 = scmp.ne.s32.totalorder %s188, %s190
      %p197 = scmp.eq.s32.totalorder %s42, 1
      %p198 = por %p196, %p197
      %p199 = scmp.ne.s32.totalorder %s190, %s191
      %p200 = scmp.eq.s32.totalorder %s42, 0
      %p201 = por %p199, %p200
      %p202 = scmp.ne.s32.totalorder %s190, %s191
      %p203 = scmp.eq.s32.totalorder %s43, 1
      %p204 = por %p202, %p203
      %p206 = scmp.ne.s32.totalorder %s191, %s205
      %p207 = scmp.eq.s32.totalorder %s43, 0
      %p208 = por %p206, %p207
      %s210 = sadd.s32 %s209, 1
      %p213 = scmp.eq.s32.totalorder %s37, 1
      %p214 = scmp.ne.s32.totalorder %s209, %s211
      %p215 = scmp.eq.s32.totalorder %s37, 0
      %p216 = por %p214, %p215
      %p217 = scmp.ne.s32.totalorder %s209, %s211
      %p218 = scmp.eq.s32.totalorder %s42, 1
      %p219 = por %p217, %p218
      %p220 = scmp.ne.s32.totalorder %s211, %s212
      %p221 = scmp.eq.s32.totalorder %s42, 0
      %p222 = por %p220, %p221
      %p223 = scmp.ne.s32.totalorder %s211, %s212
      %p224 = scmp.eq.s32.totalorder %s43, 1
      %p225 = por %p223, %p224
      %p227 = scmp.ne.s32.totalorder %s212, %s226
      %p228 = scmp.eq.s32.totalorder %s43, 0
      %p229 = por %p227, %p228
      %s231 = sadd.s32 %s230, 1
      %p234 = scmp.eq.s32.totalorder %s37, 1
      %p235 = scmp.ne.s32.totalorder %s230, %s232
      %p236 = scmp.eq.s32.totalorder %s37, 0
      %p237 = por %p235, %p236
      %p238 = scmp.ne.s32.totalorder %s230, %s232
      %p239 = scmp.eq.s32.totalorder %s42, 1
      %p240 = por %p238, %p239
      %p241 = scmp.ne.s32.totalorder %s232, %s233
      %p242 = scmp.eq.s32.totalorder %s42, 0
      %p243 = por %p241, %p242
      %p244 = scmp.ne.s32.totalorder %s232, %s233
      %p245 = scmp.eq.s32.totalorder %s43, 1
      %p246 = por %p244, %p245
      %p248 = scmp.ne.s32.totalorder %s233, %s247
      %p249 = scmp.eq.s32.totalorder %s43, 0
      %p250 = por %p248, %p249
      %s252 = sadd.s32 %s251, 1
      %p255 = scmp.eq.s32.totalorder %s37, 1
      %p256 = scmp.ne.s32.totalorder %s251, %s253
      %p257 = scmp.eq.s32.totalorder %s37, 0
      %p258 = por %p256, %p257
      %p259 = scmp.ne.s32.totalorder %s251, %s253
      %p260 = scmp.eq.s32.totalorder %s42, 1
      %p261 = por %p259, %p260
      %p262 = scmp.ne.s32.totalorder %s253, %s254
      %p263 = scmp.eq.s32.totalorder %s42, 0
      %p264 = por %p262, %p263
      %p265 = scmp.ne.s32.totalorder %s253, %s254
      %p266 = scmp.eq.s32.totalorder %s43, 1
      %p267 = por %p265, %p266
      %p269 = scmp.ne.s32.totalorder %s254, %s268
      %p270 = scmp.eq.s32.totalorder %s43, 0
      %p271 = por %p269, %p270
      %s273 = sadd.s32 %s272, 1
      %p276 = scmp.eq.s32.totalorder %s37, 1
      %p277 = scmp.ne.s32.totalorder %s272, %s274
      %p278 = scmp.eq.s32.totalorder %s37, 0
      %p279 = por %p277, %p278
      %p280 = scmp.ne.s32.totalorder %s272, %s274
      %p281 = scmp.eq.s32.totalorder %s42, 1
      %p282 = por %p280, %p281
      %p283 = scmp.ne.s32.totalorder %s274, %s275
      %p284 = scmp.eq.s32.totalorder %s42, 0
      %p285 = por %p283, %p284
      %p286 = scmp.ne.s32.totalorder %s274, %s275
      %p287 = scmp.eq.s32.totalorder %s43, 1
      %p288 = por %p286, %p287
      %p290 = scmp.ne.s32.totalorder %s275, %s289
      %p291 = scmp.eq.s32.totalorder %s43, 0
      %p292 = por %p290, %p291
      %s294 = sadd.s32 %s293, 1
      %p297 = scmp.eq.s32.totalorder %s37, 1
      %p298 = scmp.ne.s32.totalorder %s293, %s295
      %p299 = scmp.eq.s32.totalorder %s37, 0
      %p300 = por %p298, %p299
      %p301 = scmp.ne.s32.totalorder %s293, %s295
      %p302 = scmp.eq.s32.totalorder %s42, 1
      %p303 = por %p301, %p302
      %p304 = scmp.ne.s32.totalorder %s295, %s296
      %p305 = scmp.eq.s32.totalorder %s42, 0
      %p306 = por %p304, %p305
      %p307 = scmp.ne.s32.totalorder %s295, %s296
      %p308 = scmp.eq.s32.totalorder %s43, 1
      %p309 = por %p307, %p308
      %p311 = scmp.ne.s32.totalorder %s296, %s310
      %p312 = scmp.eq.s32.totalorder %s43, 0
      %p313 = por %p311, %p312
      %s315 = sadd.s32 %s314, 1
      %p318 = scmp.eq.s32.totalorder %s37, 1
      %p319 = scmp.ne.s32.totalorder %s314, %s316
      %p320 = scmp.eq.s32.totalorder %s37, 0
      %p321 = por %p319, %p320
      %p322 = scmp.ne.s32.totalorder %s314, %s316
      %p323 = scmp.eq.s32.totalorder %s42, 1
      %p324 = por %p322, %p323
      %p325 = scmp.ne.s32.totalorder %s316, %s317
      %p326 = scmp.eq.s32.totalorder %s42, 0
      %p327 = por %p325, %p326
      %p328 = scmp.ne.s32.totalorder %s316, %s317
      %p329 = scmp.eq.s32.totalorder %s43, 1
      %p330 = por %p328, %p329
      %p332 = scmp.ne.s32.totalorder %s317, %s331
      %p333 = scmp.eq.s32.totalorder %s43, 0
      %p334 = por %p332, %p333
      %s336 = sadd.s32 %s335, 1
      %p339 = scmp.eq.s32.totalorder %s37, 1
      %p340 = scmp.ne.s32.totalorder %s335, %s337
      %p341 = scmp.eq.s32.totalorder %s37, 0
      %p342 = por %p340, %p341
      %p343 = scmp.ne.s32.totalorder %s335, %s337
      %p344 = scmp.eq.s32.totalorder %s42, 1
      %p345 = por %p343, %p344
      %p346 = scmp.ne.s32.totalorder %s337, %s338
      %p347 = scmp.eq.s32.totalorder %s42, 0
      %p348 = por %p346, %p347
      %p349 = scmp.ne.s32.totalorder %s337, %s338
      %p350 = scmp.eq.s32.totalorder %s43, 1
      %p351 = por %p349, %p350
      %p353 = scmp.ne.s32.totalorder %s338, %s352
      %p354 = scmp.eq.s32.totalorder %s43, 0
      %p355 = por %p353, %p354
      %s357 = sadd.s32 %s356, 1
      %p360 = scmp.eq.s32.totalorder %s37, 1
      %p361 = scmp.ne.s32.totalorder %s356, %s358
      %p362 = scmp.eq.s32.totalorder %s37, 0
      %p363 = por %p361, %p362
      %p364 = scmp.ne.s32.totalorder %s356, %s358
      %p365 = scmp.eq.s32.totalorder %s42, 1
      %p366 = por %p364, %p365
      %p367 = scmp.ne.s32.totalorder %s358, %s359
      %p368 = scmp.eq.s32.totalorder %s42, 0
      %p369 = por %p367, %p368
      %p370 = scmp.ne.s32.totalorder %s358, %s359
      %p371 = scmp.eq.s32.totalorder %s43, 1
      %p372 = por %p370, %p371
      %p374 = scmp.ne.s32.totalorder %s359, %s373
      %p375 = scmp.eq.s32.totalorder %s43, 0
      %p376 = por %p374, %p375
      %s378 = sadd.s32 %s377, 1
      %p381 = scmp.eq.s32.totalorder %s37, 1
      %p382 = scmp.ne.s32.totalorder %s377, %s379
      %p383 = scmp.eq.s32.totalorder %s37, 0
      %p384 = por %p382, %p383
      %p385 = scmp.ne.s32.totalorder %s377, %s379
      %p386 = scmp.eq.s32.totalorder %s42, 1
      %p387 = por %p385, %p386
      %p388 = scmp.ne.s32.totalorder %s379, %s380
      %p389 = scmp.eq.s32.totalorder %s42, 0
      %p390 = por %p388, %p389
      %p391 = scmp.ne.s32.totalorder %s379, %s380
      %p392 = scmp.eq.s32.totalorder %s43, 1
      %p393 = por %p391, %p392
      %p395 = scmp.ne.s32.totalorder %s380, %s394
      %p396 = scmp.eq.s32.totalorder %s43, 0
      %p397 = por %p395, %p396
      %s399 = sadd.s32 %s398, 1
      %p402 = scmp.eq.s32.totalorder %s37, 1
      %p403 = scmp.ne.s32.totalorder %s398, %s400
      %p404 = scmp.eq.s32.totalorder %s37, 0
      %p405 = por %p403, %p404
      %p406 = scmp.ne.s32.totalorder %s398, %s400
      %p407 = scmp.eq.s32.totalorder %s42, 1
      %p408 = por %p406, %p407
      %p409 = scmp.ne.s32.totalorder %s400, %s401
      %p410 = scmp.eq.s32.totalorder %s42, 0
      %p411 = por %p409, %p410
      %p412 = scmp.ne.s32.totalorder %s400, %s401
      %p413 = scmp.eq.s32.totalorder %s43, 1
      %p414 = por %p412, %p413
      %p416 = scmp.ne.s32.totalorder %s401, %s415
      %p417 = scmp.eq.s32.totalorder %s43, 0
      %p418 = por %p416, %p417
      %s419 = ssub.s32 %s44, %s56
      %s420 = ssub.s32 %s45, %s52
      %s421 = sor.u32 %s419, %s420
      %p422 = scmp.eq.s32.totalorder %s421, 0
      %s424 = sadd.s32 %s423, 1
      %s425 = scalar_select %p422, %s423, %s424
      %p428 = pneg %p422
      %p429 = scmp.eq.s32.totalorder %s37, 1
      %p430 = por %p428, %p429
      %p431 = scmp.ne.s32.totalorder %s423, %s426
      %p432 = scmp.eq.s32.totalorder %s37, 0
      %p433 = por %p431, %p432
      %p434 = scmp.ne.s32.totalorder %s423, %s426
      %p435 = scmp.eq.s32.totalorder %s42, 1
      %p436 = por %p434, %p435
      %p437 = scmp.ne.s32.totalorder %s426, %s427
      %p438 = scmp.eq.s32.totalorder %s42, 0
      %p439 = por %p437, %p438
      %p440 = scmp.ne.s32.totalorder %s426, %s427
      %p441 = scmp.eq.s32.totalorder %s43, 1
      %p442 = por %p440, %p441
      %p444 = scmp.ne.s32.totalorder %s427, %s443
      %p445 = scmp.eq.s32.totalorder %s43, 0
      %p446 = por %p444, %p445
      %p447 = scmp.le.s32.totalorder 1, %s37
      %p448 = scmp.lt.s32.totalorder %s37, 3
      %p449 = pnand %p447, %p448
      %p450 = pneg %p449
      // Predicated region
      $region9: #{music_transformer_forward.3} parent=5 // pred_check
        _
      $region10: #{music_transformer_forward.3} parent=5 // pred_check_branch
        %452 = sbr.rel (%p449) target = $region12
      $region11: #{music_transformer_forward.3} parent=5 // pred_region
        %s453 = ssub.s32 %s37, 1
        // Predicated region
        $region13: #{music_transformer_forward.3} parent=11 // pred_check
          %p454 = pneg %p96
        $region14: #{music_transformer_forward.3} parent=11 // pred_check_branch
          %456 = sbr.rel (%p454) target = $region16
        $region15: #{music_transformer_forward.3} parent=11 // pred_region
          %s458 = ssub.s32 8192, 8192
          %459 = vsyncadd [#allocation8], %s458
          %s460 = sshll.u32 [#allocation7], 4
          %s461 = int_to_ptr.vmem [resolvable:$true] %s460
          %466 = dma.hbm_to_vmem [thread:$0]  %s1, 8192, %s461, [#allocation8], 512, 512, 32
        $region16: #{music_transformer_forward.3} parent=11 // pred_fallthru
          _
        // Predicated region
        $region17: #{music_transformer_forward.3} parent=11 // pred_check
          %p467 = pneg %p117
        $region18: #{music_transformer_forward.3} parent=11 // pred_check_branch
          %469 = sbr.rel (%p467) target = $region20
        $region19: #{music_transformer_forward.3} parent=11 // pred_region
          %s471 = ssub.s32 8192, 8192
          %472 = vsyncadd [#allocation8], %s471
          %s473 = sshll.u32 [#allocation9], 4
          %s474 = int_to_ptr.vmem [resolvable:$true] %s473
          %479 = dma.hbm_to_vmem [thread:$0]  %s2, 8192, %s474, [#allocation8], 512, 512, 32
        $region20: #{music_transformer_forward.3} parent=11 // pred_fallthru
          _
        // Predicated region
        $region21: #{music_transformer_forward.3} parent=11 // pred_check
          %p480 = pneg %p138
        $region22: #{music_transformer_forward.3} parent=11 // pred_check_branch
          %482 = sbr.rel (%p480) target = $region24
        $region23: #{music_transformer_forward.3} parent=11 // pred_region
          %s484 = ssub.s32 8192, 8192
          %485 = vsyncadd [#allocation11], %s484
          %s486 = sshll.u32 [#allocation10], 4
          %s487 = int_to_ptr.vmem [resolvable:$true] %s486
          %492 = dma.hbm_to_vmem [thread:$0]  %s3, 8192, %s487, [#allocation11], 512, 512, 32
        $region24: #{music_transformer_forward.3} parent=11 // pred_fallthru
          _
        // Predicated region
        $region25: #{music_transformer_forward.3} parent=11 // pred_check
          %p493 = pneg %p159
        $region26: #{music_transformer_forward.3} parent=11 // pred_check_branch
          %495 = sbr.rel (%p493) target = $region28
        $region27: #{music_transformer_forward.3} parent=11 // pred_region
          %s497 = ssub.s32 64, 64
          %498 = vsyncadd [#allocation11], %s497
          %s500 = sshll.u32 [#allocation12], 4
          %s501 = int_to_ptr.vmem [resolvable:$true] %s500
          %503 = dma.hbm_to_vmem [thread:$0]  %s4, 64, %s501, [#allocation11]
        $region28: #{music_transformer_forward.3} parent=11 // pred_fallthru
          _
        // Predicated region
        $region29: #{music_transformer_forward.3} parent=11 // pred_check
          %p504 = pneg %p180
        $region30: #{music_transformer_forward.3} parent=11 // pred_check_branch
          %506 = sbr.rel (%p504) target = $region32
        $region31: #{music_transformer_forward.3} parent=11 // pred_region
          %s508 = ssub.s32 64, 64
          %509 = vsyncadd [#allocation14], %s508
          %s511 = sshll.u32 [#allocation13], 4
          %s512 = int_to_ptr.vmem [resolvable:$true] %s511
          %514 = dma.hbm_to_vmem [thread:$0]  %s5, 64, %s512, [#allocation14]
        $region32: #{music_transformer_forward.3} parent=11 // pred_fallthru
          _
        // Predicated region
        $region33: #{music_transformer_forward.3} parent=11 // pred_check
          %p515 = pneg %p201
        $region34: #{music_transformer_forward.3} parent=11 // pred_check_branch
          %517 = sbr.rel (%p515) target = $region36
        $region35: #{music_transformer_forward.3} parent=11 // pred_region
          %s519 = ssub.s32 64, 64
          %520 = vsyncadd [#allocation14], %s519
          %s522 = sshll.u32 [#allocation15], 4
          %s523 = int_to_ptr.vmem [resolvable:$true] %s522
          %525 = dma.hbm_to_vmem [thread:$0]  %s6, 64, %s523, [#allocation14]
        $region36: #{music_transformer_forward.3} parent=11 // pred_fallthru
          _
        // Predicated region
        $region37: #{music_transformer_forward.3} parent=11 // pred_check
          %p526 = pneg %p222
        $region38: #{music_transformer_forward.3} parent=11 // pred_check_branch
          %528 = sbr.rel (%p526) target = $region40
        $region39: #{music_transformer_forward.3} parent=11 // pred_region
          %s530 = ssub.s32 8192, 8192
          %531 = vsyncadd [#allocation17], %s530
          %s532 = sshll.u32 [#allocation16], 4
          %s533 = int_to_ptr.vmem [resolvable:$true] %s532
          %538 = dma.hbm_to_vmem [thread:$0]  %s7, 8192, %s533, [#allocation17], 128, 128, 8
        $region40: #{music_transformer_forward.3} parent=11 // pred_fallthru
          _
        // Predicated region
        $region41: #{music_transformer_forward.3} parent=11 // pred_check
          %p539 = pneg %p243
        $region42: #{music_transformer_forward.3} parent=11 // pred_check_branch
          %541 = sbr.rel (%p539) target = $region44
        $region43: #{music_transformer_forward.3} parent=11 // pred_region
          %s543 = ssub.s32 16, 16
          %544 = vsyncadd [#allocation17], %s543
          %s546 = sshll.u32 [#allocation18], 4
          %s547 = int_to_ptr.vmem [resolvable:$true] %s546
          %549 = dma.hbm_to_vmem [thread:$0]  %s8, 16, %s547, [#allocation17]
        $region44: #{music_transformer_forward.3} parent=11 // pred_fallthru
          _
        // Predicated region
        $region45: #{music_transformer_forward.3} parent=11 // pred_check
          %p550 = pneg %p264
        $region46: #{music_transformer_forward.3} parent=11 // pred_check_branch
          %552 = sbr.rel (%p550) target = $region48
        $region47: #{music_transformer_forward.3} parent=11 // pred_region
          %s554 = ssub.s32 16, 16
          %555 = vsyncadd [#allocation20], %s554
          %s557 = sshll.u32 [#allocation19], 4
          %s558 = int_to_ptr.vmem [resolvable:$true] %s557
          %560 = dma.hbm_to_vmem [thread:$0]  %s9, 16, %s558, [#allocation20]
        $region48: #{music_transformer_forward.3} parent=11 // pred_fallthru
          _
        // Predicated region
        $region49: #{music_transformer_forward.3} parent=11 // pred_check
          %p561 = pneg %p285
        $region50: #{music_transformer_forward.3} parent=11 // pred_check_branch
          %563 = sbr.rel (%p561) target = $region52
        $region51: #{music_transformer_forward.3} parent=11 // pred_region
          %s565 = ssub.s32 16, 16
          %566 = vsyncadd [#allocation20], %s565
          %s568 = sshll.u32 [#allocation21], 4
          %s569 = int_to_ptr.vmem [resolvable:$true] %s568
          %571 = dma.hbm_to_vmem [thread:$0]  %s10, 16, %s569, [#allocation20]
        $region52: #{music_transformer_forward.3} parent=11 // pred_fallthru
          _
        // Predicated region
        $region53: #{music_transformer_forward.3} parent=11 // pred_check
          %p572 = pneg %p306
        $region54: #{music_transformer_forward.3} parent=11 // pred_check_branch
          %574 = sbr.rel (%p572) target = $region56
        $region55: #{music_transformer_forward.3} parent=11 // pred_region
          %s576 = ssub.s32 32768, 32768
          %577 = vsyncadd [#allocation23], %s576
          %s578 = sshll.u32 [#allocation22], 4
          %s579 = int_to_ptr.vmem [resolvable:$true] %s578
          %584 = dma.hbm_to_vmem [thread:$0]  %s11, 32768, %s579, [#allocation23], 2048, 2048, 128
        $region56: #{music_transformer_forward.3} parent=11 // pred_fallthru
          _
        // Predicated region
        $region57: #{music_transformer_forward.3} parent=11 // pred_check
          %p585 = pneg %p327
        $region58: #{music_transformer_forward.3} parent=11 // pred_check_branch
          %587 = sbr.rel (%p585) target = $region60
        $region59: #{music_transformer_forward.3} parent=11 // pred_region
          %s589 = ssub.s32 256, 256
          %590 = vsyncadd [#allocation23], %s589
          %s592 = sshll.u32 [#allocation24], 4
          %s593 = int_to_ptr.vmem [resolvable:$true] %s592
          %595 = dma.hbm_to_vmem [thread:$0]  %s12, 256, %s593, [#allocation23]
        $region60: #{music_transformer_forward.3} parent=11 // pred_fallthru
          _
        // Predicated region
        $region61: #{music_transformer_forward.3} parent=11 // pred_check
          %p596 = pneg %p348
        $region62: #{music_transformer_forward.3} parent=11 // pred_check_branch
          %598 = sbr.rel (%p596) target = $region64
        $region63: #{music_transformer_forward.3} parent=11 // pred_region
          %s600 = ssub.s32 32768, 32768
          %601 = vsyncadd [#allocation26], %s600
          %s602 = sshll.u32 [#allocation25], 4
          %s603 = int_to_ptr.vmem [resolvable:$true] %s602
          %608 = dma.hbm_to_vmem [thread:$0]  %s13, 32768, %s603, [#allocation26], 128, 128, 8
        $region64: #{music_transformer_forward.3} parent=11 // pred_fallthru
          _
        // Predicated region
        $region65: #{music_transformer_forward.3} parent=11 // pred_check
          %p609 = pneg %p369
        $region66: #{music_transformer_forward.3} parent=11 // pred_check_branch
          %611 = sbr.rel (%p609) target = $region68
        $region67: #{music_transformer_forward.3} parent=11 // pred_region
          %s613 = ssub.s32 16, 16
          %614 = vsyncadd [#allocation26], %s613
          %s616 = sshll.u32 [#allocation27], 4
          %s617 = int_to_ptr.vmem [resolvable:$true] %s616
          %619 = dma.hbm_to_vmem [thread:$0]  %s14, 16, %s617, [#allocation26]
        $region68: #{music_transformer_forward.3} parent=11 // pred_fallthru
          _
        // Predicated region
        $region69: #{music_transformer_forward.3} parent=11 // pred_check
          %p620 = pneg %p390
        $region70: #{music_transformer_forward.3} parent=11 // pred_check_branch
          %622 = sbr.rel (%p620) target = $region72
        $region71: #{music_transformer_forward.3} parent=11 // pred_region
          %s624 = ssub.s32 16, 16
          %625 = vsyncadd [#allocation29], %s624
          %s627 = sshll.u32 [#allocation28], 4
          %s628 = int_to_ptr.vmem [resolvable:$true] %s627
          %630 = dma.hbm_to_vmem [thread:$0]  %s15, 16, %s628, [#allocation29]
        $region72: #{music_transformer_forward.3} parent=11 // pred_fallthru
          _
        // Predicated region
        $region73: #{music_transformer_forward.3} parent=11 // pred_check
          %p631 = pneg %p411
        $region74: #{music_transformer_forward.3} parent=11 // pred_check_branch
          %633 = sbr.rel (%p631) target = $region76
        $region75: #{music_transformer_forward.3} parent=11 // pred_region
          %s635 = ssub.s32 16, 16
          %636 = vsyncadd [#allocation29], %s635
          %s638 = sshll.u32 [#allocation30], 4
          %s639 = int_to_ptr.vmem [resolvable:$true] %s638
          %641 = dma.hbm_to_vmem [thread:$0]  %s16, 16, %s639, [#allocation29]
        $region76: #{music_transformer_forward.3} parent=11 // pred_fallthru
          _
      $region12: #{music_transformer_forward.3} parent=5 // pred_fallthru
        _
      %p642 = scmp.lt.s32.totalorder %s37, 2
      // Predicated region
      $region77: #{music_transformer_forward.3} parent=5 // pred_check
        %p643 = pneg %p642
      $region78: #{music_transformer_forward.3} parent=5 // pred_check_branch
        %645 = sbr.rel (%p643) target = $region80
      $region79: #{music_transformer_forward.3} parent=5 // pred_region
        // Predicated region
        $region81: #{music_transformer_forward.3} parent=79 // pred_check
          %p646 = pneg %p69
        $region82: #{music_transformer_forward.3} parent=79 // pred_check_branch
          %648 = sbr.rel (%p646) target = $region84
        $region83: #{music_transformer_forward.3} parent=79 // pred_region
          %s649 = sand.u32 %s59, 1
          %s650 = scalar_lea.sflag [#allocation5], %s649
          %s651 = sand.u32 %s59, 1
          %s652 = smul.addr %s651, 8
          %s653 = scalar_lea.vmem [#allocation4], %s652
          %s655 = ssub.s32 128, 128
          %656 = vsyncadd %s650, %s655
          %s657 = smul.addr %s44, 128
          %s658 = scalar_lea.hbm %s0, %s657
          %s660 = sshll.u32 %s653, 4
          %s661 = int_to_ptr.vmem [resolvable:$true] %s660
          %663 = dma.hbm_to_vmem [thread:$0]  %s658, 128, %s661, %s650
        $region84: #{music_transformer_forward.3} parent=79 // pred_fallthru
          _
      $region80: #{music_transformer_forward.3} parent=5 // pred_fallthru
        _
      %p664 = scmp.le.s32.totalorder 1, %s37
      %p665 = scmp.lt.s32.totalorder %s37, 3
      %p666 = pnand %p664, %p665
      %p667 = pneg %p666
      // Predicated region
      $region85: #{music_transformer_forward.3} parent=5 // pred_check
        _
      $region86: #{music_transformer_forward.3} parent=5 // pred_check_branch
        %669 = sbr.rel (%p666) target = $region88
      $region87: #{music_transformer_forward.3} parent=5 // pred_region
        %s670 = ssub.s32 %s37, 1
        %s671 = sand.u32 %s62, 1
        %s672 = scalar_lea.sflag [#allocation5], %s671
        %s673 = sand.u32 %s62, 1
        %s674 = smul.addr %s673, 8
        %s675 = scalar_lea.vmem [#allocation4], %s674
        // Predicated region
        $region89: #{music_transformer_forward.3} parent=87 // pred_check
          %p676 = pneg %p75
        $region90: #{music_transformer_forward.3} parent=87 // pred_check_branch
          %678 = sbr.rel (%p676) target = $region92
        $region91: #{music_transformer_forward.3} parent=87 // pred_region
          %679 = dma.done %s672, 128
        $region92: #{music_transformer_forward.3} parent=87 // pred_fallthru
          _
        // Predicated region
        $region93: #{music_transformer_forward.3} parent=87 // pred_check
          %p680 = pneg %p96
        $region94: #{music_transformer_forward.3} parent=87 // pred_check_branch
          %682 = sbr.rel (%p680) target = $region96
        $region95: #{music_transformer_forward.3} parent=87 // pred_region
          %683 = dma.done [#allocation8], 8192
        $region96: #{music_transformer_forward.3} parent=87 // pred_fallthru
          _
        // Predicated region
        $region97: #{music_transformer_forward.3} parent=87 // pred_check
          %p684 = pneg %p117
        $region98: #{music_transformer_forward.3} parent=87 // pred_check_branch
          %686 = sbr.rel (%p684) target = $region100
        $region99: #{music_transformer_forward.3} parent=87 // pred_region
          %687 = dma.done [#allocation8], 8192
        $region100: #{music_transformer_forward.3} parent=87 // pred_fallthru
          _
        // Predicated region
        $region101: #{music_transformer_forward.3} parent=87 // pred_check
          %p688 = pneg %p138
        $region102: #{music_transformer_forward.3} parent=87 // pred_check_branch
          %690 = sbr.rel (%p688) target = $region104
        $region103: #{music_transformer_forward.3} parent=87 // pred_region
          %691 = dma.done [#allocation11], 8192
        $region104: #{music_transformer_forward.3} parent=87 // pred_fallthru
          _
        // Predicated region
        $region105: #{music_transformer_forward.3} parent=87 // pred_check
          %p692 = pneg %p159
        $region106: #{music_transformer_forward.3} parent=87 // pred_check_branch
          %694 = sbr.rel (%p692) target = $region108
        $region107: #{music_transformer_forward.3} parent=87 // pred_region
          %695 = dma.done [#allocation11], 64
        $region108: #{music_transformer_forward.3} parent=87 // pred_fallthru
          _
        // Predicated region
        $region109: #{music_transformer_forward.3} parent=87 // pred_check
          %p696 = pneg %p180
        $region110: #{music_transformer_forward.3} parent=87 // pred_check_branch
          %698 = sbr.rel (%p696) target = $region112
        $region111: #{music_transformer_forward.3} parent=87 // pred_region
          %699 = dma.done [#allocation14], 64
        $region112: #{music_transformer_forward.3} parent=87 // pred_fallthru
          _
        // Predicated region
        $region113: #{music_transformer_forward.3} parent=87 // pred_check
          %p700 = pneg %p201
        $region114: #{music_transformer_forward.3} parent=87 // pred_check_branch
          %702 = sbr.rel (%p700) target = $region116
        $region115: #{music_transformer_forward.3} parent=87 // pred_region
          %703 = dma.done [#allocation14], 64
        $region116: #{music_transformer_forward.3} parent=87 // pred_fallthru
          _
        // Predicated region
        $region117: #{music_transformer_forward.3} parent=87 // pred_check
          %p704 = pneg %p222
        $region118: #{music_transformer_forward.3} parent=87 // pred_check_branch
          %706 = sbr.rel (%p704) target = $region120
        $region119: #{music_transformer_forward.3} parent=87 // pred_region
          %707 = dma.done [#allocation17], 8192
        $region120: #{music_transformer_forward.3} parent=87 // pred_fallthru
          _
        // Predicated region
        $region121: #{music_transformer_forward.3} parent=87 // pred_check
          %p708 = pneg %p243
        $region122: #{music_transformer_forward.3} parent=87 // pred_check_branch
          %710 = sbr.rel (%p708) target = $region124
        $region123: #{music_transformer_forward.3} parent=87 // pred_region
          %711 = dma.done [#allocation17], 16
        $region124: #{music_transformer_forward.3} parent=87 // pred_fallthru
          _
        // Predicated region
        $region125: #{music_transformer_forward.3} parent=87 // pred_check
          %p712 = pneg %p264
        $region126: #{music_transformer_forward.3} parent=87 // pred_check_branch
          %714 = sbr.rel (%p712) target = $region128
        $region127: #{music_transformer_forward.3} parent=87 // pred_region
          %715 = dma.done [#allocation20], 16
        $region128: #{music_transformer_forward.3} parent=87 // pred_fallthru
          _
        // Predicated region
        $region129: #{music_transformer_forward.3} parent=87 // pred_check
          %p716 = pneg %p285
        $region130: #{music_transformer_forward.3} parent=87 // pred_check_branch
          %718 = sbr.rel (%p716) target = $region132
        $region131: #{music_transformer_forward.3} parent=87 // pred_region
          %719 = dma.done [#allocation20], 16
        $region132: #{music_transformer_forward.3} parent=87 // pred_fallthru
          _
        // Predicated region
        $region133: #{music_transformer_forward.3} parent=87 // pred_check
          %p720 = pneg %p306
        $region134: #{music_transformer_forward.3} parent=87 // pred_check_branch
          %722 = sbr.rel (%p720) target = $region136
        $region135: #{music_transformer_forward.3} parent=87 // pred_region
          %723 = dma.done [#allocation23], 32768
        $region136: #{music_transformer_forward.3} parent=87 // pred_fallthru
          _
        // Predicated region
        $region137: #{music_transformer_forward.3} parent=87 // pred_check
          %p724 = pneg %p327
        $region138: #{music_transformer_forward.3} parent=87 // pred_check_branch
          %726 = sbr.rel (%p724) target = $region140
        $region139: #{music_transformer_forward.3} parent=87 // pred_region
          %727 = dma.done [#allocation23], 256
        $region140: #{music_transformer_forward.3} parent=87 // pred_fallthru
          _
        // Predicated region
        $region141: #{music_transformer_forward.3} parent=87 // pred_check
          %p728 = pneg %p348
        $region142: #{music_transformer_forward.3} parent=87 // pred_check_branch
          %730 = sbr.rel (%p728) target = $region144
        $region143: #{music_transformer_forward.3} parent=87 // pred_region
          %731 = dma.done [#allocation26], 32768
        $region144: #{music_transformer_forward.3} parent=87 // pred_fallthru
          _
        // Predicated region
        $region145: #{music_transformer_forward.3} parent=87 // pred_check
          %p732 = pneg %p369
        $region146: #{music_transformer_forward.3} parent=87 // pred_check_branch
          %734 = sbr.rel (%p732) target = $region148
        $region147: #{music_transformer_forward.3} parent=87 // pred_region
          %735 = dma.done [#allocation26], 16
        $region148: #{music_transformer_forward.3} parent=87 // pred_fallthru
          _
        // Predicated region
        $region149: #{music_transformer_forward.3} parent=87 // pred_check
          %p736 = pneg %p390
        $region150: #{music_transformer_forward.3} parent=87 // pred_check_branch
          %738 = sbr.rel (%p736) target = $region152
        $region151: #{music_transformer_forward.3} parent=87 // pred_region
          %739 = dma.done [#allocation29], 16
        $region152: #{music_transformer_forward.3} parent=87 // pred_fallthru
          _
        // Predicated region
        $region153: #{music_transformer_forward.3} parent=87 // pred_check
          %p740 = pneg %p411
        $region154: #{music_transformer_forward.3} parent=87 // pred_check_branch
          %742 = sbr.rel (%p740) target = $region156
        $region155: #{music_transformer_forward.3} parent=87 // pred_region
          %743 = dma.done [#allocation29], 16
        $region156: #{music_transformer_forward.3} parent=87 // pred_fallthru
          _
        %s744 = sand.u32 %s62, 1
        %s745 = scalar_lea.sflag [#allocation5], %s744
        %s746 = sand.u32 %s62, 1
        %s747 = smul.addr %s746, 8
        %s748 = scalar_lea.vmem [#allocation4], %s747
        %p749 = pneg %p75
        %p750 = pneg %p72
        %p751 = pneg %p96
        %p752 = pneg %p93
        %p753 = pneg %p117
        %p754 = pneg %p114
        %p755 = pneg %p138
        %p756 = pneg %p135
        %p757 = pneg %p159
        %p758 = pneg %p156
        %p759 = pneg %p180
        %p760 = pneg %p177
        %p761 = pneg %p201
        %p762 = pneg %p198
        %p763 = pneg %p222
        %p764 = pneg %p219
        %p765 = pneg %p243
        %p766 = pneg %p240
        %p767 = pneg %p264
        %p768 = pneg %p261
        %p769 = pneg %p285
        %p770 = pneg %p282
        %p771 = pneg %p306
        %p772 = pneg %p303
        %p773 = pneg %p327
        %p774 = pneg %p324
        %p775 = pneg %p348
        %p776 = pneg %p345
        %p777 = pneg %p369
        %p778 = pneg %p366
        %p779 = pneg %p390
        %p780 = pneg %p387
        %p781 = pneg %p411
        %p782 = pneg %p408
        %p783 = pneg %p439
        %p784 = pneg %p436
        %s785 = sand.u32 %s426, 1
        %s786 = scalar_lea.sflag [#allocation6], %s785
        %s787 = sand.u32 %s426, 1
        %s788 = smul.addr %s787, 8
        %s789 = scalar_lea.vmem [#allocation31], %s788
        %p790 = scmp.eq.s32.totalorder %s47, 0
        // Predicated region
        $region157: #{music_transformer_forward.3} parent=87 // pred_check
          %p791 = pneg %p790
        $region158: #{music_transformer_forward.3} parent=87 // pred_check_branch
          %793 = sbr.rel (%p791) target = $region160
        $region159: #{music_transformer_forward.3} parent=87 // pred_region
          %v794 = vld [vmem:[%s675] sm:$0xff]
          %v795 = vld [vmem:[#allocation9] sm:$0xff]
          %v796 = vld [vmem:[#allocation9 + $0x8] sm:$0xff]
          %v797 = vld [vmem:[#allocation9 + $0x10] sm:$0xff]
          %v798 = vld [vmem:[#allocation9 + $0x18] sm:$0xff]
          %v799 = vld [vmem:[#allocation9 + $0x20] sm:$0xff]
          %v800 = vld [vmem:[#allocation9 + $0x28] sm:$0xff]
          %v801 = vld [vmem:[#allocation9 + $0x30] sm:$0xff]
          %v802 = vld [vmem:[#allocation9 + $0x38] sm:$0xff]
          %v803 = vld [vmem:[#allocation9 + $0x40] sm:$0xff]
          %v804 = vld [vmem:[#allocation9 + $0x48] sm:$0xff]
          %v805 = vld [vmem:[#allocation9 + $0x50] sm:$0xff]
          %v806 = vld [vmem:[#allocation9 + $0x58] sm:$0xff]
          %v807 = vld [vmem:[#allocation9 + $0x60] sm:$0xff]
          %v808 = vld [vmem:[#allocation9 + $0x68] sm:$0xff]
          %v809 = vld [vmem:[#allocation9 + $0x70] sm:$0xff]
          %v810 = vld [vmem:[#allocation9 + $0x78] sm:$0xff]
          %v811 = vld [vmem:[#allocation9 + $0x80] sm:$0xff]
          %v812 = vld [vmem:[#allocation9 + $0x88] sm:$0xff]
          %v813 = vld [vmem:[#allocation9 + $0x90] sm:$0xff]
          %v814 = vld [vmem:[#allocation9 + $0x98] sm:$0xff]
          %v815 = vld [vmem:[#allocation9 + $0xa0] sm:$0xff]
          %v816 = vld [vmem:[#allocation9 + $0xa8] sm:$0xff]
          %v817 = vld [vmem:[#allocation9 + $0xb0] sm:$0xff]
          %v818 = vld [vmem:[#allocation9 + $0xb8] sm:$0xff]
          %v819 = vld [vmem:[#allocation9 + $0xc0] sm:$0xff]
          %v820 = vld [vmem:[#allocation9 + $0xc8] sm:$0xff]
          %v821 = vld [vmem:[#allocation9 + $0xd0] sm:$0xff]
          %v822 = vld [vmem:[#allocation9 + $0xd8] sm:$0xff]
          %v823 = vld [vmem:[#allocation9 + $0xe0] sm:$0xff]
          %v824 = vld [vmem:[#allocation9 + $0xe8] sm:$0xff]
          %v825 = vld [vmem:[#allocation9 + $0xf0] sm:$0xff]
          %v826 = vld [vmem:[#allocation9 + $0xf8] sm:$0xff]
          %v827 = vld [vmem:[#allocation9 + $0x100] sm:$0xff]
          %v828 = vld [vmem:[#allocation9 + $0x108] sm:$0xff]
          %v829 = vld [vmem:[#allocation9 + $0x110] sm:$0xff]
          %v830 = vld [vmem:[#allocation9 + $0x118] sm:$0xff]
          %v831 = vld [vmem:[#allocation9 + $0x120] sm:$0xff]
          %v832 = vld [vmem:[#allocation9 + $0x128] sm:$0xff]
          %v833 = vld [vmem:[#allocation9 + $0x130] sm:$0xff]
          %v834 = vld [vmem:[#allocation9 + $0x138] sm:$0xff]
          %v835 = vld [vmem:[#allocation9 + $0x140] sm:$0xff]
          %v836 = vld [vmem:[#allocation9 + $0x148] sm:$0xff]
          %v837 = vld [vmem:[#allocation9 + $0x150] sm:$0xff]
          %v838 = vld [vmem:[#allocation9 + $0x158] sm:$0xff]
          %v839 = vld [vmem:[#allocation9 + $0x160] sm:$0xff]
          %v840 = vld [vmem:[#allocation9 + $0x168] sm:$0xff]
          %v841 = vld [vmem:[#allocation9 + $0x170] sm:$0xff]
          %v842 = vld [vmem:[#allocation9 + $0x178] sm:$0xff]
          %v843 = vld [vmem:[#allocation9 + $0x180] sm:$0xff]
          %v844 = vld [vmem:[#allocation9 + $0x188] sm:$0xff]
          %v845 = vld [vmem:[#allocation9 + $0x190] sm:$0xff]
          %v846 = vld [vmem:[#allocation9 + $0x198] sm:$0xff]
          %v847 = vld [vmem:[#allocation9 + $0x1a0] sm:$0xff]
          %v848 = vld [vmem:[#allocation9 + $0x1a8] sm:$0xff]
          %v849 = vld [vmem:[#allocation9 + $0x1b0] sm:$0xff]
          %v850 = vld [vmem:[#allocation9 + $0x1b8] sm:$0xff]
          %v851 = vld [vmem:[#allocation9 + $0x1c0] sm:$0xff]
          %v852 = vld [vmem:[#allocation9 + $0x1c8] sm:$0xff]
          %v853 = vld [vmem:[#allocation9 + $0x1d0] sm:$0xff]
          %v854 = vld [vmem:[#allocation9 + $0x1d8] sm:$0xff]
          %v855 = vld [vmem:[#allocation9 + $0x1e0] sm:$0xff]
          %v856 = vld [vmem:[#allocation9 + $0x1e8] sm:$0xff]
          %v857 = vld [vmem:[#allocation9 + $0x1f0] sm:$0xff]
          %v858 = vld [vmem:[#allocation9 + $0x1f8] sm:$0xff]
          %v859 = vld [vmem:[#allocation13] sm:$0xf]
          %v861 = vlaneseq
          %v862 = vshrl.u32 %v861, 7
          %v863 = vsub.s32 0, %v862
          %v864 = vrot.slane %v859, %v863
          %v865 = vlaneseq
          %v866 = vshrl.u32 %v865, 7
          %v867 = vsub.s32 1, %v866
          %v868 = vrot.slane %v859, %v867
          %v869 = vlaneseq
          %v870 = vshrl.u32 %v869, 7
          %v871 = vsub.s32 2, %v870
          %v872 = vrot.slane %v859, %v871
          %v873 = vlaneseq
          %v874 = vshrl.u32 %v873, 7
          %v875 = vsub.s32 3, %v874
          %v876 = vrot.slane %v859, %v875
          %881 = vmatprep.subr.mxu0 %v796
          %882 = vmatpush1.msra.mxu0 %v795
          %883 = vmatprep.subr.mxu0 %v800
          %884 = vmatpush1.msra.mxu0 %v799
          %885 = vmatprep.subr.mxu0 %v804
          %886 = vmatpush1.msra.mxu0 %v803
          %887 = vmatprep.subr.mxu0 %v808
          %888 = vmatpush1.msra.mxu0 %v807
          %889 = vmatprep.subr.mxu0 %v812
          %890 = vmatpush1.msra.mxu0 %v811
          %891 = vmatprep.subr.mxu0 %v816
          %892 = vmatpush1.msra.mxu0 %v815
          %893 = vmatprep.subr.mxu0 %v820
          %894 = vmatpush1.msra.mxu0 %v819
          %895 = vmatprep.subr.mxu0 %v824
          %896 = vmatpush1.msra.mxu0 %v823
          %897 = vmatprep.subr.mxu0 %v828
          %898 = vmatpush1.msra.mxu0 %v827
          %899 = vmatprep.subr.mxu0 %v832
          %900 = vmatpush1.msra.mxu0 %v831
          %901 = vmatprep.subr.mxu0 %v836
          %902 = vmatpush1.msra.mxu0 %v835
          %903 = vmatprep.subr.mxu0 %v840
          %904 = vmatpush1.msra.mxu0 %v839
          %905 = vmatprep.subr.mxu0 %v844
          %906 = vmatpush1.msra.mxu0 %v843
          %907 = vmatprep.subr.mxu0 %v848
          %908 = vmatpush1.msra.mxu0 %v847
          %909 = vmatprep.subr.mxu0 %v852
          %910 = vmatpush1.msra.mxu0 %v851
          %911 = vmatprep.subr.mxu0 %v856
          %912 = vmatpush1.msra.mxu0 %v855
          %913 = vmatprep.subr.mxu0 0.0
          %914 = vmatpush1.msra.mxu0 0.0
          %915 = vmatprep.subr.mxu0 0.0
          %916 = vmatpush1.msra.mxu0 0.0
          %917 = vmatprep.subr.mxu0 0.0
          %918 = vmatpush1.msra.mxu0 0.0
          %919 = vmatprep.subr.mxu0 0.0
          %920 = vmatpush1.msra.mxu0 0.0
          %921 = vmatprep.subr.mxu0 0.0
          %922 = vmatpush1.msra.mxu0 0.0
          %923 = vmatprep.subr.mxu0 0.0
          %924 = vmatpush1.msra.mxu0 0.0
          %925 = vmatprep.subr.mxu0 0.0
          %926 = vmatpush1.msra.mxu0 0.0
          %927 = vmatprep.subr.mxu0 0.0
          %928 = vmatpush1.msra.mxu0 0.0
          %929 = vmatprep.subr.mxu0 0.0
          %930 = vmatpush1.msra.mxu0 0.0
          %931 = vmatprep.subr.mxu0 0.0
          %932 = vmatpush1.msra.mxu0 0.0
          %933 = vmatprep.subr.mxu0 0.0
          %934 = vmatpush1.msra.mxu0 0.0
          %935 = vmatprep.subr.mxu0 0.0
          %936 = vmatpush1.msra.mxu0 0.0
          %937 = vmatprep.subr.mxu0 0.0
          %938 = vmatpush1.msra.mxu0 0.0
          %939 = vmatprep.subr.mxu0 0.0
          %940 = vmatpush1.msra.mxu0 0.0
          %941 = vmatprep.subr.mxu0 0.0
          %942 = vmatpush1.msra.mxu0 0.0
          %943 = vmatprep.subr.mxu0 0.0
          %944 = vmatpush1.msra.mxu0 0.0
          %945 = vmatprep.mubr.f32.mxu0 0.0
          %946 = vmatmul.mubr.f32.gmra.mrb[0].mxu0 %v794
          %v947 = vpop.f32.mrb[0].mxu0
          %v948 = vadd.f32 %v864, %v947
          %v949 = vpop.f32.mrb[0].mxu0
          %v950 = vadd.f32 %v868, %v949
          %951 = vdwg.mxu0
          %952 = vmatprep.subr.mxu0 %v798
          %953 = vmatpush1.msra.mxu0 %v797
          %954 = vmatprep.subr.mxu0 %v802
          %955 = vmatpush1.msra.mxu0 %v801
          %956 = vmatprep.subr.mxu0 %v806
          %957 = vmatpush1.msra.mxu0 %v805
          %958 = vmatprep.subr.mxu0 %v810
          %959 = vmatpush1.msra.mxu0 %v809
          %960 = vmatprep.subr.mxu0 %v814
          %961 = vmatpush1.msra.mxu0 %v813
          %962 = vmatprep.subr.mxu0 %v818
          %963 = vmatpush1.msra.mxu0 %v817
          %964 = vmatprep.subr.mxu0 %v822
          %965 = vmatpush1.msra.mxu0 %v821
          %966 = vmatprep.subr.mxu0 %v826
          %967 = vmatpush1.msra.mxu0 %v825
          %968 = vmatprep.subr.mxu0 %v830
          %969 = vmatpush1.msra.mxu0 %v829
          %970 = vmatprep.subr.mxu0 %v834
          %971 = vmatpush1.msra.mxu0 %v833
          %972 = vmatprep.subr.mxu0 %v838
          %973 = vmatpush1.msra.mxu0 %v837
          %974 = vmatprep.subr.mxu0 %v842
          %975 = vmatpush1.msra.mxu0 %v841
          %976 = vmatprep.subr.mxu0 %v846
          %977 = vmatpush1.msra.mxu0 %v845
          %978 = vmatprep.subr.mxu0 %v850
          %979 = vmatpush1.msra.mxu0 %v849
          %980 = vmatprep.subr.mxu0 %v854
          %981 = vmatpush1.msra.mxu0 %v853
          %982 = vmatprep.subr.mxu0 %v858
          %983 = vmatpush1.msra.mxu0 %v857
          %984 = vmatprep.subr.mxu0 0.0
          %985 = vmatpush1.msra.mxu0 0.0
          %986 = vmatprep.subr.mxu0 0.0
          %987 = vmatpush1.msra.mxu0 0.0
          %988 = vmatprep.subr.mxu0 0.0
          %989 = vmatpush1.msra.mxu0 0.0
          %990 = vmatprep.subr.mxu0 0.0
          %991 = vmatpush1.msra.mxu0 0.0
          %992 = vmatprep.subr.mxu0 0.0
          %993 = vmatpush1.msra.mxu0 0.0
          %994 = vmatprep.subr.mxu0 0.0
          %995 = vmatpush1.msra.mxu0 0.0
          %996 = vmatprep.subr.mxu0 0.0
          %997 = vmatpush1.msra.mxu0 0.0
          %998 = vmatprep.subr.mxu0 0.0
          %999 = vmatpush1.msra.mxu0 0.0
          %1000 = vmatprep.subr.mxu0 0.0
          %1001 = vmatpush1.msra.mxu0 0.0
          %1002 = vmatprep.subr.mxu0 0.0
          %1003 = vmatpush1.msra.mxu0 0.0
          %1004 = vmatprep.subr.mxu0 0.0
          %1005 = vmatpush1.msra.mxu0 0.0
          %1006 = vmatprep.subr.mxu0 0.0
          %1007 = vmatpush1.msra.mxu0 0.0
          %1008 = vmatprep.subr.mxu0 0.0
          %1009 = vmatpush1.msra.mxu0 0.0
          %1010 = vmatprep.subr.mxu0 0.0
          %1011 = vmatpush1.msra.mxu0 0.0
          %1012 = vmatprep.subr.mxu0 0.0
          %1013 = vmatpush1.msra.mxu0 0.0
          %1014 = vmatprep.subr.mxu0 0.0
          %1015 = vmatpush1.msra.mxu0 0.0
          %1016 = vmatprep.mubr.f32.mxu0 0.0
          %1017 = vmatmul.mubr.f32.gmra.mrb[0].mxu0 %v794
          %v1018 = vpop.f32.mrb[0].mxu0
          %v1019 = vadd.f32 %v872, %v1018
          %v1020 = vpop.f32.mrb[0].mxu0
          %v1021 = vadd.f32 %v876, %v1020
          %1022 = vdwg.mxu0
          %v1023 = vld [vmem:[#allocation10] sm:$0xff]
          %v1024 = vld [vmem:[#allocation10 + $0x8] sm:$0xff]
          %v1025 = vld [vmem:[#allocation10 + $0x10] sm:$0xff]
          %v1026 = vld [vmem:[#allocation10 + $0x18] sm:$0xff]
          %v1027 = vld [vmem:[#allocation10 + $0x20] sm:$0xff]
          %v1028 = vld [vmem:[#allocation10 + $0x28] sm:$0xff]
          %v1029 = vld [vmem:[#allocation10 + $0x30] sm:$0xff]
          %v1030 = vld [vmem:[#allocation10 + $0x38] sm:$0xff]
          %v1031 = vld [vmem:[#allocation10 + $0x40] sm:$0xff]
          %v1032 = vld [vmem:[#allocation10 + $0x48] sm:$0xff]
          %v1033 = vld [vmem:[#allocation10 + $0x50] sm:$0xff]
          %v1034 = vld [vmem:[#allocation10 + $0x58] sm:$0xff]
          %v1035 = vld [vmem:[#allocation10 + $0x60] sm:$0xff]
          %v1036 = vld [vmem:[#allocation10 + $0x68] sm:$0xff]
          %v1037 = vld [vmem:[#allocation10 + $0x70] sm:$0xff]
          %v1038 = vld [vmem:[#allocation10 + $0x78] sm:$0xff]
          %v1039 = vld [vmem:[#allocation10 + $0x80] sm:$0xff]
          %v1040 = vld [vmem:[#allocation10 + $0x88] sm:$0xff]
          %v1041 = vld [vmem:[#allocation10 + $0x90] sm:$0xff]
          %v1042 = vld [vmem:[#allocation10 + $0x98] sm:$0xff]
          %v1043 = vld [vmem:[#allocation10 + $0xa0] sm:$0xff]
          %v1044 = vld [vmem:[#allocation10 + $0xa8] sm:$0xff]
          %v1045 = vld [vmem:[#allocation10 + $0xb0] sm:$0xff]
          %v1046 = vld [vmem:[#allocation10 + $0xb8] sm:$0xff]
          %v1047 = vld [vmem:[#allocation10 + $0xc0] sm:$0xff]
          %v1048 = vld [vmem:[#allocation10 + $0xc8] sm:$0xff]
          %v1049 = vld [vmem:[#allocation10 + $0xd0] sm:$0xff]
          %v1050 = vld [vmem:[#allocation10 + $0xd8] sm:$0xff]
          %v1051 = vld [vmem:[#allocation10 + $0xe0] sm:$0xff]
          %v1052 = vld [vmem:[#allocation10 + $0xe8] sm:$0xff]
          %v1053 = vld [vmem:[#allocation10 + $0xf0] sm:$0xff]
          %v1054 = vld [vmem:[#allocation10 + $0xf8] sm:$0xff]
          %v1055 = vld [vmem:[#allocation10 + $0x100] sm:$0xff]
          %v1056 = vld [vmem:[#allocation10 + $0x108] sm:$0xff]
          %v1057 = vld [vmem:[#allocation10 + $0x110] sm:$0xff]
          %v1058 = vld [vmem:[#allocation10 + $0x118] sm:$0xff]
          %v1059 = vld [vmem:[#allocation10 + $0x120] sm:$0xff]
          %v1060 = vld [vmem:[#allocation10 + $0x128] sm:$0xff]
          %v1061 = vld [vmem:[#allocation10 + $0x130] sm:$0xff]
          %v1062 = vld [vmem:[#allocation10 + $0x138] sm:$0xff]
          %v1063 = vld [vmem:[#allocation10 + $0x140] sm:$0xff]
          %v1064 = vld [vmem:[#allocation10 + $0x148] sm:$0xff]
          %v1065 = vld [vmem:[#allocation10 + $0x150] sm:$0xff]
          %v1066 = vld [vmem:[#allocation10 + $0x158] sm:$0xff]
          %v1067 = vld [vmem:[#allocation10 + $0x160] sm:$0xff]
          %v1068 = vld [vmem:[#allocation10 + $0x168] sm:$0xff]
          %v1069 = vld [vmem:[#allocation10 + $0x170] sm:$0xff]
          %v1070 = vld [vmem:[#allocation10 + $0x178] sm:$0xff]
          %v1071 = vld [vmem:[#allocation10 + $0x180] sm:$0xff]
          %v1072 = vld [vmem:[#allocation10 + $0x188] sm:$0xff]
          %v1073 = vld [vmem:[#allocation10 + $0x190] sm:$0xff]
          %v1074 = vld [vmem:[#allocation10 + $0x198] sm:$0xff]
          %v1075 = vld [vmem:[#allocation10 + $0x1a0] sm:$0xff]
          %v1076 = vld [vmem:[#allocation10 + $0x1a8] sm:$0xff]
          %v1077 = vld [vmem:[#allocation10 + $0x1b0] sm:$0xff]
          %v1078 = vld [vmem:[#allocation10 + $0x1b8] sm:$0xff]
          %v1079 = vld [vmem:[#allocation10 + $0x1c0] sm:$0xff]
          %v1080 = vld [vmem:[#allocation10 + $0x1c8] sm:$0xff]
          %v1081 = vld [vmem:[#allocation10 + $0x1d0] sm:$0xff]
          %v1082 = vld [vmem:[#allocation10 + $0x1d8] sm:$0xff]
          %v1083 = vld [vmem:[#allocation10 + $0x1e0] sm:$0xff]
          %v1084 = vld [vmem:[#allocation10 + $0x1e8] sm:$0xff]
          %v1085 = vld [vmem:[#allocation10 + $0x1f0] sm:$0xff]
          %v1086 = vld [vmem:[#allocation10 + $0x1f8] sm:$0xff]
          %v1087 = vld [vmem:[#allocation15] sm:$0xf]
          %v1089 = vlaneseq
          %v1090 = vshrl.u32 %v1089, 7
          %v1091 = vsub.s32 0, %v1090
          %v1092 = vrot.slane %v1087, %v1091
          %v1093 = vlaneseq
          %v1094 = vshrl.u32 %v1093, 7
          %v1095 = vsub.s32 1, %v1094
          %v1096 = vrot.slane %v1087, %v1095
          %v1097 = vlaneseq
          %v1098 = vshrl.u32 %v1097, 7
          %v1099 = vsub.s32 2, %v1098
          %v1100 = vrot.slane %v1087, %v1099
          %v1101 = vlaneseq
          %v1102 = vshrl.u32 %v1101, 7
          %v1103 = vsub.s32 3, %v1102
          %v1104 = vrot.slane %v1087, %v1103
          %1109 = vmatprep.subr.mxu0 %v1024
          %1110 = vmatpush1.msra.mxu0 %v1023
          %1111 = vmatprep.subr.mxu0 %v1028
          %1112 = vmatpush1.msra.mxu0 %v1027
          %1113 = vmatprep.subr.mxu0 %v1032
          %1114 = vmatpush1.msra.mxu0 %v1031
          %1115 = vmatprep.subr.mxu0 %v1036
          %1116 = vmatpush1.msra.mxu0 %v1035
          %1117 = vmatprep.subr.mxu0 %v1040
          %1118 = vmatpush1.msra.mxu0 %v1039
          %1119 = vmatprep.subr.mxu0 %v1044
          %1120 = vmatpush1.msra.mxu0 %v1043
          %1121 = vmatprep.subr.mxu0 %v1048
          %1122 = vmatpush1.msra.mxu0 %v1047
          %1123 = vmatprep.subr.mxu0 %v1052
          %1124 = vmatpush1.msra.mxu0 %v1051
          %1125 = vmatprep.subr.mxu0 %v1056
          %1126 = vmatpush1.msra.mxu0 %v1055
          %1127 = vmatprep.subr.mxu0 %v1060
          %1128 = vmatpush1.msra.mxu0 %v1059
          %1129 = vmatprep.subr.mxu0 %v1064
          %1130 = vmatpush1.msra.mxu0 %v1063
          %1131 = vmatprep.subr.mxu0 %v1068
          %1132 = vmatpush1.msra.mxu0 %v1067
          %1133 = vmatprep.subr.mxu0 %v1072
          %1134 = vmatpush1.msra.mxu0 %v1071
          %1135 = vmatprep.subr.mxu0 %v1076
          %1136 = vmatpush1.msra.mxu0 %v1075
          %1137 = vmatprep.subr.mxu0 %v1080
          %1138 = vmatpush1.msra.mxu0 %v1079
          %1139 = vmatprep.subr.mxu0 %v1084
          %1140 = vmatpush1.msra.mxu0 %v1083
          %1141 = vmatprep.subr.mxu0 0.0
          %1142 = vmatpush1.msra.mxu0 0.0
          %1143 = vmatprep.subr.mxu0 0.0
          %1144 = vmatpush1.msra.mxu0 0.0
          %1145 = vmatprep.subr.mxu0 0.0
          %1146 = vmatpush1.msra.mxu0 0.0
          %1147 = vmatprep.subr.mxu0 0.0
          %1148 = vmatpush1.msra.mxu0 0.0
          %1149 = vmatprep.subr.mxu0 0.0
          %1150 = vmatpush1.msra.mxu0 0.0
          %1151 = vmatprep.subr.mxu0 0.0
          %1152 = vmatpush1.msra.mxu0 0.0
          %1153 = vmatprep.subr.mxu0 0.0
          %1154 = vmatpush1.msra.mxu0 0.0
          %1155 = vmatprep.subr.mxu0 0.0
          %1156 = vmatpush1.msra.mxu0 0.0
          %1157 = vmatprep.subr.mxu0 0.0
          %1158 = vmatpush1.msra.mxu0 0.0
          %1159 = vmatprep.subr.mxu0 0.0
          %1160 = vmatpush1.msra.mxu0 0.0
          %1161 = vmatprep.subr.mxu0 0.0
          %1162 = vmatpush1.msra.mxu0 0.0
          %1163 = vmatprep.subr.mxu0 0.0
          %1164 = vmatpush1.msra.mxu0 0.0
          %1165 = vmatprep.subr.mxu0 0.0
          %1166 = vmatpush1.msra.mxu0 0.0
          %1167 = vmatprep.subr.mxu0 0.0
          %1168 = vmatpush1.msra.mxu0 0.0
          %1169 = vmatprep.subr.mxu0 0.0
          %1170 = vmatpush1.msra.mxu0 0.0
          %1171 = vmatprep.subr.mxu0 0.0
          %1172 = vmatpush1.msra.mxu0 0.0
          %1173 = vmatprep.mubr.f32.mxu0 0.0
          %1174 = vmatmul.mubr.f32.gmra.mrb[0].mxu0 %v794
          %v1175 = vpop.f32.mrb[0].mxu0
          %v1176 = vadd.f32 %v1092, %v1175
          %v1177 = vpop.f32.mrb[0].mxu0
          %v1178 = vadd.f32 %v1096, %v1177
          %1179 = vdwg.mxu0
          %1180 = vmatprep.subr.mxu0 %v1026
          %1181 = vmatpush1.msra.mxu0 %v1025
          %1182 = vmatprep.subr.mxu0 %v1030
          %1183 = vmatpush1.msra.mxu0 %v1029
          %1184 = vmatprep.subr.mxu0 %v1034
          %1185 = vmatpush1.msra.mxu0 %v1033
          %1186 = vmatprep.subr.mxu0 %v1038
          %1187 = vmatpush1.msra.mxu0 %v1037
          %1188 = vmatprep.subr.mxu0 %v1042
          %1189 = vmatpush1.msra.mxu0 %v1041
          %1190 = vmatprep.subr.mxu0 %v1046
          %1191 = vmatpush1.msra.mxu0 %v1045
          %1192 = vmatprep.subr.mxu0 %v1050
          %1193 = vmatpush1.msra.mxu0 %v1049
          %1194 = vmatprep.subr.mxu0 %v1054
          %1195 = vmatpush1.msra.mxu0 %v1053
          %1196 = vmatprep.subr.mxu0 %v1058
          %1197 = vmatpush1.msra.mxu0 %v1057
          %1198 = vmatprep.subr.mxu0 %v1062
          %1199 = vmatpush1.msra.mxu0 %v1061
          %1200 = vmatprep.subr.mxu0 %v1066
          %1201 = vmatpush1.msra.mxu0 %v1065
          %1202 = vmatprep.subr.mxu0 %v1070
          %1203 = vmatpush1.msra.mxu0 %v1069
          %1204 = vmatprep.subr.mxu0 %v1074
          %1205 = vmatpush1.msra.mxu0 %v1073
          %1206 = vmatprep.subr.mxu0 %v1078
          %1207 = vmatpush1.msra.mxu0 %v1077
          %1208 = vmatprep.subr.mxu0 %v1082
          %1209 = vmatpush1.msra.mxu0 %v1081
          %1210 = vmatprep.subr.mxu0 %v1086
          %1211 = vmatpush1.msra.mxu0 %v1085
          %1212 = vmatprep.subr.mxu0 0.0
          %1213 = vmatpush1.msra.mxu0 0.0
          %1214 = vmatprep.subr.mxu0 0.0
          %1215 = vmatpush1.msra.mxu0 0.0
          %1216 = vmatprep.subr.mxu0 0.0
          %1217 = vmatpush1.msra.mxu0 0.0
          %1218 = vmatprep.subr.mxu0 0.0
          %1219 = vmatpush1.msra.mxu0 0.0
          %1220 = vmatprep.subr.mxu0 0.0
          %1221 = vmatpush1.msra.mxu0 0.0
          %1222 = vmatprep.subr.mxu0 0.0
          %1223 = vmatpush1.msra.mxu0 0.0
          %1224 = vmatprep.subr.mxu0 0.0
          %1225 = vmatpush1.msra.mxu0 0.0
          %1226 = vmatprep.subr.mxu0 0.0
          %1227 = vmatpush1.msra.mxu0 0.0
          %1228 = vmatprep.subr.mxu0 0.0
          %1229 = vmatpush1.msra.mxu0 0.0
          %1230 = vmatprep.subr.mxu0 0.0
          %1231 = vmatpush1.msra.mxu0 0.0
          %1232 = vmatprep.subr.mxu0 0.0
          %1233 = vmatpush1.msra.mxu0 0.0
          %1234 = vmatprep.subr.mxu0 0.0
          %1235 = vmatpush1.msra.mxu0 0.0
          %1236 = vmatprep.subr.mxu0 0.0
          %1237 = vmatpush1.msra.mxu0 0.0
          %1238 = vmatprep.subr.mxu0 0.0
          %1239 = vmatpush1.msra.mxu0 0.0
          %1240 = vmatprep.subr.mxu0 0.0
          %1241 = vmatpush1.msra.mxu0 0.0
          %1242 = vmatprep.subr.mxu0 0.0
          %1243 = vmatpush1.msra.mxu0 0.0
          %1244 = vmatprep.mubr.f32.mxu0 0.0
          %1245 = vmatmul.mubr.f32.gmra.mrb[0].mxu0 %v794
          %v1246 = vpop.f32.mrb[0].mxu0
          %v1247 = vadd.f32 %v1100, %v1246
          %v1248 = vpop.f32.mrb[0].mxu0
          %v1249 = vadd.f32 %v1104, %v1248
          %1250 = vdwg.mxu0
          %1251 = vst [vmem:[#allocation2] sm:$0xff] %v948
          %1252 = vst [vmem:[#allocation3] sm:$0xff] %v1176
          %s1253 = scalar_lea.vmem [#allocation2], 8
          %1254 = vst [vmem:[%s1253] sm:$0xff] %v950
          %s1255 = scalar_lea.vmem [#allocation3], 8
          %1256 = vst [vmem:[%s1255] sm:$0xff] %v1178
          %s1257 = scalar_lea.vmem [#allocation2], 16
          %1258 = vst [vmem:[%s1257] sm:$0xff] %v1019
          %s1259 = scalar_lea.vmem [#allocation3], 16
          %1260 = vst [vmem:[%s1259] sm:$0xff] %v1247
          %s1261 = scalar_lea.vmem [#allocation2], 24
          %1262 = vst [vmem:[%s1261] sm:$0xff] %v1021
          %s1263 = scalar_lea.vmem [#allocation3], 24
          %1264 = vst [vmem:[%s1263] sm:$0xff] %v1249
        $region160: #{music_transformer_forward.3} parent=87 // pred_fallthru
          _
        %s1265 = smul.u32 %s47, 8
        %s1266 = scalar_lea.vmem %s675, %s1265 [#allocation4]
        %v1267 = vld [vmem:[%s1266] sm:$0xff]
        %v1268 = vld [vmem:[#allocation7] sm:$0xff]
        %v1269 = vld [vmem:[#allocation7 + $0x8] sm:$0xff]
        %v1270 = vld [vmem:[#allocation7 + $0x10] sm:$0xff]
        %v1271 = vld [vmem:[#allocation7 + $0x18] sm:$0xff]
        %v1272 = vld [vmem:[#allocation7 + $0x20] sm:$0xff]
        %v1273 = vld [vmem:[#allocation7 + $0x28] sm:$0xff]
        %v1274 = vld [vmem:[#allocation7 + $0x30] sm:$0xff]
        %v1275 = vld [vmem:[#allocation7 + $0x38] sm:$0xff]
        %v1276 = vld [vmem:[#allocation7 + $0x40] sm:$0xff]
        %v1277 = vld [vmem:[#allocation7 + $0x48] sm:$0xff]
        %v1278 = vld [vmem:[#allocation7 + $0x50] sm:$0xff]
        %v1279 = vld [vmem:[#allocation7 + $0x58] sm:$0xff]
        %v1280 = vld [vmem:[#allocation7 + $0x60] sm:$0xff]
        %v1281 = vld [vmem:[#allocation7 + $0x68] sm:$0xff]
        %v1282 = vld [vmem:[#allocation7 + $0x70] sm:$0xff]
        %v1283 = vld [vmem:[#allocation7 + $0x78] sm:$0xff]
        %v1284 = vld [vmem:[#allocation7 + $0x80] sm:$0xff]
        %v1285 = vld [vmem:[#allocation7 + $0x88] sm:$0xff]
        %v1286 = vld [vmem:[#allocation7 + $0x90] sm:$0xff]
        %v1287 = vld [vmem:[#allocation7 + $0x98] sm:$0xff]
        %v1288 = vld [vmem:[#allocation7 + $0xa0] sm:$0xff]
        %v1289 = vld [vmem:[#allocation7 + $0xa8] sm:$0xff]
        %v1290 = vld [vmem:[#allocation7 + $0xb0] sm:$0xff]
        %v1291 = vld [vmem:[#allocation7 + $0xb8] sm:$0xff]
        %v1292 = vld [vmem:[#allocation7 + $0xc0] sm:$0xff]
        %v1293 = vld [vmem:[#allocation7 + $0xc8] sm:$0xff]
        %v1294 = vld [vmem:[#allocation7 + $0xd0] sm:$0xff]
        %v1295 = vld [vmem:[#allocation7 + $0xd8] sm:$0xff]
        %v1296 = vld [vmem:[#allocation7 + $0xe0] sm:$0xff]
        %v1297 = vld [vmem:[#allocation7 + $0xe8] sm:$0xff]
        %v1298 = vld [vmem:[#allocation7 + $0xf0] sm:$0xff]
        %v1299 = vld [vmem:[#allocation7 + $0xf8] sm:$0xff]
        %v1300 = vld [vmem:[#allocation7 + $0x100] sm:$0xff]
        %v1301 = vld [vmem:[#allocation7 + $0x108] sm:$0xff]
        %v1302 = vld [vmem:[#allocation7 + $0x110] sm:$0xff]
        %v1303 = vld [vmem:[#allocation7 + $0x118] sm:$0xff]
        %v1304 = vld [vmem:[#allocation7 + $0x120] sm:$0xff]
        %v1305 = vld [vmem:[#allocation7 + $0x128] sm:$0xff]
        %v1306 = vld [vmem:[#allocation7 + $0x130] sm:$0xff]
        %v1307 = vld [vmem:[#allocation7 + $0x138] sm:$0xff]
        %v1308 = vld [vmem:[#allocation7 + $0x140] sm:$0xff]
        %v1309 = vld [vmem:[#allocation7 + $0x148] sm:$0xff]
        %v1310 = vld [vmem:[#allocation7 + $0x150] sm:$0xff]
        %v1311 = vld [vmem:[#allocation7 + $0x158] sm:$0xff]
        %v1312 = vld [vmem:[#allocation7 + $0x160] sm:$0xff]
        %v1313 = vld [vmem:[#allocation7 + $0x168] sm:$0xff]
        %v1314 = vld [vmem:[#allocation7 + $0x170] sm:$0xff]
        %v1315 = vld [vmem:[#allocation7 + $0x178] sm:$0xff]
        %v1316 = vld [vmem:[#allocation7 + $0x180] sm:$0xff]
        %v1317 = vld [vmem:[#allocation7 + $0x188] sm:$0xff]
        %v1318 = vld [vmem:[#allocation7 + $0x190] sm:$0xff]
        %v1319 = vld [vmem:[#allocation7 + $0x198] sm:$0xff]
        %v1320 = vld [vmem:[#allocation7 + $0x1a0] sm:$0xff]
        %v1321 = vld [vmem:[#allocation7 + $0x1a8] sm:$0xff]
        %v1322 = vld [vmem:[#allocation7 + $0x1b0] sm:$0xff]
        %v1323 = vld [vmem:[#allocation7 + $0x1b8] sm:$0xff]
        %v1324 = vld [vmem:[#allocation7 + $0x1c0] sm:$0xff]
        %v1325 = vld [vmem:[#allocation7 + $0x1c8] sm:$0xff]
        %v1326 = vld [vmem:[#allocation7 + $0x1d0] sm:$0xff]
        %v1327 = vld [vmem:[#allocation7 + $0x1d8] sm:$0xff]
        %v1328 = vld [vmem:[#allocation7 + $0x1e0] sm:$0xff]
        %v1329 = vld [vmem:[#allocation7 + $0x1e8] sm:$0xff]
        %v1330 = vld [vmem:[#allocation7 + $0x1f0] sm:$0xff]
        %v1331 = vld [vmem:[#allocation7 + $0x1f8] sm:$0xff]
        %v1332 = vld [vmem:[#allocation12] sm:$0xf]
        %v1334 = vlaneseq
        %v1335 = vshrl.u32 %v1334, 7
        %v1336 = vsub.s32 0, %v1335
        %v1337 = vrot.slane %v1332, %v1336
        %v1338 = vlaneseq
        %v1339 = vshrl.u32 %v1338, 7
        %v1340 = vsub.s32 1, %v1339
        %v1341 = vrot.slane %v1332, %v1340
        %v1342 = vlaneseq
        %v1343 = vshrl.u32 %v1342, 7
        %v1344 = vsub.s32 2, %v1343
        %v1345 = vrot.slane %v1332, %v1344
        %v1346 = vlaneseq
        %v1347 = vshrl.u32 %v1346, 7
        %v1348 = vsub.s32 3, %v1347
        %v1349 = vrot.slane %v1332, %v1348
        %1354 = vmatprep.subr.mxu0 %v1269
        %1355 = vmatpush1.msra.mxu0 %v1268
        %1356 = vmatprep.subr.mxu0 %v1273
        %1357 = vmatpush1.msra.mxu0 %v1272
        %1358 = vmatprep.subr.mxu0 %v1277
        %1359 = vmatpush1.msra.mxu0 %v1276
        %1360 = vmatprep.subr.mxu0 %v1281
        %1361 = vmatpush1.msra.mxu0 %v1280
        %1362 = vmatprep.subr.mxu0 %v1285
        %1363 = vmatpush1.msra.mxu0 %v1284
        %1364 = vmatprep.subr.mxu0 %v1289
        %1365 = vmatpush1.msra.mxu0 %v1288
        %1366 = vmatprep.subr.mxu0 %v1293
        %1367 = vmatpush1.msra.mxu0 %v1292
        %1368 = vmatprep.subr.mxu0 %v1297
        %1369 = vmatpush1.msra.mxu0 %v1296
        %1370 = vmatprep.subr.mxu0 %v1301
        %1371 = vmatpush1.msra.mxu0 %v1300
        %1372 = vmatprep.subr.mxu0 %v1305
        %1373 = vmatpush1.msra.mxu0 %v1304
        %1374 = vmatprep.subr.mxu0 %v1309
        %1375 = vmatpush1.msra.mxu0 %v1308
        %1376 = vmatprep.subr.mxu0 %v1313
        %1377 = vmatpush1.msra.mxu0 %v1312
        %1378 = vmatprep.subr.mxu0 %v1317
        %1379 = vmatpush1.msra.mxu0 %v1316
        %1380 = vmatprep.subr.mxu0 %v1321
        %1381 = vmatpush1.msra.mxu0 %v1320
        %1382 = vmatprep.subr.mxu0 %v1325
        %1383 = vmatpush1.msra.mxu0 %v1324
        %1384 = vmatprep.subr.mxu0 %v1329
        %1385 = vmatpush1.msra.mxu0 %v1328
        %1386 = vmatprep.subr.mxu0 0.0
        %1387 = vmatpush1.msra.mxu0 0.0
        %1388 = vmatprep.subr.mxu0 0.0
        %1389 = vmatpush1.msra.mxu0 0.0
        %1390 = vmatprep.subr.mxu0 0.0
        %1391 = vmatpush1.msra.mxu0 0.0
        %1392 = vmatprep.subr.mxu0 0.0
        %1393 = vmatpush1.msra.mxu0 0.0
        %1394 = vmatprep.subr.mxu0 0.0
        %1395 = vmatpush1.msra.mxu0 0.0
        %1396 = vmatprep.subr.mxu0 0.0
        %1397 = vmatpush1.msra.mxu0 0.0
        %1398 = vmatprep.subr.mxu0 0.0
        %1399 = vmatpush1.msra.mxu0 0.0
        %1400 = vmatprep.subr.mxu0 0.0
        %1401 = vmatpush1.msra.mxu0 0.0
        %1402 = vmatprep.subr.mxu0 0.0
        %1403 = vmatpush1.msra.mxu0 0.0
        %1404 = vmatprep.subr.mxu0 0.0
        %1405 = vmatpush1.msra.mxu0 0.0
        %1406 = vmatprep.subr.mxu0 0.0
        %1407 = vmatpush1.msra.mxu0 0.0
        %1408 = vmatprep.subr.mxu0 0.0
        %1409 = vmatpush1.msra.mxu0 0.0
        %1410 = vmatprep.subr.mxu0 0.0
        %1411 = vmatpush1.msra.mxu0 0.0
        %1412 = vmatprep.subr.mxu0 0.0
        %1413 = vmatpush1.msra.mxu0 0.0
        %1414 = vmatprep.subr.mxu0 0.0
        %1415 = vmatpush1.msra.mxu0 0.0
        %1416 = vmatprep.subr.mxu0 0.0
        %1417 = vmatpush1.msra.mxu0 0.0
        %1418 = vmatprep.mubr.f32.mxu0 0.0
        %1419 = vmatmul.mubr.f32.gmra.mrb[0].mxu0 %v1267
        %v1420 = vpop.f32.mrb[0].mxu0
        %v1421 = vadd.f32 %v1337, %v1420
        %v1422 = vpop.f32.mrb[0].mxu0
        %v1423 = vadd.f32 %v1341, %v1422
        %1424 = vdwg.mxu0
        %1425 = vmatprep.subr.mxu0 %v1271
        %1426 = vmatpush1.msra.mxu0 %v1270
        %1427 = vmatprep.subr.mxu0 %v1275
        %1428 = vmatpush1.msra.mxu0 %v1274
        %1429 = vmatprep.subr.mxu0 %v1279
        %1430 = vmatpush1.msra.mxu0 %v1278
        %1431 = vmatprep.subr.mxu0 %v1283
        %1432 = vmatpush1.msra.mxu0 %v1282
        %1433 = vmatprep.subr.mxu0 %v1287
        %1434 = vmatpush1.msra.mxu0 %v1286
        %1435 = vmatprep.subr.mxu0 %v1291
        %1436 = vmatpush1.msra.mxu0 %v1290
        %1437 = vmatprep.subr.mxu0 %v1295
        %1438 = vmatpush1.msra.mxu0 %v1294
        %1439 = vmatprep.subr.mxu0 %v1299
        %1440 = vmatpush1.msra.mxu0 %v1298
        %1441 = vmatprep.subr.mxu0 %v1303
        %1442 = vmatpush1.msra.mxu0 %v1302
        %1443 = vmatprep.subr.mxu0 %v1307
        %1444 = vmatpush1.msra.mxu0 %v1306
        %1445 = vmatprep.subr.mxu0 %v1311
        %1446 = vmatpush1.msra.mxu0 %v1310
        %1447 = vmatprep.subr.mxu0 %v1315
        %1448 = vmatpush1.msra.mxu0 %v1314
        %1449 = vmatprep.subr.mxu0 %v1319
        %1450 = vmatpush1.msra.mxu0 %v1318
        %1451 = vmatprep.subr.mxu0 %v1323
        %1452 = vmatpush1.msra.mxu0 %v1322
        %1453 = vmatprep.subr.mxu0 %v1327
        %1454 = vmatpush1.msra.mxu0 %v1326
        %1455 = vmatprep.subr.mxu0 %v1331
        %1456 = vmatpush1.msra.mxu0 %v1330
        %1457 = vmatprep.subr.mxu0 0.0
        %1458 = vmatpush1.msra.mxu0 0.0
        %1459 = vmatprep.subr.mxu0 0.0
        %1460 = vmatpush1.msra.mxu0 0.0
        %1461 = vmatprep.subr.mxu0 0.0
        %1462 = vmatpush1.msra.mxu0 0.0
        %1463 = vmatprep.subr.mxu0 0.0
        %1464 = vmatpush1.msra.mxu0 0.0
        %1465 = vmatprep.subr.mxu0 0.0
        %1466 = vmatpush1.msra.mxu0 0.0
        %1467 = vmatprep.subr.mxu0 0.0
        %1468 = vmatpush1.msra.mxu0 0.0
        %1469 = vmatprep.subr.mxu0 0.0
        %1470 = vmatpush1.msra.mxu0 0.0
        %1471 = vmatprep.subr.mxu0 0.0
        %1472 = vmatpush1.msra.mxu0 0.0
        %1473 = vmatprep.subr.mxu0 0.0
        %1474 = vmatpush1.msra.mxu0 0.0
        %1475 = vmatprep.subr.mxu0 0.0
        %1476 = vmatpush1.msra.mxu0 0.0
        %1477 = vmatprep.subr.mxu0 0.0
        %1478 = vmatpush1.msra.mxu0 0.0
        %1479 = vmatprep.subr.mxu0 0.0
        %1480 = vmatpush1.msra.mxu0 0.0
        %1481 = vmatprep.subr.mxu0 0.0
        %1482 = vmatpush1.msra.mxu0 0.0
        %1483 = vmatprep.subr.mxu0 0.0
        %1484 = vmatpush1.msra.mxu0 0.0
        %1485 = vmatprep.subr.mxu0 0.0
        %1486 = vmatpush1.msra.mxu0 0.0
        %1487 = vmatprep.subr.mxu0 0.0
        %1488 = vmatpush1.msra.mxu0 0.0
        %1489 = vmatprep.mubr.f32.mxu0 0.0
        %1490 = vmatmul.mubr.f32.gmra.mrb[0].mxu0 %v1267
        %v1491 = vpop.f32.mrb[0].mxu0
        %v1492 = vadd.f32 %v1345, %v1491
        %v1493 = vpop.f32.mrb[0].mxu0
        %v1494 = vadd.f32 %v1349, %v1493
        %1495 = vdwg.mxu0
        %v1496 = vld [vmem:[#allocation2] sm:$0xff]
        %v1497 = vld [vmem:[#allocation2 + $0x8] sm:$0xff]
        %v1498 = vld [vmem:[#allocation2 + $0x10] sm:$0xff]
        %v1499 = vld [vmem:[#allocation2 + $0x18] sm:$0xff]
        %1500 = vmatprep.subr.mxu0 0.0
        %1501 = vmatpush1.xpose.msra.mxu0 %v1496
        %1502 = vmatprep.subr.mxu0 0.0
        %1503 = vmatpush1.xpose.msra.mxu0 0.0
        %1504 = vmatprep.subr.mxu0 0.0
        %1505 = vmatpush1.xpose.msra.mxu0 0.0
        %1506 = vmatprep.subr.mxu0 0.0
        %1507 = vmatpush1.xpose.msra.mxu0 0.0
        %1508 = vmatprep.subr.mxu0 0.0
        %1509 = vmatpush1.xpose.msra.mxu0 0.0
        %1510 = vmatprep.subr.mxu0 0.0
        %1511 = vmatpush1.xpose.msra.mxu0 0.0
        %1512 = vmatprep.subr.mxu0 0.0
        %1513 = vmatpush1.xpose.msra.mxu0 0.0
        %1514 = vmatprep.subr.mxu0 0.0
        %1515 = vmatpush1.xpose.msra.mxu0 0.0
        %1516 = vmatprep.subr.mxu0 0.0
        %1517 = vmatpush1.xpose.msra.mxu0 0.0
        %1518 = vmatprep.subr.mxu0 0.0
        %1519 = vmatpush1.xpose.msra.mxu0 0.0
        %1520 = vmatprep.subr.mxu0 0.0
        %1521 = vmatpush1.xpose.msra.mxu0 0.0
        %1522 = vmatprep.subr.mxu0 0.0
        %1523 = vmatpush1.xpose.msra.mxu0 0.0
        %1524 = vmatprep.subr.mxu0 0.0
        %1525 = vmatpush1.xpose.msra.mxu0 0.0
        %1526 = vmatprep.subr.mxu0 0.0
        %1527 = vmatpush1.xpose.msra.mxu0 0.0
        %1528 = vmatprep.subr.mxu0 0.0
        %1529 = vmatpush1.xpose.msra.mxu0 0.0
        %1530 = vmatprep.subr.mxu0 0.0
        %1531 = vmatpush1.xpose.msra.mxu0 0.0
        %1532 = vmatprep.subr.mxu0 0.0
        %1533 = vmatpush1.xpose.msra.mxu0 0.0
        %1534 = vmatprep.subr.mxu0 0.0
        %1535 = vmatpush1.xpose.msra.mxu0 0.0
        %1536 = vmatprep.subr.mxu0 0.0
        %1537 = vmatpush1.xpose.msra.mxu0 0.0
        %1538 = vmatprep.subr.mxu0 0.0
        %1539 = vmatpush1.xpose.msra.mxu0 0.0
        %1540 = vmatprep.subr.mxu0 0.0
        %1541 = vmatpush1.xpose.msra.mxu0 0.0
        %1542 = vmatprep.subr.mxu0 0.0
        %1543 = vmatpush1.xpose.msra.mxu0 0.0
        %1544 = vmatprep.subr.mxu0 0.0
        %1545 = vmatpush1.xpose.msra.mxu0 0.0
        %1546 = vmatprep.subr.mxu0 0.0
        %1547 = vmatpush1.xpose.msra.mxu0 0.0
        %1548 = vmatprep.subr.mxu0 0.0
        %1549 = vmatpush1.xpose.msra.mxu0 0.0
        %1550 = vmatprep.subr.mxu0 0.0
        %1551 = vmatpush1.xpose.msra.mxu0 0.0
        %1552 = vmatprep.subr.mxu0 0.0
        %1553 = vmatpush1.xpose.msra.mxu0 0.0
        %1554 = vmatprep.subr.mxu0 0.0
        %1555 = vmatpush1.xpose.msra.mxu0 0.0
        %1556 = vmatprep.subr.mxu0 0.0
        %1557 = vmatpush1.xpose.msra.mxu0 0.0
        %1558 = vmatprep.subr.mxu0 0.0
        %1559 = vmatpush1.xpose.msra.mxu0 0.0
        %1560 = vmatprep.subr.mxu0 0.0
        %1561 = vmatpush1.xpose.msra.mxu0 0.0
        %1562 = vmatprep.subr.mxu0 0.0
        %1563 = vmatpush1.xpose.msra.mxu0 0.0
        %1564 = vmatprep.mubr.f32.mxu0 0.0
        %1565 = vmatmul.mubr.f32.gmra.mrb[0].mxu0 %v1421
        %v1566 = vpop.f32.mrb[0].mxu0
        %v1567 = vadd.f32 0.0, %v1566
        %v1568 = vpop.f32.mrb[0].mxu0
        %1569 = vdwg.mxu0
        %1570 = vmatprep.subr.mxu0 0.0
        %1571 = vmatpush1.xpose.msra.mxu0 %v1497
        %1572 = vmatprep.subr.mxu0 0.0
        %1573 = vmatpush1.xpose.msra.mxu0 0.0
        %1574 = vmatprep.subr.mxu0 0.0
        %1575 = vmatpush1.xpose.msra.mxu0 0.0
        %1576 = vmatprep.subr.mxu0 0.0
        %1577 = vmatpush1.xpose.msra.mxu0 0.0
        %1578 = vmatprep.subr.mxu0 0.0
        %1579 = vmatpush1.xpose.msra.mxu0 0.0
        %1580 = vmatprep.subr.mxu0 0.0
        %1581 = vmatpush1.xpose.msra.mxu0 0.0
        %1582 = vmatprep.subr.mxu0 0.0
        %1583 = vmatpush1.xpose.msra.mxu0 0.0
        %1584 = vmatprep.subr.mxu0 0.0
        %1585 = vmatpush1.xpose.msra.mxu0 0.0
        %1586 = vmatprep.subr.mxu0 0.0
        %1587 = vmatpush1.xpose.msra.mxu0 0.0
        %1588 = vmatprep.subr.mxu0 0.0
        %1589 = vmatpush1.xpose.msra.mxu0 0.0
        %1590 = vmatprep.subr.mxu0 0.0
        %1591 = vmatpush1.xpose.msra.mxu0 0.0
        %1592 = vmatprep.subr.mxu0 0.0
        %1593 = vmatpush1.xpose.msra.mxu0 0.0
        %1594 = vmatprep.subr.mxu0 0.0
        %1595 = vmatpush1.xpose.msra.mxu0 0.0
        %1596 = vmatprep.subr.mxu0 0.0
        %1597 = vmatpush1.xpose.msra.mxu0 0.0
        %1598 = vmatprep.subr.mxu0 0.0
        %1599 = vmatpush1.xpose.msra.mxu0 0.0
        %1600 = vmatprep.subr.mxu0 0.0
        %1601 = vmatpush1.xpose.msra.mxu0 0.0
        %1602 = vmatprep.subr.mxu0 0.0
        %1603 = vmatpush1.xpose.msra.mxu0 0.0
        %1604 = vmatprep.subr.mxu0 0.0
        %1605 = vmatpush1.xpose.msra.mxu0 0.0
        %1606 = vmatprep.subr.mxu0 0.0
        %1607 = vmatpush1.xpose.msra.mxu0 0.0
        %1608 = vmatprep.subr.mxu0 0.0
        %1609 = vmatpush1.xpose.msra.mxu0 0.0
        %1610 = vmatprep.subr.mxu0 0.0
        %1611 = vmatpush1.xpose.msra.mxu0 0.0
        %1612 = vmatprep.subr.mxu0 0.0
        %1613 = vmatpush1.xpose.msra.mxu0 0.0
        %1614 = vmatprep.subr.mxu0 0.0
        %1615 = vmatpush1.xpose.msra.mxu0 0.0
        %1616 = vmatprep.subr.mxu0 0.0
        %1617 = vmatpush1.xpose.msra.mxu0 0.0
        %1618 = vmatprep.subr.mxu0 0.0
        %1619 = vmatpush1.xpose.msra.mxu0 0.0
        %1620 = vmatprep.subr.mxu0 0.0
        %1621 = vmatpush1.xpose.msra.mxu0 0.0
        %1622 = vmatprep.subr.mxu0 0.0
        %1623 = vmatpush1.xpose.msra.mxu0 0.0
        %1624 = vmatprep.subr.mxu0 0.0
        %1625 = vmatpush1.xpose.msra.mxu0 0.0
        %1626 = vmatprep.subr.mxu0 0.0
        %1627 = vmatpush1.xpose.msra.mxu0 0.0
        %1628 = vmatprep.subr.mxu0 0.0
        %1629 = vmatpush1.xpose.msra.mxu0 0.0
        %1630 = vmatprep.subr.mxu0 0.0
        %1631 = vmatpush1.xpose.msra.mxu0 0.0
        %1632 = vmatprep.subr.mxu0 0.0
        %1633 = vmatpush1.xpose.msra.mxu0 0.0
        %1634 = vmatprep.mubr.f32.mxu0 0.0
        %1635 = vmatmul.mubr.f32.gmra.mrb[0].mxu0 %v1423
        %v1636 = vpop.f32.mrb[0].mxu0
        %v1637 = vadd.f32 0.0, %v1636
        %v1638 = vpop.f32.mrb[0].mxu0
        %1639 = vdwg.mxu0
        %1640 = vmatprep.subr.mxu0 0.0
        %1641 = vmatpush1.xpose.msra.mxu0 %v1498
        %1642 = vmatprep.subr.mxu0 0.0
        %1643 = vmatpush1.xpose.msra.mxu0 0.0
        %1644 = vmatprep.subr.mxu0 0.0
        %1645 = vmatpush1.xpose.msra.mxu0 0.0
        %1646 = vmatprep.subr.mxu0 0.0
        %1647 = vmatpush1.xpose.msra.mxu0 0.0
        %1648 = vmatprep.subr.mxu0 0.0
        %1649 = vmatpush1.xpose.msra.mxu0 0.0
        %1650 = vmatprep.subr.mxu0 0.0
        %1651 = vmatpush1.xpose.msra.mxu0 0.0
        %1652 = vmatprep.subr.mxu0 0.0
        %1653 = vmatpush1.xpose.msra.mxu0 0.0
        %1654 = vmatprep.subr.mxu0 0.0
        %1655 = vmatpush1.xpose.msra.mxu0 0.0
        %1656 = vmatprep.subr.mxu0 0.0
        %1657 = vmatpush1.xpose.msra.mxu0 0.0
        %1658 = vmatprep.subr.mxu0 0.0
        %1659 = vmatpush1.xpose.msra.mxu0 0.0
        %1660 = vmatprep.subr.mxu0 0.0
        %1661 = vmatpush1.xpose.msra.mxu0 0.0
        %1662 = vmatprep.subr.mxu0 0.0
        %1663 = vmatpush1.xpose.msra.mxu0 0.0
        %1664 = vmatprep.subr.mxu0 0.0
        %1665 = vmatpush1.xpose.msra.mxu0 0.0
        %1666 = vmatprep.subr.mxu0 0.0
        %1667 = vmatpush1.xpose.msra.mxu0 0.0
        %1668 = vmatprep.subr.mxu0 0.0
        %1669 = vmatpush1.xpose.msra.mxu0 0.0
        %1670 = vmatprep.subr.mxu0 0.0
        %1671 = vmatpush1.xpose.msra.mxu0 0.0
        %1672 = vmatprep.subr.mxu0 0.0
        %1673 = vmatpush1.xpose.msra.mxu0 0.0
        %1674 = vmatprep.subr.mxu0 0.0
        %1675 = vmatpush1.xpose.msra.mxu0 0.0
        %1676 = vmatprep.subr.mxu0 0.0
        %1677 = vmatpush1.xpose.msra.mxu0 0.0
        %1678 = vmatprep.subr.mxu0 0.0
        %1679 = vmatpush1.xpose.msra.mxu0 0.0
        %1680 = vmatprep.subr.mxu0 0.0
        %1681 = vmatpush1.xpose.msra.mxu0 0.0
        %1682 = vmatprep.subr.mxu0 0.0
        %1683 = vmatpush1.xpose.msra.mxu0 0.0
        %1684 = vmatprep.subr.mxu0 0.0
        %1685 = vmatpush1.xpose.msra.mxu0 0.0
        %1686 = vmatprep.subr.mxu0 0.0
        %1687 = vmatpush1.xpose.msra.mxu0 0.0
        %1688 = vmatprep.subr.mxu0 0.0
        %1689 = vmatpush1.xpose.msra.mxu0 0.0
        %1690 = vmatprep.subr.mxu0 0.0
        %1691 = vmatpush1.xpose.msra.mxu0 0.0
        %1692 = vmatprep.subr.mxu0 0.0
        %1693 = vmatpush1.xpose.msra.mxu0 0.0
        %1694 = vmatprep.subr.mxu0 0.0
        %1695 = vmatpush1.xpose.msra.mxu0 0.0
        %1696 = vmatprep.subr.mxu0 0.0
        %1697 = vmatpush1.xpose.msra.mxu0 0.0
        %1698 = vmatprep.subr.mxu0 0.0
        %1699 = vmatpush1.xpose.msra.mxu0 0.0
        %1700 = vmatprep.subr.mxu0 0.0
        %1701 = vmatpush1.xpose.msra.mxu0 0.0
        %1702 = vmatprep.subr.mxu0 0.0
        %1703 = vmatpush1.xpose.msra.mxu0 0.0
        %1704 = vmatprep.mubr.f32.mxu0 0.0
        %1705 = vmatmul.mubr.f32.gmra.mrb[0].mxu0 %v1492
        %v1706 = vpop.f32.mrb[0].mxu0
        %v1707 = vadd.f32 0.0, %v1706
        %v1708 = vpop.f32.mrb[0].mxu0
        %1709 = vdwg.mxu0
        %1710 = vmatprep.subr.mxu0 0.0
        %1711 = vmatpush1.xpose.msra.mxu0 %v1499
        %1712 = vmatprep.subr.mxu0 0.0
        %1713 = vmatpush1.xpose.msra.mxu0 0.0
        %1714 = vmatprep.subr.mxu0 0.0
        %1715 = vmatpush1.xpose.msra.mxu0 0.0
        %1716 = vmatprep.subr.mxu0 0.0
        %1717 = vmatpush1.xpose.msra.mxu0 0.0
        %1718 = vmatprep.subr.mxu0 0.0
        %1719 = vmatpush1.xpose.msra.mxu0 0.0
        %1720 = vmatprep.subr.mxu0 0.0
        %1721 = vmatpush1.xpose.msra.mxu0 0.0
        %1722 = vmatprep.subr.mxu0 0.0
        %1723 = vmatpush1.xpose.msra.mxu0 0.0
        %1724 = vmatprep.subr.mxu0 0.0
        %1725 = vmatpush1.xpose.msra.mxu0 0.0
        %1726 = vmatprep.subr.mxu0 0.0
        %1727 = vmatpush1.xpose.msra.mxu0 0.0
        %1728 = vmatprep.subr.mxu0 0.0
        %1729 = vmatpush1.xpose.msra.mxu0 0.0
        %1730 = vmatprep.subr.mxu0 0.0
        %1731 = vmatpush1.xpose.msra.mxu0 0.0
        %1732 = vmatprep.subr.mxu0 0.0
        %1733 = vmatpush1.xpose.msra.mxu0 0.0
        %1734 = vmatprep.subr.mxu0 0.0
        %1735 = vmatpush1.xpose.msra.mxu0 0.0
        %1736 = vmatprep.subr.mxu0 0.0
        %1737 = vmatpush1.xpose.msra.mxu0 0.0
        %1738 = vmatprep.subr.mxu0 0.0
        %1739 = vmatpush1.xpose.msra.mxu0 0.0
        %1740 = vmatprep.subr.mxu0 0.0
        %1741 = vmatpush1.xpose.msra.mxu0 0.0
        %1742 = vmatprep.subr.mxu0 0.0
        %1743 = vmatpush1.xpose.msra.mxu0 0.0
        %1744 = vmatprep.subr.mxu0 0.0
        %1745 = vmatpush1.xpose.msra.mxu0 0.0
        %1746 = vmatprep.subr.mxu0 0.0
        %1747 = vmatpush1.xpose.msra.mxu0 0.0
        %1748 = vmatprep.subr.mxu0 0.0
        %1749 = vmatpush1.xpose.msra.mxu0 0.0
        %1750 = vmatprep.subr.mxu0 0.0
        %1751 = vmatpush1.xpose.msra.mxu0 0.0
        %1752 = vmatprep.subr.mxu0 0.0
        %1753 = vmatpush1.xpose.msra.mxu0 0.0
        %1754 = vmatprep.subr.mxu0 0.0
        %1755 = vmatpush1.xpose.msra.mxu0 0.0
        %1756 = vmatprep.subr.mxu0 0.0
        %1757 = vmatpush1.xpose.msra.mxu0 0.0
        %1758 = vmatprep.subr.mxu0 0.0
        %1759 = vmatpush1.xpose.msra.mxu0 0.0
        %1760 = vmatprep.subr.mxu0 0.0
        %1761 = vmatpush1.xpose.msra.mxu0 0.0
        %1762 = vmatprep.subr.mxu0 0.0
        %1763 = vmatpush1.xpose.msra.mxu0 0.0
        %1764 = vmatprep.subr.mxu0 0.0
        %1765 = vmatpush1.xpose.msra.mxu0 0.0
        %1766 = vmatprep.subr.mxu0 0.0
        %1767 = vmatpush1.xpose.msra.mxu0 0.0
        %1768 = vmatprep.subr.mxu0 0.0
        %1769 = vmatpush1.xpose.msra.mxu0 0.0
        %1770 = vmatprep.subr.mxu0 0.0
        %1771 = vmatpush1.xpose.msra.mxu0 0.0
        %1772 = vmatprep.subr.mxu0 0.0
        %1773 = vmatpush1.xpose.msra.mxu0 0.0
        %1774 = vmatprep.mubr.f32.mxu0 0.0
        %1775 = vmatmul.mubr.f32.gmra.mrb[0].mxu0 %v1494
        %v1776 = vpop.f32.mrb[0].mxu0
        %v1777 = vadd.f32 0.0, %v1776
        %v1778 = vpop.f32.mrb[0].mxu0
        %1779 = vdwg.mxu0
        %vm1780 = vcmask 64512
        %v1781 = vsel %vm1780, %v1567, -inf
        %1782 = vmax.xlane.f32.xlu0 %v1781
        %v1783 = vpop.xlane.xlu0 %1782
        %v1784 = vsel %vm1780, %v1637, -inf
        %1785 = vmax.xlane.f32.xlu0 %v1784
        %v1786 = vpop.xlane.xlu0 %1785
        %v1787 = vsel %vm1780, %v1707, -inf
        %1788 = vmax.xlane.f32.xlu0 %v1787
        %v1789 = vpop.xlane.xlu0 %1788
        %v1790 = vsel %vm1780, %v1777, -inf
        %1791 = vmax.xlane.f32.xlu0 %v1790
        %v1792 = vpop.xlane.xlu0 %1791
        %v1793 = vsub.f32 %v1567, %v1783
        %v1794 = vsub.f32 %v1637, %v1786
        %v1795 = vsub.f32 %v1707, %v1789
        %v1796 = vsub.f32 %v1777, %v1792
        %v1797 = vmul.f32 %v1793, 1.442695
        %v1798 = vpow.pop %v1797
        %v1799 = vmul.f32 %v1794, 1.442695
        %v1800 = vpow.pop %v1799
        %v1801 = vmul.f32 %v1795, 1.442695
        %v1802 = vpow.pop %v1801
        %v1803 = vmul.f32 %v1796, 1.442695
        %v1804 = vpow.pop %v1803
        %v1805 = vsel %vm1780, %v1798, 0.0
        %1806 = vadd.xlane.f32.xlu0 %v1805
        %v1807 = vpop.xlane.xlu0 %1806
        %v1808 = vsel %vm1780, %v1800, 0.0
        %1809 = vadd.xlane.f32.xlu0 %v1808
        %v1810 = vpop.xlane.xlu0 %1809
        %v1811 = vsel %vm1780, %v1802, 0.0
        %1812 = vadd.xlane.f32.xlu0 %v1811
        %v1813 = vpop.xlane.xlu0 %1812
        %v1814 = vsel %vm1780, %v1804, 0.0
        %1815 = vadd.xlane.f32.xlu0 %v1814
        %v1816 = vpop.xlane.xlu0 %1815
        %v1817 = vrcp.pop %v1807
        %v1818 = vrcp.pop %v1810
        %v1819 = vrcp.pop %v1813
        %v1820 = vrcp.pop %v1816
        %v1821 = vmul.f32 %v1798, %v1817
        %v1822 = vmul.f32 %v1800, %v1818
        %v1823 = vmul.f32 %v1802, %v1819
        %v1824 = vmul.f32 %v1804, %v1820
        %v1825 = vld [vmem:[#allocation3] sm:$0xff]
        %v1826 = vld [vmem:[#allocation3 + $0x8] sm:$0xff]
        %v1827 = vld [vmem:[#allocation3 + $0x10] sm:$0xff]
        %v1828 = vld [vmem:[#allocation3 + $0x18] sm:$0xff]
        %v1830 = vsel %vm1780, %v1821, 0
        %1832 = vmatprep.subr.mxu0 0.0
        %1833 = vmatpush1.msra.mxu0 %v1825
        %1834 = vmatprep.subr.mxu0 0.0
        %1835 = vmatpush1.msra.mxu0 0.0
        %1836 = vmatprep.subr.mxu0 0.0
        %1837 = vmatpush1.msra.mxu0 0.0
        %1838 = vmatprep.subr.mxu0 0.0
        %1839 = vmatpush1.msra.mxu0 0.0
        %1840 = vmatprep.subr.mxu0 0.0
        %1841 = vmatpush1.msra.mxu0 0.0
        %1842 = vmatprep.subr.mxu0 0.0
        %1843 = vmatpush1.msra.mxu0 0.0
        %1844 = vmatprep.subr.mxu0 0.0
        %1845 = vmatpush1.msra.mxu0 0.0
        %1846 = vmatprep.subr.mxu0 0.0
        %1847 = vmatpush1.msra.mxu0 0.0
        %1848 = vmatprep.subr.mxu0 0.0
        %1849 = vmatpush1.msra.mxu0 0.0
        %1850 = vmatprep.subr.mxu0 0.0
        %1851 = vmatpush1.msra.mxu0 0.0
        %1852 = vmatprep.subr.mxu0 0.0
        %1853 = vmatpush1.msra.mxu0 0.0
        %1854 = vmatprep.subr.mxu0 0.0
        %1855 = vmatpush1.msra.mxu0 0.0
        %1856 = vmatprep.subr.mxu0 0.0
        %1857 = vmatpush1.msra.mxu0 0.0
        %1858 = vmatprep.subr.mxu0 0.0
        %1859 = vmatpush1.msra.mxu0 0.0
        %1860 = vmatprep.subr.mxu0 0.0
        %1861 = vmatpush1.msra.mxu0 0.0
        %1862 = vmatprep.subr.mxu0 0.0
        %1863 = vmatpush1.msra.mxu0 0.0
        %1864 = vmatprep.subr.mxu0 0.0
        %1865 = vmatpush1.msra.mxu0 0.0
        %1866 = vmatprep.subr.mxu0 0.0
        %1867 = vmatpush1.msra.mxu0 0.0
        %1868 = vmatprep.subr.mxu0 0.0
        %1869 = vmatpush1.msra.mxu0 0.0
        %1870 = vmatprep.subr.mxu0 0.0
        %1871 = vmatpush1.msra.mxu0 0.0
        %1872 = vmatprep.subr.mxu0 0.0
        %1873 = vmatpush1.msra.mxu0 0.0
        %1874 = vmatprep.subr.mxu0 0.0
        %1875 = vmatpush1.msra.mxu0 0.0
        %1876 = vmatprep.subr.mxu0 0.0
        %1877 = vmatpush1.msra.mxu0 0.0
        %1878 = vmatprep.subr.mxu0 0.0
        %1879 = vmatpush1.msra.mxu0 0.0
        %1880 = vmatprep.subr.mxu0 0.0
        %1881 = vmatpush1.msra.mxu0 0.0
        %1882 = vmatprep.subr.mxu0 0.0
        %1883 = vmatpush1.msra.mxu0 0.0
        %1884 = vmatprep.subr.mxu0 0.0
        %1885 = vmatpush1.msra.mxu0 0.0
        %1886 = vmatprep.subr.mxu0 0.0
        %1887 = vmatpush1.msra.mxu0 0.0
        %1888 = vmatprep.subr.mxu0 0.0
        %1889 = vmatpush1.msra.mxu0 0.0
        %1890 = vmatprep.subr.mxu0 0.0
        %1891 = vmatpush1.msra.mxu0 0.0
        %1892 = vmatprep.subr.mxu0 0.0
        %1893 = vmatpush1.msra.mxu0 0.0
        %1894 = vmatprep.subr.mxu0 0.0
        %1895 = vmatpush1.msra.mxu0 0.0
        %1896 = vmatprep.mubr.f32.mxu0 0.0
        %1897 = vmatmul.mubr.f32.gmra.mrb[0].mxu0 %v1830
        %v1898 = vpop.f32.mrb[0].mxu0
        %v1899 = vadd.f32 0.0, %v1898
        %v1900 = vpop.f32.mrb[0].mxu0
        %1901 = vdwg.mxu0
        %v1903 = vsel %vm1780, %v1822, 0
        %1905 = vmatprep.subr.mxu0 0.0
        %1906 = vmatpush1.msra.mxu0 %v1826
        %1907 = vmatprep.subr.mxu0 0.0
        %1908 = vmatpush1.msra.mxu0 0.0
        %1909 = vmatprep.subr.mxu0 0.0
        %1910 = vmatpush1.msra.mxu0 0.0
        %1911 = vmatprep.subr.mxu0 0.0
        %1912 = vmatpush1.msra.mxu0 0.0
        %1913 = vmatprep.subr.mxu0 0.0
        %1914 = vmatpush1.msra.mxu0 0.0
        %1915 = vmatprep.subr.mxu0 0.0
        %1916 = vmatpush1.msra.mxu0 0.0
        %1917 = vmatprep.subr.mxu0 0.0
        %1918 = vmatpush1.msra.mxu0 0.0
        %1919 = vmatprep.subr.mxu0 0.0
        %1920 = vmatpush1.msra.mxu0 0.0
        %1921 = vmatprep.subr.mxu0 0.0
        %1922 = vmatpush1.msra.mxu0 0.0
        %1923 = vmatprep.subr.mxu0 0.0
        %1924 = vmatpush1.msra.mxu0 0.0
        %1925 = vmatprep.subr.mxu0 0.0
        %1926 = vmatpush1.msra.mxu0 0.0
        %1927 = vmatprep.subr.mxu0 0.0
        %1928 = vmatpush1.msra.mxu0 0.0
        %1929 = vmatprep.subr.mxu0 0.0
        %1930 = vmatpush1.msra.mxu0 0.0
        %1931 = vmatprep.subr.mxu0 0.0
        %1932 = vmatpush1.msra.mxu0 0.0
        %1933 = vmatprep.subr.mxu0 0.0
        %1934 = vmatpush1.msra.mxu0 0.0
        %1935 = vmatprep.subr.mxu0 0.0
        %1936 = vmatpush1.msra.mxu0 0.0
        %1937 = vmatprep.subr.mxu0 0.0
        %1938 = vmatpush1.msra.mxu0 0.0
        %1939 = vmatprep.subr.mxu0 0.0
        %1940 = vmatpush1.msra.mxu0 0.0
        %1941 = vmatprep.subr.mxu0 0.0
        %1942 = vmatpush1.msra.mxu0 0.0
        %1943 = vmatprep.subr.mxu0 0.0
        %1944 = vmatpush1.msra.mxu0 0.0
        %1945 = vmatprep.subr.mxu0 0.0
        %1946 = vmatpush1.msra.mxu0 0.0
        %1947 = vmatprep.subr.mxu0 0.0
        %1948 = vmatpush1.msra.mxu0 0.0
        %1949 = vmatprep.subr.mxu0 0.0
        %1950 = vmatpush1.msra.mxu0 0.0
        %1951 = vmatprep.subr.mxu0 0.0
        %1952 = vmatpush1.msra.mxu0 0.0
        %1953 = vmatprep.subr.mxu0 0.0
        %1954 = vmatpush1.msra.mxu0 0.0
        %1955 = vmatprep.subr.mxu0 0.0
        %1956 = vmatpush1.msra.mxu0 0.0
        %1957 = vmatprep.subr.mxu0 0.0
        %1958 = vmatpush1.msra.mxu0 0.0
        %1959 = vmatprep.subr.mxu0 0.0
        %1960 = vmatpush1.msra.mxu0 0.0
        %1961 = vmatprep.subr.mxu0 0.0
        %1962 = vmatpush1.msra.mxu0 0.0
        %1963 = vmatprep.subr.mxu0 0.0
        %1964 = vmatpush1.msra.mxu0 0.0
        %1965 = vmatprep.subr.mxu0 0.0
        %1966 = vmatpush1.msra.mxu0 0.0
        %1967 = vmatprep.subr.mxu0 0.0
        %1968 = vmatpush1.msra.mxu0 0.0
        %1969 = vmatprep.mubr.f32.mxu0 0.0
        %1970 = vmatmul.mubr.f32.gmra.mrb[0].mxu0 %v1903
        %v1971 = vpop.f32.mrb[0].mxu0
        %v1972 = vadd.f32 0.0, %v1971
        %v1973 = vpop.f32.mrb[0].mxu0
        %1974 = vdwg.mxu0
        %v1976 = vsel %vm1780, %v1823, 0
        %1978 = vmatprep.subr.mxu0 0.0
        %1979 = vmatpush1.msra.mxu0 %v1827
        %1980 = vmatprep.subr.mxu0 0.0
        %1981 = vmatpush1.msra.mxu0 0.0
        %1982 = vmatprep.subr.mxu0 0.0
        %1983 = vmatpush1.msra.mxu0 0.0
        %1984 = vmatprep.subr.mxu0 0.0
        %1985 = vmatpush1.msra.mxu0 0.0
        %1986 = vmatprep.subr.mxu0 0.0
        %1987 = vmatpush1.msra.mxu0 0.0
        %1988 = vmatprep.subr.mxu0 0.0
        %1989 = vmatpush1.msra.mxu0 0.0
        %1990 = vmatprep.subr.mxu0 0.0
        %1991 = vmatpush1.msra.mxu0 0.0
        %1992 = vmatprep.subr.mxu0 0.0
        %1993 = vmatpush1.msra.mxu0 0.0
        %1994 = vmatprep.subr.mxu0 0.0
        %1995 = vmatpush1.msra.mxu0 0.0
        %1996 = vmatprep.subr.mxu0 0.0
        %1997 = vmatpush1.msra.mxu0 0.0
        %1998 = vmatprep.subr.mxu0 0.0
        %1999 = vmatpush1.msra.mxu0 0.0
        %2000 = vmatprep.subr.mxu0 0.0
        %2001 = vmatpush1.msra.mxu0 0.0
        %2002 = vmatprep.subr.mxu0 0.0
        %2003 = vmatpush1.msra.mxu0 0.0
        %2004 = vmatprep.subr.mxu0 0.0
        %2005 = vmatpush1.msra.mxu0 0.0
        %2006 = vmatprep.subr.mxu0 0.0
        %2007 = vmatpush1.msra.mxu0 0.0
        %2008 = vmatprep.subr.mxu0 0.0
        %2009 = vmatpush1.msra.mxu0 0.0
        %2010 = vmatprep.subr.mxu0 0.0
        %2011 = vmatpush1.msra.mxu0 0.0
        %2012 = vmatprep.subr.mxu0 0.0
        %2013 = vmatpush1.msra.mxu0 0.0
        %2014 = vmatprep.subr.mxu0 0.0
        %2015 = vmatpush1.msra.mxu0 0.0
        %2016 = vmatprep.subr.mxu0 0.0
        %2017 = vmatpush1.msra.mxu0 0.0
        %2018 = vmatprep.subr.mxu0 0.0
        %2019 = vmatpush1.msra.mxu0 0.0
        %2020 = vmatprep.subr.mxu0 0.0
        %2021 = vmatpush1.msra.mxu0 0.0
        %2022 = vmatprep.subr.mxu0 0.0
        %2023 = vmatpush1.msra.mxu0 0.0
        %2024 = vmatprep.subr.mxu0 0.0
        %2025 = vmatpush1.msra.mxu0 0.0
        %2026 = vmatprep.subr.mxu0 0.0
        %2027 = vmatpush1.msra.mxu0 0.0
        %2028 = vmatprep.subr.mxu0 0.0
        %2029 = vmatpush1.msra.mxu0 0.0
        %2030 = vmatprep.subr.mxu0 0.0
        %2031 = vmatpush1.msra.mxu0 0.0
        %2032 = vmatprep.subr.mxu0 0.0
        %2033 = vmatpush1.msra.mxu0 0.0
        %2034 = vmatprep.subr.mxu0 0.0
        %2035 = vmatpush1.msra.mxu0 0.0
        %2036 = vmatprep.subr.mxu0 0.0
        %2037 = vmatpush1.msra.mxu0 0.0
        %2038 = vmatprep.subr.mxu0 0.0
        %2039 = vmatpush1.msra.mxu0 0.0
        %2040 = vmatprep.subr.mxu0 0.0
        %2041 = vmatpush1.msra.mxu0 0.0
        %2042 = vmatprep.mubr.f32.mxu0 0.0
        %2043 = vmatmul.mubr.f32.gmra.mrb[0].mxu0 %v1976
        %v2044 = vpop.f32.mrb[0].mxu0
        %v2045 = vadd.f32 0.0, %v2044
        %v2046 = vpop.f32.mrb[0].mxu0
        %2047 = vdwg.mxu0
        %v2049 = vsel %vm1780, %v1824, 0
        %2051 = vmatprep.subr.mxu0 0.0
        %2052 = vmatpush1.msra.mxu0 %v1828
        %2053 = vmatprep.subr.mxu0 0.0
        %2054 = vmatpush1.msra.mxu0 0.0
        %2055 = vmatprep.subr.mxu0 0.0
        %2056 = vmatpush1.msra.mxu0 0.0
        %2057 = vmatprep.subr.mxu0 0.0
        %2058 = vmatpush1.msra.mxu0 0.0
        %2059 = vmatprep.subr.mxu0 0.0
        %2060 = vmatpush1.msra.mxu0 0.0
        %2061 = vmatprep.subr.mxu0 0.0
        %2062 = vmatpush1.msra.mxu0 0.0
        %2063 = vmatprep.subr.mxu0 0.0
        %2064 = vmatpush1.msra.mxu0 0.0
        %2065 = vmatprep.subr.mxu0 0.0
        %2066 = vmatpush1.msra.mxu0 0.0
        %2067 = vmatprep.subr.mxu0 0.0
        %2068 = vmatpush1.msra.mxu0 0.0
        %2069 = vmatprep.subr.mxu0 0.0
        %2070 = vmatpush1.msra.mxu0 0.0
        %2071 = vmatprep.subr.mxu0 0.0
        %2072 = vmatpush1.msra.mxu0 0.0
        %2073 = vmatprep.subr.mxu0 0.0
        %2074 = vmatpush1.msra.mxu0 0.0
        %2075 = vmatprep.subr.mxu0 0.0
        %2076 = vmatpush1.msra.mxu0 0.0
        %2077 = vmatprep.subr.mxu0 0.0
        %2078 = vmatpush1.msra.mxu0 0.0
        %2079 = vmatprep.subr.mxu0 0.0
        %2080 = vmatpush1.msra.mxu0 0.0
        %2081 = vmatprep.subr.mxu0 0.0
        %2082 = vmatpush1.msra.mxu0 0.0
        %2083 = vmatprep.subr.mxu0 0.0
        %2084 = vmatpush1.msra.mxu0 0.0
        %2085 = vmatprep.subr.mxu0 0.0
        %2086 = vmatpush1.msra.mxu0 0.0
        %2087 = vmatprep.subr.mxu0 0.0
        %2088 = vmatpush1.msra.mxu0 0.0
        %2089 = vmatprep.subr.mxu0 0.0
        %2090 = vmatpush1.msra.mxu0 0.0
        %2091 = vmatprep.subr.mxu0 0.0
        %2092 = vmatpush1.msra.mxu0 0.0
        %2093 = vmatprep.subr.mxu0 0.0
        %2094 = vmatpush1.msra.mxu0 0.0
        %2095 = vmatprep.subr.mxu0 0.0
        %2096 = vmatpush1.msra.mxu0 0.0
        %2097 = vmatprep.subr.mxu0 0.0
        %2098 = vmatpush1.msra.mxu0 0.0
        %2099 = vmatprep.subr.mxu0 0.0
        %2100 = vmatpush1.msra.mxu0 0.0
        %2101 = vmatprep.subr.mxu0 0.0
        %2102 = vmatpush1.msra.mxu0 0.0
        %2103 = vmatprep.subr.mxu0 0.0
        %2104 = vmatpush1.msra.mxu0 0.0
        %2105 = vmatprep.subr.mxu0 0.0
        %2106 = vmatpush1.msra.mxu0 0.0
        %2107 = vmatprep.subr.mxu0 0.0
        %2108 = vmatpush1.msra.mxu0 0.0
        %2109 = vmatprep.subr.mxu0 0.0
        %2110 = vmatpush1.msra.mxu0 0.0
        %2111 = vmatprep.subr.mxu0 0.0
        %2112 = vmatpush1.msra.mxu0 0.0
        %2113 = vmatprep.subr.mxu0 0.0
        %2114 = vmatpush1.msra.mxu0 0.0
        %2115 = vmatprep.mubr.f32.mxu0 0.0
        %2116 = vmatmul.mubr.f32.gmra.mrb[0].mxu0 %v2049
        %v2117 = vpop.f32.mrb[0].mxu0
        %v2118 = vadd.f32 0.0, %v2117
        %v2119 = vpop.f32.mrb[0].mxu0
        %2120 = vdwg.mxu0
        %v2121 = vld [vmem:[#allocation16] sm:$0xff]
        %v2122 = vld [vmem:[#allocation16 + $0x8] sm:$0xff]
        %v2123 = vld [vmem:[#allocation16 + $0x10] sm:$0xff]
        %v2124 = vld [vmem:[#allocation16 + $0x18] sm:$0xff]
        %v2125 = vld [vmem:[#allocation16 + $0x20] sm:$0xff]
        %v2126 = vld [vmem:[#allocation16 + $0x28] sm:$0xff]
        %v2127 = vld [vmem:[#allocation16 + $0x30] sm:$0xff]
        %v2128 = vld [vmem:[#allocation16 + $0x38] sm:$0xff]
        %v2129 = vld [vmem:[#allocation16 + $0x40] sm:$0xff]
        %v2130 = vld [vmem:[#allocation16 + $0x48] sm:$0xff]
        %v2131 = vld [vmem:[#allocation16 + $0x50] sm:$0xff]
        %v2132 = vld [vmem:[#allocation16 + $0x58] sm:$0xff]
        %v2133 = vld [vmem:[#allocation16 + $0x60] sm:$0xff]
        %v2134 = vld [vmem:[#allocation16 + $0x68] sm:$0xff]
        %v2135 = vld [vmem:[#allocation16 + $0x70] sm:$0xff]
        %v2136 = vld [vmem:[#allocation16 + $0x78] sm:$0xff]
        %v2137 = vld [vmem:[#allocation16 + $0x80] sm:$0xff]
        %v2138 = vld [vmem:[#allocation16 + $0x88] sm:$0xff]
        %v2139 = vld [vmem:[#allocation16 + $0x90] sm:$0xff]
        %v2140 = vld [vmem:[#allocation16 + $0x98] sm:$0xff]
        %v2141 = vld [vmem:[#allocation16 + $0xa0] sm:$0xff]
        %v2142 = vld [vmem:[#allocation16 + $0xa8] sm:$0xff]
        %v2143 = vld [vmem:[#allocation16 + $0xb0] sm:$0xff]
        %v2144 = vld [vmem:[#allocation16 + $0xb8] sm:$0xff]
        %v2145 = vld [vmem:[#allocation16 + $0xc0] sm:$0xff]
        %v2146 = vld [vmem:[#allocation16 + $0xc8] sm:$0xff]
        %v2147 = vld [vmem:[#allocation16 + $0xd0] sm:$0xff]
        %v2148 = vld [vmem:[#allocation16 + $0xd8] sm:$0xff]
        %v2149 = vld [vmem:[#allocation16 + $0xe0] sm:$0xff]
        %v2150 = vld [vmem:[#allocation16 + $0xe8] sm:$0xff]
        %v2151 = vld [vmem:[#allocation16 + $0xf0] sm:$0xff]
        %v2152 = vld [vmem:[#allocation16 + $0xf8] sm:$0xff]
        %v2153 = vld [vmem:[#allocation16 + $0x100] sm:$0xff]
        %v2154 = vld [vmem:[#allocation16 + $0x108] sm:$0xff]
        %v2155 = vld [vmem:[#allocation16 + $0x110] sm:$0xff]
        %v2156 = vld [vmem:[#allocation16 + $0x118] sm:$0xff]
        %v2157 = vld [vmem:[#allocation16 + $0x120] sm:$0xff]
        %v2158 = vld [vmem:[#allocation16 + $0x128] sm:$0xff]
        %v2159 = vld [vmem:[#allocation16 + $0x130] sm:$0xff]
        %v2160 = vld [vmem:[#allocation16 + $0x138] sm:$0xff]
        %v2161 = vld [vmem:[#allocation16 + $0x140] sm:$0xff]
        %v2162 = vld [vmem:[#allocation16 + $0x148] sm:$0xff]
        %v2163 = vld [vmem:[#allocation16 + $0x150] sm:$0xff]
        %v2164 = vld [vmem:[#allocation16 + $0x158] sm:$0xff]
        %v2165 = vld [vmem:[#allocation16 + $0x160] sm:$0xff]
        %v2166 = vld [vmem:[#allocation16 + $0x168] sm:$0xff]
        %v2167 = vld [vmem:[#allocation16 + $0x170] sm:$0xff]
        %v2168 = vld [vmem:[#allocation16 + $0x178] sm:$0xff]
        %v2169 = vld [vmem:[#allocation16 + $0x180] sm:$0xff]
        %v2170 = vld [vmem:[#allocation16 + $0x188] sm:$0xff]
        %v2171 = vld [vmem:[#allocation16 + $0x190] sm:$0xff]
        %v2172 = vld [vmem:[#allocation16 + $0x198] sm:$0xff]
        %v2173 = vld [vmem:[#allocation16 + $0x1a0] sm:$0xff]
        %v2174 = vld [vmem:[#allocation16 + $0x1a8] sm:$0xff]
        %v2175 = vld [vmem:[#allocation16 + $0x1b0] sm:$0xff]
        %v2176 = vld [vmem:[#allocation16 + $0x1b8] sm:$0xff]
        %v2177 = vld [vmem:[#allocation16 + $0x1c0] sm:$0xff]
        %v2178 = vld [vmem:[#allocation16 + $0x1c8] sm:$0xff]
        %v2179 = vld [vmem:[#allocation16 + $0x1d0] sm:$0xff]
        %v2180 = vld [vmem:[#allocation16 + $0x1d8] sm:$0xff]
        %v2181 = vld [vmem:[#allocation16 + $0x1e0] sm:$0xff]
        %v2182 = vld [vmem:[#allocation16 + $0x1e8] sm:$0xff]
        %v2183 = vld [vmem:[#allocation16 + $0x1f0] sm:$0xff]
        %v2184 = vld [vmem:[#allocation16 + $0x1f8] sm:$0xff]
        %2185 = vmatprep.subr.mxu0 0.0
        %2186 = vmatpush1.msra.mxu0 %v2121
        %2187 = vmatprep.subr.mxu0 0.0
        %2188 = vmatpush1.msra.mxu0 %v2122
        %2189 = vmatprep.subr.mxu0 0.0
        %2190 = vmatpush1.msra.mxu0 %v2123
        %2191 = vmatprep.subr.mxu0 0.0
        %2192 = vmatpush1.msra.mxu0 %v2124
        %2193 = vmatprep.subr.mxu0 0.0
        %2194 = vmatpush1.msra.mxu0 %v2125
        %2195 = vmatprep.subr.mxu0 0.0
        %2196 = vmatpush1.msra.mxu0 %v2126
        %2197 = vmatprep.subr.mxu0 0.0
        %2198 = vmatpush1.msra.mxu0 %v2127
        %2199 = vmatprep.subr.mxu0 0.0
        %2200 = vmatpush1.msra.mxu0 %v2128
        %2201 = vmatprep.subr.mxu0 0.0
        %2202 = vmatpush1.msra.mxu0 %v2129
        %2203 = vmatprep.subr.mxu0 0.0
        %2204 = vmatpush1.msra.mxu0 %v2130
        %2205 = vmatprep.subr.mxu0 0.0
        %2206 = vmatpush1.msra.mxu0 %v2131
        %2207 = vmatprep.subr.mxu0 0.0
        %2208 = vmatpush1.msra.mxu0 %v2132
        %2209 = vmatprep.subr.mxu0 0.0
        %2210 = vmatpush1.msra.mxu0 %v2133
        %2211 = vmatprep.subr.mxu0 0.0
        %2212 = vmatpush1.msra.mxu0 %v2134
        %2213 = vmatprep.subr.mxu0 0.0
        %2214 = vmatpush1.msra.mxu0 %v2135
        %2215 = vmatprep.subr.mxu0 0.0
        %2216 = vmatpush1.msra.mxu0 %v2136
        %2217 = vmatprep.subr.mxu0 0.0
        %2218 = vmatpush1.msra.mxu0 0.0
        %2219 = vmatprep.subr.mxu0 0.0
        %2220 = vmatpush1.msra.mxu0 0.0
        %2221 = vmatprep.subr.mxu0 0.0
        %2222 = vmatpush1.msra.mxu0 0.0
        %2223 = vmatprep.subr.mxu0 0.0
        %2224 = vmatpush1.msra.mxu0 0.0
        %2225 = vmatprep.subr.mxu0 0.0
        %2226 = vmatpush1.msra.mxu0 0.0
        %2227 = vmatprep.subr.mxu0 0.0
        %2228 = vmatpush1.msra.mxu0 0.0
        %2229 = vmatprep.subr.mxu0 0.0
        %2230 = vmatpush1.msra.mxu0 0.0
        %2231 = vmatprep.subr.mxu0 0.0
        %2232 = vmatpush1.msra.mxu0 0.0
        %2233 = vmatprep.subr.mxu0 0.0
        %2234 = vmatpush1.msra.mxu0 0.0
        %2235 = vmatprep.subr.mxu0 0.0
        %2236 = vmatpush1.msra.mxu0 0.0
        %2237 = vmatprep.subr.mxu0 0.0
        %2238 = vmatpush1.msra.mxu0 0.0
        %2239 = vmatprep.subr.mxu0 0.0
        %2240 = vmatpush1.msra.mxu0 0.0
        %2241 = vmatprep.subr.mxu0 0.0
        %2242 = vmatpush1.msra.mxu0 0.0
        %2243 = vmatprep.subr.mxu0 0.0
        %2244 = vmatpush1.msra.mxu0 0.0
        %2245 = vmatprep.subr.mxu0 0.0
        %2246 = vmatpush1.msra.mxu0 0.0
        %2247 = vmatprep.subr.mxu0 0.0
        %2248 = vmatpush1.msra.mxu0 0.0
        %2249 = vmatprep.mubr.f32.mxu0 0.0
        %2250 = vmatmul.mubr.f32.gmra.mrb[0].mxu0 %v1899
        %v2251 = vpop.f32.mrb[0].mxu0
        %v2252 = vadd.f32 0.0, %v2251
        %v2253 = vpop.f32.mrb[0].mxu0
        %2254 = vdwg.mxu0
        %2255 = vmatprep.subr.mxu0 0.0
        %2256 = vmatpush1.msra.mxu0 %v2137
        %2257 = vmatprep.subr.mxu0 0.0
        %2258 = vmatpush1.msra.mxu0 %v2138
        %2259 = vmatprep.subr.mxu0 0.0
        %2260 = vmatpush1.msra.mxu0 %v2139
        %2261 = vmatprep.subr.mxu0 0.0
        %2262 = vmatpush1.msra.mxu0 %v2140
        %2263 = vmatprep.subr.mxu0 0.0
        %2264 = vmatpush1.msra.mxu0 %v2141
        %2265 = vmatprep.subr.mxu0 0.0
        %2266 = vmatpush1.msra.mxu0 %v2142
        %2267 = vmatprep.subr.mxu0 0.0
        %2268 = vmatpush1.msra.mxu0 %v2143
        %2269 = vmatprep.subr.mxu0 0.0
        %2270 = vmatpush1.msra.mxu0 %v2144
        %2271 = vmatprep.subr.mxu0 0.0
        %2272 = vmatpush1.msra.mxu0 %v2145
        %2273 = vmatprep.subr.mxu0 0.0
        %2274 = vmatpush1.msra.mxu0 %v2146
        %2275 = vmatprep.subr.mxu0 0.0
        %2276 = vmatpush1.msra.mxu0 %v2147
        %2277 = vmatprep.subr.mxu0 0.0
        %2278 = vmatpush1.msra.mxu0 %v2148
        %2279 = vmatprep.subr.mxu0 0.0
        %2280 = vmatpush1.msra.mxu0 %v2149
        %2281 = vmatprep.subr.mxu0 0.0
        %2282 = vmatpush1.msra.mxu0 %v2150
        %2283 = vmatprep.subr.mxu0 0.0
        %2284 = vmatpush1.msra.mxu0 %v2151
        %2285 = vmatprep.subr.mxu0 0.0
        %2286 = vmatpush1.msra.mxu0 %v2152
        %2287 = vmatprep.subr.mxu0 0.0
        %2288 = vmatpush1.msra.mxu0 0.0
        %2289 = vmatprep.subr.mxu0 0.0
        %2290 = vmatpush1.msra.mxu0 0.0
        %2291 = vmatprep.subr.mxu0 0.0
        %2292 = vmatpush1.msra.mxu0 0.0
        %2293 = vmatprep.subr.mxu0 0.0
        %2294 = vmatpush1.msra.mxu0 0.0
        %2295 = vmatprep.subr.mxu0 0.0
        %2296 = vmatpush1.msra.mxu0 0.0
        %2297 = vmatprep.subr.mxu0 0.0
        %2298 = vmatpush1.msra.mxu0 0.0
        %2299 = vmatprep.subr.mxu0 0.0
        %2300 = vmatpush1.msra.mxu0 0.0
        %2301 = vmatprep.subr.mxu0 0.0
        %2302 = vmatpush1.msra.mxu0 0.0
        %2303 = vmatprep.subr.mxu0 0.0
        %2304 = vmatpush1.msra.mxu0 0.0
        %2305 = vmatprep.subr.mxu0 0.0
        %2306 = vmatpush1.msra.mxu0 0.0
        %2307 = vmatprep.subr.mxu0 0.0
        %2308 = vmatpush1.msra.mxu0 0.0
        %2309 = vmatprep.subr.mxu0 0.0
        %2310 = vmatpush1.msra.mxu0 0.0
        %2311 = vmatprep.subr.mxu0 0.0
        %2312 = vmatpush1.msra.mxu0 0.0
        %2313 = vmatprep.subr.mxu0 0.0
        %2314 = vmatpush1.msra.mxu0 0.0
        %2315 = vmatprep.subr.mxu0 0.0
        %2316 = vmatpush1.msra.mxu0 0.0
        %2317 = vmatprep.subr.mxu0 0.0
        %2318 = vmatpush1.msra.mxu0 0.0
        %2319 = vmatprep.mubr.f32.mxu0 0.0
        %2320 = vmatmul.mubr.f32.gmra.mrb[0].mxu0 %v1972
        %v2321 = vpop.f32.mrb[0].mxu0
        %v2322 = vadd.f32 0.0, %v2321
        %v2323 = vpop.f32.mrb[0].mxu0
        %2324 = vdwg.mxu0
        %2325 = vmatprep.subr.mxu0 0.0
        %2326 = vmatpush1.msra.mxu0 %v2153
        %2327 = vmatprep.subr.mxu0 0.0
        %2328 = vmatpush1.msra.mxu0 %v2154
        %2329 = vmatprep.subr.mxu0 0.0
        %2330 = vmatpush1.msra.mxu0 %v2155
        %2331 = vmatprep.subr.mxu0 0.0
        %2332 = vmatpush1.msra.mxu0 %v2156
        %2333 = vmatprep.subr.mxu0 0.0
        %2334 = vmatpush1.msra.mxu0 %v2157
        %2335 = vmatprep.subr.mxu0 0.0
        %2336 = vmatpush1.msra.mxu0 %v2158
        %2337 = vmatprep.subr.mxu0 0.0
        %2338 = vmatpush1.msra.mxu0 %v2159
        %2339 = vmatprep.subr.mxu0 0.0
        %2340 = vmatpush1.msra.mxu0 %v2160
        %2341 = vmatprep.subr.mxu0 0.0
        %2342 = vmatpush1.msra.mxu0 %v2161
        %2343 = vmatprep.subr.mxu0 0.0
        %2344 = vmatpush1.msra.mxu0 %v2162
        %2345 = vmatprep.subr.mxu0 0.0
        %2346 = vmatpush1.msra.mxu0 %v2163
        %2347 = vmatprep.subr.mxu0 0.0
        %2348 = vmatpush1.msra.mxu0 %v2164
        %2349 = vmatprep.subr.mxu0 0.0
        %2350 = vmatpush1.msra.mxu0 %v2165
        %2351 = vmatprep.subr.mxu0 0.0
        %2352 = vmatpush1.msra.mxu0 %v2166
        %2353 = vmatprep.subr.mxu0 0.0
        %2354 = vmatpush1.msra.mxu0 %v2167
        %2355 = vmatprep.subr.mxu0 0.0
        %2356 = vmatpush1.msra.mxu0 %v2168
        %2357 = vmatprep.subr.mxu0 0.0
        %2358 = vmatpush1.msra.mxu0 0.0
        %2359 = vmatprep.subr.mxu0 0.0
        %2360 = vmatpush1.msra.mxu0 0.0
        %2361 = vmatprep.subr.mxu0 0.0
        %2362 = vmatpush1.msra.mxu0 0.0
        %2363 = vmatprep.subr.mxu0 0.0
        %2364 = vmatpush1.msra.mxu0 0.0
        %2365 = vmatprep.subr.mxu0 0.0
        %2366 = vmatpush1.msra.mxu0 0.0
        %2367 = vmatprep.subr.mxu0 0.0
        %2368 = vmatpush1.msra.mxu0 0.0
        %2369 = vmatprep.subr.mxu0 0.0
        %2370 = vmatpush1.msra.mxu0 0.0
        %2371 = vmatprep.subr.mxu0 0.0
        %2372 = vmatpush1.msra.mxu0 0.0
        %2373 = vmatprep.subr.mxu0 0.0
        %2374 = vmatpush1.msra.mxu0 0.0
        %2375 = vmatprep.subr.mxu0 0.0
        %2376 = vmatpush1.msra.mxu0 0.0
        %2377 = vmatprep.subr.mxu0 0.0
        %2378 = vmatpush1.msra.mxu0 0.0
        %2379 = vmatprep.subr.mxu0 0.0
        %2380 = vmatpush1.msra.mxu0 0.0
        %2381 = vmatprep.subr.mxu0 0.0
        %2382 = vmatpush1.msra.mxu0 0.0
        %2383 = vmatprep.subr.mxu0 0.0
        %2384 = vmatpush1.msra.mxu0 0.0
        %2385 = vmatprep.subr.mxu0 0.0
        %2386 = vmatpush1.msra.mxu0 0.0
        %2387 = vmatprep.subr.mxu0 0.0
        %2388 = vmatpush1.msra.mxu0 0.0
        %2389 = vmatprep.mubr.f32.mxu0 0.0
        %2390 = vmatmul.mubr.f32.gmra.mrb[0].mxu0 %v2045
        %v2391 = vpop.f32.mrb[0].mxu0
        %v2392 = vadd.f32 0.0, %v2391
        %v2393 = vpop.f32.mrb[0].mxu0
        %2394 = vdwg.mxu0
        %2395 = vmatprep.subr.mxu0 0.0
        %2396 = vmatpush1.msra.mxu0 %v2169
        %2397 = vmatprep.subr.mxu0 0.0
        %2398 = vmatpush1.msra.mxu0 %v2170
        %2399 = vmatprep.subr.mxu0 0.0
        %2400 = vmatpush1.msra.mxu0 %v2171
        %2401 = vmatprep.subr.mxu0 0.0
        %2402 = vmatpush1.msra.mxu0 %v2172
        %2403 = vmatprep.subr.mxu0 0.0
        %2404 = vmatpush1.msra.mxu0 %v2173
        %2405 = vmatprep.subr.mxu0 0.0
        %2406 = vmatpush1.msra.mxu0 %v2174
        %2407 = vmatprep.subr.mxu0 0.0
        %2408 = vmatpush1.msra.mxu0 %v2175
        %2409 = vmatprep.subr.mxu0 0.0
        %2410 = vmatpush1.msra.mxu0 %v2176
        %2411 = vmatprep.subr.mxu0 0.0
        %2412 = vmatpush1.msra.mxu0 %v2177
        %2413 = vmatprep.subr.mxu0 0.0
        %2414 = vmatpush1.msra.mxu0 %v2178
        %2415 = vmatprep.subr.mxu0 0.0
        %2416 = vmatpush1.msra.mxu0 %v2179
        %2417 = vmatprep.subr.mxu0 0.0
        %2418 = vmatpush1.msra.mxu0 %v2180
        %2419 = vmatprep.subr.mxu0 0.0
        %2420 = vmatpush1.msra.mxu0 %v2181
        %2421 = vmatprep.subr.mxu0 0.0
        %2422 = vmatpush1.msra.mxu0 %v2182
        %2423 = vmatprep.subr.mxu0 0.0
        %2424 = vmatpush1.msra.mxu0 %v2183
        %2425 = vmatprep.subr.mxu0 0.0
        %2426 = vmatpush1.msra.mxu0 %v2184
        %2427 = vmatprep.subr.mxu0 0.0
        %2428 = vmatpush1.msra.mxu0 0.0
        %2429 = vmatprep.subr.mxu0 0.0
        %2430 = vmatpush1.msra.mxu0 0.0
        %2431 = vmatprep.subr.mxu0 0.0
        %2432 = vmatpush1.msra.mxu0 0.0
        %2433 = vmatprep.subr.mxu0 0.0
        %2434 = vmatpush1.msra.mxu0 0.0
        %2435 = vmatprep.subr.mxu0 0.0
        %2436 = vmatpush1.msra.mxu0 0.0
        %2437 = vmatprep.subr.mxu0 0.0
        %2438 = vmatpush1.msra.mxu0 0.0
        %2439 = vmatprep.subr.mxu0 0.0
        %2440 = vmatpush1.msra.mxu0 0.0
        %2441 = vmatprep.subr.mxu0 0.0
        %2442 = vmatpush1.msra.mxu0 0.0
        %2443 = vmatprep.subr.mxu0 0.0
        %2444 = vmatpush1.msra.mxu0 0.0
        %2445 = vmatprep.subr.mxu0 0.0
        %2446 = vmatpush1.msra.mxu0 0.0
        %2447 = vmatprep.subr.mxu0 0.0
        %2448 = vmatpush1.msra.mxu0 0.0
        %2449 = vmatprep.subr.mxu0 0.0
        %2450 = vmatpush1.msra.mxu0 0.0
        %2451 = vmatprep.subr.mxu0 0.0
        %2452 = vmatpush1.msra.mxu0 0.0
        %2453 = vmatprep.subr.mxu0 0.0
        %2454 = vmatpush1.msra.mxu0 0.0
        %2455 = vmatprep.subr.mxu0 0.0
        %2456 = vmatpush1.msra.mxu0 0.0
        %2457 = vmatprep.subr.mxu0 0.0
        %2458 = vmatpush1.msra.mxu0 0.0
        %2459 = vmatprep.mubr.f32.mxu0 0.0
        %2460 = vmatmul.mubr.f32.gmra.mrb[0].mxu0 %v2118
        %v2461 = vpop.f32.mrb[0].mxu0
        %v2462 = vadd.f32 0.0, %v2461
        %v2463 = vpop.f32.mrb[0].mxu0
        %2464 = vdwg.mxu0
        %v2465 = vadd.f32 %v2252, %v2322
        %v2466 = vadd.f32 %v2465, %v2392
        %v2467 = vadd.f32 %v2466, %v2462
        %v2468 = vld [vmem:[#allocation18] sm:$0x1]
        %v2470 = vlaneseq
        %v2471 = vshrl.u32 %v2470, 7
        %v2472 = vsub.s32 0, %v2471
        %v2473 = vrot.slane %v2468, %v2472
        %v2475 = vadd.f32 %v2467, %v2473
        %v2476 = vadd.f32 %v1267, %v2475
        %v2477 = vld [vmem:[#allocation19] sm:$0x1]
        %v2478 = vld [vmem:[#allocation21] sm:$0x1]
        %2479 = vadd.xlane.f32.xlu0 %v2476
        %v2480 = vpop.xlane.xlu0 %2479
        %v2481 = vmul.f32 %v2480, 0.03125
        %v2482 = vmul.f32 %v2476, %v2476
        %2483 = vadd.xlane.f32.xlu0 %v2482
        %v2484 = vpop.xlane.xlu0 %2483
        %v2485 = vmul.f32 %v2484, 0.03125
        %v2486 = vmul.f32 %v2481, %v2481
        %v2487 = vsub.f32 %v2485, %v2486
        %v2488 = vsub.f32 %v2476, %v2481
        %v2489 = vadd.f32 %v2487, 1e-05
        %v2490 = vrsqrt.pop %v2489
        %v2491 = vmul.f32 %v2488, %v2490
        %v2493 = vlaneseq
        %v2494 = vshrl.u32 %v2493, 7
        %v2495 = vsub.s32 0, %v2494
        %v2496 = vrot.slane %v2477, %v2495
        %v2498 = vmul.f32 %v2491, %v2496
        %v2500 = vlaneseq
        %v2501 = vshrl.u32 %v2500, 7
        %v2502 = vsub.s32 0, %v2501
        %v2503 = vrot.slane %v2478, %v2502
        %v2505 = vadd.f32 %v2498, %v2503
        %v2506 = vld [vmem:[#allocation22] sm:$0xff]
        %v2507 = vld [vmem:[#allocation22 + $0x8] sm:$0xff]
        %v2508 = vld [vmem:[#allocation22 + $0x10] sm:$0xff]
        %v2509 = vld [vmem:[#allocation22 + $0x18] sm:$0xff]
        %v2510 = vld [vmem:[#allocation22 + $0x20] sm:$0xff]
        %v2511 = vld [vmem:[#allocation22 + $0x28] sm:$0xff]
        %v2512 = vld [vmem:[#allocation22 + $0x30] sm:$0xff]
        %v2513 = vld [vmem:[#allocation22 + $0x38] sm:$0xff]
        %v2514 = vld [vmem:[#allocation22 + $0x40] sm:$0xff]
        %v2515 = vld [vmem:[#allocation22 + $0x48] sm:$0xff]
        %v2516 = vld [vmem:[#allocation22 + $0x50] sm:$0xff]
        %v2517 = vld [vmem:[#allocation22 + $0x58] sm:$0xff]
        %v2518 = vld [vmem:[#allocation22 + $0x60] sm:$0xff]
        %v2519 = vld [vmem:[#allocation22 + $0x68] sm:$0xff]
        %v2520 = vld [vmem:[#allocation22 + $0x70] sm:$0xff]
        %v2521 = vld [vmem:[#allocation22 + $0x78] sm:$0xff]
        %v2522 = vld [vmem:[#allocation22 + $0x80] sm:$0xff]
        %v2523 = vld [vmem:[#allocation22 + $0x88] sm:$0xff]
        %v2524 = vld [vmem:[#allocation22 + $0x90] sm:$0xff]
        %v2525 = vld [vmem:[#allocation22 + $0x98] sm:$0xff]
        %v2526 = vld [vmem:[#allocation22 + $0xa0] sm:$0xff]
        %v2527 = vld [vmem:[#allocation22 + $0xa8] sm:$0xff]
        %v2528 = vld [vmem:[#allocation22 + $0xb0] sm:$0xff]
        %v2529 = vld [vmem:[#allocation22 + $0xb8] sm:$0xff]
        %v2530 = vld [vmem:[#allocation22 + $0xc0] sm:$0xff]
        %v2531 = vld [vmem:[#allocation22 + $0xc8] sm:$0xff]
        %v2532 = vld [vmem:[#allocation22 + $0xd0] sm:$0xff]
        %v2533 = vld [vmem:[#allocation22 + $0xd8] sm:$0xff]
        %v2534 = vld [vmem:[#allocation22 + $0xe0] sm:$0xff]
        %v2535 = vld [vmem:[#allocation22 + $0xe8] sm:$0xff]
        %v2536 = vld [vmem:[#allocation22 + $0xf0] sm:$0xff]
        %v2537 = vld [vmem:[#allocation22 + $0xf8] sm:$0xff]
        %v2538 = vld [vmem:[#allocation22 + $0x100] sm:$0xff]
        %v2539 = vld [vmem:[#allocation22 + $0x108] sm:$0xff]
        %v2540 = vld [vmem:[#allocation22 + $0x110] sm:$0xff]
        %v2541 = vld [vmem:[#allocation22 + $0x118] sm:$0xff]
        %v2542 = vld [vmem:[#allocation22 + $0x120] sm:$0xff]
        %v2543 = vld [vmem:[#allocation22 + $0x128] sm:$0xff]
        %v2544 = vld [vmem:[#allocation22 + $0x130] sm:$0xff]
        %v2545 = vld [vmem:[#allocation22 + $0x138] sm:$0xff]
        %v2546 = vld [vmem:[#allocation22 + $0x140] sm:$0xff]
        %v2547 = vld [vmem:[#allocation22 + $0x148] sm:$0xff]
        %v2548 = vld [vmem:[#allocation22 + $0x150] sm:$0xff]
        %v2549 = vld [vmem:[#allocation22 + $0x158] sm:$0xff]
        %v2550 = vld [vmem:[#allocation22 + $0x160] sm:$0xff]
        %v2551 = vld [vmem:[#allocation22 + $0x168] sm:$0xff]
        %v2552 = vld [vmem:[#allocation22 + $0x170] sm:$0xff]
        %v2553 = vld [vmem:[#allocation22 + $0x178] sm:$0xff]
        %v2554 = vld [vmem:[#allocation22 + $0x180] sm:$0xff]
        %v2555 = vld [vmem:[#allocation22 + $0x188] sm:$0xff]
        %v2556 = vld [vmem:[#allocation22 + $0x190] sm:$0xff]
        %v2557 = vld [vmem:[#allocation22 + $0x198] sm:$0xff]
        %v2558 = vld [vmem:[#allocation22 + $0x1a0] sm:$0xff]
        %v2559 = vld [vmem:[#allocation22 + $0x1a8] sm:$0xff]
        %v2560 = vld [vmem:[#allocation22 + $0x1b0] sm:$0xff]
        %v2561 = vld [vmem:[#allocation22 + $0x1b8] sm:$0xff]
        %v2562 = vld [vmem:[#allocation22 + $0x1c0] sm:$0xff]
        %v2563 = vld [vmem:[#allocation22 + $0x1c8] sm:$0xff]
        %v2564 = vld [vmem:[#allocation22 + $0x1d0] sm:$0xff]
        %v2565 = vld [vmem:[#allocation22 + $0x1d8] sm:$0xff]
        %v2566 = vld [vmem:[#allocation22 + $0x1e0] sm:$0xff]
        %v2567 = vld [vmem:[#allocation22 + $0x1e8] sm:$0xff]
        %v2568 = vld [vmem:[#allocation22 + $0x1f0] sm:$0xff]
        %v2569 = vld [vmem:[#allocation22 + $0x1f8] sm:$0xff]
        %v2570 = vld [vmem:[#allocation22 + $0x200] sm:$0xff]
        %v2571 = vld [vmem:[#allocation22 + $0x208] sm:$0xff]
        %v2572 = vld [vmem:[#allocation22 + $0x210] sm:$0xff]
        %v2573 = vld [vmem:[#allocation22 + $0x218] sm:$0xff]
        %v2574 = vld [vmem:[#allocation22 + $0x220] sm:$0xff]
        %v2575 = vld [vmem:[#allocation22 + $0x228] sm:$0xff]
        %v2576 = vld [vmem:[#allocation22 + $0x230] sm:$0xff]
        %v2577 = vld [vmem:[#allocation22 + $0x238] sm:$0xff]
        %v2578 = vld [vmem:[#allocation22 + $0x240] sm:$0xff]
        %v2579 = vld [vmem:[#allocation22 + $0x248] sm:$0xff]
        %v2580 = vld [vmem:[#allocation22 + $0x250] sm:$0xff]
        %v2581 = vld [vmem:[#allocation22 + $0x258] sm:$0xff]
        %v2582 = vld [vmem:[#allocation22 + $0x260] sm:$0xff]
        %v2583 = vld [vmem:[#allocation22 + $0x268] sm:$0xff]
        %v2584 = vld [vmem:[#allocation22 + $0x270] sm:$0xff]
        %v2585 = vld [vmem:[#allocation22 + $0x278] sm:$0xff]
        %v2586 = vld [vmem:[#allocation22 + $0x280] sm:$0xff]
        %v2587 = vld [vmem:[#allocation22 + $0x288] sm:$0xff]
        %v2588 = vld [vmem:[#allocation22 + $0x290] sm:$0xff]
        %v2589 = vld [vmem:[#allocation22 + $0x298] sm:$0xff]
        %v2590 = vld [vmem:[#allocation22 + $0x2a0] sm:$0xff]
        %v2591 = vld [vmem:[#allocation22 + $0x2a8] sm:$0xff]
        %v2592 = vld [vmem:[#allocation22 + $0x2b0] sm:$0xff]
        %v2593 = vld [vmem:[#allocation22 + $0x2b8] sm:$0xff]
        %v2594 = vld [vmem:[#allocation22 + $0x2c0] sm:$0xff]
        %v2595 = vld [vmem:[#allocation22 + $0x2c8] sm:$0xff]
        %v2596 = vld [vmem:[#allocation22 + $0x2d0] sm:$0xff]
        %v2597 = vld [vmem:[#allocation22 + $0x2d8] sm:$0xff]
        %v2598 = vld [vmem:[#allocation22 + $0x2e0] sm:$0xff]
        %v2599 = vld [vmem:[#allocation22 + $0x2e8] sm:$0xff]
        %v2600 = vld [vmem:[#allocation22 + $0x2f0] sm:$0xff]
        %v2601 = vld [vmem:[#allocation22 + $0x2f8] sm:$0xff]
        %v2602 = vld [vmem:[#allocation22 + $0x300] sm:$0xff]
        %v2603 = vld [vmem:[#allocation22 + $0x308] sm:$0xff]
        %v2604 = vld [vmem:[#allocation22 + $0x310] sm:$0xff]
        %v2605 = vld [vmem:[#allocation22 + $0x318] sm:$0xff]
        %v2606 = vld [vmem:[#allocation22 + $0x320] sm:$0xff]
        %v2607 = vld [vmem:[#allocation22 + $0x328] sm:$0xff]
        %v2608 = vld [vmem:[#allocation22 + $0x330] sm:$0xff]
        %v2609 = vld [vmem:[#allocation22 + $0x338] sm:$0xff]
        %v2610 = vld [vmem:[#allocation22 + $0x340] sm:$0xff]
        %v2611 = vld [vmem:[#allocation22 + $0x348] sm:$0xff]
        %v2612 = vld [vmem:[#allocation22 + $0x350] sm:$0xff]
        %v2613 = vld [vmem:[#allocation22 + $0x358] sm:$0xff]
        %v2614 = vld [vmem:[#allocation22 + $0x360] sm:$0xff]
        %v2615 = vld [vmem:[#allocation22 + $0x368] sm:$0xff]
        %v2616 = vld [vmem:[#allocation22 + $0x370] sm:$0xff]
        %v2617 = vld [vmem:[#allocation22 + $0x378] sm:$0xff]
        %v2618 = vld [vmem:[#allocation22 + $0x380] sm:$0xff]
        %v2619 = vld [vmem:[#allocation22 + $0x388] sm:$0xff]
        %v2620 = vld [vmem:[#allocation22 + $0x390] sm:$0xff]
        %v2621 = vld [vmem:[#allocation22 + $0x398] sm:$0xff]
        %v2622 = vld [vmem:[#allocation22 + $0x3a0] sm:$0xff]
        %v2623 = vld [vmem:[#allocation22 + $0x3a8] sm:$0xff]
        %v2624 = vld [vmem:[#allocation22 + $0x3b0] sm:$0xff]
        %v2625 = vld [vmem:[#allocation22 + $0x3b8] sm:$0xff]
        %v2626 = vld [vmem:[#allocation22 + $0x3c0] sm:$0xff]
        %v2627 = vld [vmem:[#allocation22 + $0x3c8] sm:$0xff]
        %v2628 = vld [vmem:[#allocation22 + $0x3d0] sm:$0xff]
        %v2629 = vld [vmem:[#allocation22 + $0x3d8] sm:$0xff]
        %v2630 = vld [vmem:[#allocation22 + $0x3e0] sm:$0xff]
        %v2631 = vld [vmem:[#allocation22 + $0x3e8] sm:$0xff]
        %v2632 = vld [vmem:[#allocation22 + $0x3f0] sm:$0xff]
        %v2633 = vld [vmem:[#allocation22 + $0x3f8] sm:$0xff]
        %v2634 = vld [vmem:[#allocation22 + $0x400] sm:$0xff]
        %v2635 = vld [vmem:[#allocation22 + $0x408] sm:$0xff]
        %v2636 = vld [vmem:[#allocation22 + $0x410] sm:$0xff]
        %v2637 = vld [vmem:[#allocation22 + $0x418] sm:$0xff]
        %v2638 = vld [vmem:[#allocation22 + $0x420] sm:$0xff]
        %v2639 = vld [vmem:[#allocation22 + $0x428] sm:$0xff]
        %v2640 = vld [vmem:[#allocation22 + $0x430] sm:$0xff]
        %v2641 = vld [vmem:[#allocation22 + $0x438] sm:$0xff]
        %v2642 = vld [vmem:[#allocation22 + $0x440] sm:$0xff]
        %v2643 = vld [vmem:[#allocation22 + $0x448] sm:$0xff]
        %v2644 = vld [vmem:[#allocation22 + $0x450] sm:$0xff]
        %v2645 = vld [vmem:[#allocation22 + $0x458] sm:$0xff]
        %v2646 = vld [vmem:[#allocation22 + $0x460] sm:$0xff]
        %v2647 = vld [vmem:[#allocation22 + $0x468] sm:$0xff]
        %v2648 = vld [vmem:[#allocation22 + $0x470] sm:$0xff]
        %v2649 = vld [vmem:[#allocation22 + $0x478] sm:$0xff]
        %v2650 = vld [vmem:[#allocation22 + $0x480] sm:$0xff]
        %v2651 = vld [vmem:[#allocation22 + $0x488] sm:$0xff]
        %v2652 = vld [vmem:[#allocation22 + $0x490] sm:$0xff]
        %v2653 = vld [vmem:[#allocation22 + $0x498] sm:$0xff]
        %v2654 = vld [vmem:[#allocation22 + $0x4a0] sm:$0xff]
        %v2655 = vld [vmem:[#allocation22 + $0x4a8] sm:$0xff]
        %v2656 = vld [vmem:[#allocation22 + $0x4b0] sm:$0xff]
        %v2657 = vld [vmem:[#allocation22 + $0x4b8] sm:$0xff]
        %v2658 = vld [vmem:[#allocation22 + $0x4c0] sm:$0xff]
        %v2659 = vld [vmem:[#allocation22 + $0x4c8] sm:$0xff]
        %v2660 = vld [vmem:[#allocation22 + $0x4d0] sm:$0xff]
        %v2661 = vld [vmem:[#allocation22 + $0x4d8] sm:$0xff]
        %v2662 = vld [vmem:[#allocation22 + $0x4e0] sm:$0xff]
        %v2663 = vld [vmem:[#allocation22 + $0x4e8] sm:$0xff]
        %v2664 = vld [vmem:[#allocation22 + $0x4f0] sm:$0xff]
        %v2665 = vld [vmem:[#allocation22 + $0x4f8] sm:$0xff]
        %v2666 = vld [vmem:[#allocation22 + $0x500] sm:$0xff]
        %v2667 = vld [vmem:[#allocation22 + $0x508] sm:$0xff]
        %v2668 = vld [vmem:[#allocation22 + $0x510] sm:$0xff]
        %v2669 = vld [vmem:[#allocation22 + $0x518] sm:$0xff]
        %v2670 = vld [vmem:[#allocation22 + $0x520] sm:$0xff]
        %v2671 = vld [vmem:[#allocation22 + $0x528] sm:$0xff]
        %v2672 = vld [vmem:[#allocation22 + $0x530] sm:$0xff]
        %v2673 = vld [vmem:[#allocation22 + $0x538] sm:$0xff]
        %v2674 = vld [vmem:[#allocation22 + $0x540] sm:$0xff]
        %v2675 = vld [vmem:[#allocation22 + $0x548] sm:$0xff]
        %v2676 = vld [vmem:[#allocation22 + $0x550] sm:$0xff]
        %v2677 = vld [vmem:[#allocation22 + $0x558] sm:$0xff]
        %v2678 = vld [vmem:[#allocation22 + $0x560] sm:$0xff]
        %v2679 = vld [vmem:[#allocation22 + $0x568] sm:$0xff]
        %v2680 = vld [vmem:[#allocation22 + $0x570] sm:$0xff]
        %v2681 = vld [vmem:[#allocation22 + $0x578] sm:$0xff]
        %v2682 = vld [vmem:[#allocation22 + $0x580] sm:$0xff]
        %v2683 = vld [vmem:[#allocation22 + $0x588] sm:$0xff]
        %v2684 = vld [vmem:[#allocation22 + $0x590] sm:$0xff]
        %v2685 = vld [vmem:[#allocation22 + $0x598] sm:$0xff]
        %v2686 = vld [vmem:[#allocation22 + $0x5a0] sm:$0xff]
        %v2687 = vld [vmem:[#allocation22 + $0x5a8] sm:$0xff]
        %v2688 = vld [vmem:[#allocation22 + $0x5b0] sm:$0xff]
        %v2689 = vld [vmem:[#allocation22 + $0x5b8] sm:$0xff]
        %v2690 = vld [vmem:[#allocation22 + $0x5c0] sm:$0xff]
        %v2691 = vld [vmem:[#allocation22 + $0x5c8] sm:$0xff]
        %v2692 = vld [vmem:[#allocation22 + $0x5d0] sm:$0xff]
        %v2693 = vld [vmem:[#allocation22 + $0x5d8] sm:$0xff]
        %v2694 = vld [vmem:[#allocation22 + $0x5e0] sm:$0xff]
        %v2695 = vld [vmem:[#allocation22 + $0x5e8] sm:$0xff]
        %v2696 = vld [vmem:[#allocation22 + $0x5f0] sm:$0xff]
        %v2697 = vld [vmem:[#allocation22 + $0x5f8] sm:$0xff]
        %v2698 = vld [vmem:[#allocation22 + $0x600] sm:$0xff]
        %v2699 = vld [vmem:[#allocation22 + $0x608] sm:$0xff]
        %v2700 = vld [vmem:[#allocation22 + $0x610] sm:$0xff]
        %v2701 = vld [vmem:[#allocation22 + $0x618] sm:$0xff]
        %v2702 = vld [vmem:[#allocation22 + $0x620] sm:$0xff]
        %v2703 = vld [vmem:[#allocation22 + $0x628] sm:$0xff]
        %v2704 = vld [vmem:[#allocation22 + $0x630] sm:$0xff]
        %v2705 = vld [vmem:[#allocation22 + $0x638] sm:$0xff]
        %v2706 = vld [vmem:[#allocation22 + $0x640] sm:$0xff]
        %v2707 = vld [vmem:[#allocation22 + $0x648] sm:$0xff]
        %v2708 = vld [vmem:[#allocation22 + $0x650] sm:$0xff]
        %v2709 = vld [vmem:[#allocation22 + $0x658] sm:$0xff]
        %v2710 = vld [vmem:[#allocation22 + $0x660] sm:$0xff]
        %v2711 = vld [vmem:[#allocation22 + $0x668] sm:$0xff]
        %v2712 = vld [vmem:[#allocation22 + $0x670] sm:$0xff]
        %v2713 = vld [vmem:[#allocation22 + $0x678] sm:$0xff]
        %v2714 = vld [vmem:[#allocation22 + $0x680] sm:$0xff]
        %v2715 = vld [vmem:[#allocation22 + $0x688] sm:$0xff]
        %v2716 = vld [vmem:[#allocation22 + $0x690] sm:$0xff]
        %v2717 = vld [vmem:[#allocation22 + $0x698] sm:$0xff]
        %v2718 = vld [vmem:[#allocation22 + $0x6a0] sm:$0xff]
        %v2719 = vld [vmem:[#allocation22 + $0x6a8] sm:$0xff]
        %v2720 = vld [vmem:[#allocation22 + $0x6b0] sm:$0xff]
        %v2721 = vld [vmem:[#allocation22 + $0x6b8] sm:$0xff]
        %v2722 = vld [vmem:[#allocation22 + $0x6c0] sm:$0xff]
        %v2723 = vld [vmem:[#allocation22 + $0x6c8] sm:$0xff]
        %v2724 = vld [vmem:[#allocation22 + $0x6d0] sm:$0xff]
        %v2725 = vld [vmem:[#allocation22 + $0x6d8] sm:$0xff]
        %v2726 = vld [vmem:[#allocation22 + $0x6e0] sm:$0xff]
        %v2727 = vld [vmem:[#allocation22 + $0x6e8] sm:$0xff]
        %v2728 = vld [vmem:[#allocation22 + $0x6f0] sm:$0xff]
        %v2729 = vld [vmem:[#allocation22 + $0x6f8] sm:$0xff]
        %v2730 = vld [vmem:[#allocation22 + $0x700] sm:$0xff]
        %v2731 = vld [vmem:[#allocation22 + $0x708] sm:$0xff]
        %v2732 = vld [vmem:[#allocation22 + $0x710] sm:$0xff]
        %v2733 = vld [vmem:[#allocation22 + $0x718] sm:$0xff]
        %v2734 = vld [vmem:[#allocation22 + $0x720] sm:$0xff]
        %v2735 = vld [vmem:[#allocation22 + $0x728] sm:$0xff]
        %v2736 = vld [vmem:[#allocation22 + $0x730] sm:$0xff]
        %v2737 = vld [vmem:[#allocation22 + $0x738] sm:$0xff]
        %v2738 = vld [vmem:[#allocation22 + $0x740] sm:$0xff]
        %v2739 = vld [vmem:[#allocation22 + $0x748] sm:$0xff]
        %v2740 = vld [vmem:[#allocation22 + $0x750] sm:$0xff]
        %v2741 = vld [vmem:[#allocation22 + $0x758] sm:$0xff]
        %v2742 = vld [vmem:[#allocation22 + $0x760] sm:$0xff]
        %v2743 = vld [vmem:[#allocation22 + $0x768] sm:$0xff]
        %v2744 = vld [vmem:[#allocation22 + $0x770] sm:$0xff]
        %v2745 = vld [vmem:[#allocation22 + $0x778] sm:$0xff]
        %v2746 = vld [vmem:[#allocation22 + $0x780] sm:$0xff]
        %v2747 = vld [vmem:[#allocation22 + $0x788] sm:$0xff]
        %v2748 = vld [vmem:[#allocation22 + $0x790] sm:$0xff]
        %v2749 = vld [vmem:[#allocation22 + $0x798] sm:$0xff]
        %v2750 = vld [vmem:[#allocation22 + $0x7a0] sm:$0xff]
        %v2751 = vld [vmem:[#allocation22 + $0x7a8] sm:$0xff]
        %v2752 = vld [vmem:[#allocation22 + $0x7b0] sm:$0xff]
        %v2753 = vld [vmem:[#allocation22 + $0x7b8] sm:$0xff]
        %v2754 = vld [vmem:[#allocation22 + $0x7c0] sm:$0xff]
        %v2755 = vld [vmem:[#allocation22 + $0x7c8] sm:$0xff]
        %v2756 = vld [vmem:[#allocation22 + $0x7d0] sm:$0xff]
        %v2757 = vld [vmem:[#allocation22 + $0x7d8] sm:$0xff]
        %v2758 = vld [vmem:[#allocation22 + $0x7e0] sm:$0xff]
        %v2759 = vld [vmem:[#allocation22 + $0x7e8] sm:$0xff]
        %v2760 = vld [vmem:[#allocation22 + $0x7f0] sm:$0xff]
        %v2761 = vld [vmem:[#allocation22 + $0x7f8] sm:$0xff]
        %v2762 = vld [vmem:[#allocation24] sm:$0xff]
        %v2763 = vld [vmem:[#allocation24 + $0x8] sm:$0xff]
        %v2766 = vlaneseq
        %v2767 = vshrl.u32 %v2766, 7
        %v2768 = vsub.s32 0, %v2767
        %v2769 = vrot.slane %v2762, %v2768
        %v2770 = vlaneseq
        %v2771 = vshrl.u32 %v2770, 7
        %v2772 = vsub.s32 1, %v2771
        %v2773 = vrot.slane %v2762, %v2772
        %v2774 = vlaneseq
        %v2775 = vshrl.u32 %v2774, 7
        %v2776 = vsub.s32 2, %v2775
        %v2777 = vrot.slane %v2762, %v2776
        %v2778 = vlaneseq
        %v2779 = vshrl.u32 %v2778, 7
        %v2780 = vsub.s32 3, %v2779
        %v2781 = vrot.slane %v2762, %v2780
        %v2782 = vlaneseq
        %v2783 = vshrl.u32 %v2782, 7
        %v2784 = vsub.s32 4, %v2783
        %v2785 = vrot.slane %v2762, %v2784
        %v2786 = vlaneseq
        %v2787 = vshrl.u32 %v2786, 7
        %v2788 = vsub.s32 5, %v2787
        %v2789 = vrot.slane %v2762, %v2788
        %v2790 = vlaneseq
        %v2791 = vshrl.u32 %v2790, 7
        %v2792 = vsub.s32 6, %v2791
        %v2793 = vrot.slane %v2762, %v2792
        %v2794 = vlaneseq
        %v2795 = vshrl.u32 %v2794, 7
        %v2796 = vsub.s32 7, %v2795
        %v2797 = vrot.slane %v2762, %v2796
        %v2798 = vlaneseq
        %v2799 = vshrl.u32 %v2798, 7
        %v2800 = vsub.s32 0, %v2799
        %v2801 = vrot.slane %v2763, %v2800
        %v2802 = vlaneseq
        %v2803 = vshrl.u32 %v2802, 7
        %v2804 = vsub.s32 1, %v2803
        %v2805 = vrot.slane %v2763, %v2804
        %v2806 = vlaneseq
        %v2807 = vshrl.u32 %v2806, 7
        %v2808 = vsub.s32 2, %v2807
        %v2809 = vrot.slane %v2763, %v2808
        %v2810 = vlaneseq
        %v2811 = vshrl.u32 %v2810, 7
        %v2812 = vsub.s32 3, %v2811
        %v2813 = vrot.slane %v2763, %v2812
        %v2814 = vlaneseq
        %v2815 = vshrl.u32 %v2814, 7
        %v2816 = vsub.s32 4, %v2815
        %v2817 = vrot.slane %v2763, %v2816
        %v2818 = vlaneseq
        %v2819 = vshrl.u32 %v2818, 7
        %v2820 = vsub.s32 5, %v2819
        %v2821 = vrot.slane %v2763, %v2820
        %v2822 = vlaneseq
        %v2823 = vshrl.u32 %v2822, 7
        %v2824 = vsub.s32 6, %v2823
        %v2825 = vrot.slane %v2763, %v2824
        %v2826 = vlaneseq
        %v2827 = vshrl.u32 %v2826, 7
        %v2828 = vsub.s32 7, %v2827
        %v2829 = vrot.slane %v2763, %v2828
        %2846 = vmatprep.subr.mxu0 %v2507
        %2847 = vmatpush1.msra.mxu0 %v2506
        %2848 = vmatprep.subr.mxu0 %v2523
        %2849 = vmatpush1.msra.mxu0 %v2522
        %2850 = vmatprep.subr.mxu0 %v2539
        %2851 = vmatpush1.msra.mxu0 %v2538
        %2852 = vmatprep.subr.mxu0 %v2555
        %2853 = vmatpush1.msra.mxu0 %v2554
        %2854 = vmatprep.subr.mxu0 %v2571
        %2855 = vmatpush1.msra.mxu0 %v2570
        %2856 = vmatprep.subr.mxu0 %v2587
        %2857 = vmatpush1.msra.mxu0 %v2586
        %2858 = vmatprep.subr.mxu0 %v2603
        %2859 = vmatpush1.msra.mxu0 %v2602
        %2860 = vmatprep.subr.mxu0 %v2619
        %2861 = vmatpush1.msra.mxu0 %v2618
        %2862 = vmatprep.subr.mxu0 %v2635
        %2863 = vmatpush1.msra.mxu0 %v2634
        %2864 = vmatprep.subr.mxu0 %v2651
        %2865 = vmatpush1.msra.mxu0 %v2650
        %2866 = vmatprep.subr.mxu0 %v2667
        %2867 = vmatpush1.msra.mxu0 %v2666
        %2868 = vmatprep.subr.mxu0 %v2683
        %2869 = vmatpush1.msra.mxu0 %v2682
        %2870 = vmatprep.subr.mxu0 %v2699
        %2871 = vmatpush1.msra.mxu0 %v2698
        %2872 = vmatprep.subr.mxu0 %v2715
        %2873 = vmatpush1.msra.mxu0 %v2714
        %2874 = vmatprep.subr.mxu0 %v2731
        %2875 = vmatpush1.msra.mxu0 %v2730
        %2876 = vmatprep.subr.mxu0 %v2747
        %2877 = vmatpush1.msra.mxu0 %v2746
        %2878 = vmatprep.subr.mxu0 0.0
        %2879 = vmatpush1.msra.mxu0 0.0
        %2880 = vmatprep.subr.mxu0 0.0
        %2881 = vmatpush1.msra.mxu0 0.0
        %2882 = vmatprep.subr.mxu0 0.0
        %2883 = vmatpush1.msra.mxu0 0.0
        %2884 = vmatprep.subr.mxu0 0.0
        %2885 = vmatpush1.msra.mxu0 0.0
        %2886 = vmatprep.subr.mxu0 0.0
        %2887 = vmatpush1.msra.mxu0 0.0
        %2888 = vmatprep.subr.mxu0 0.0
        %2889 = vmatpush1.msra.mxu0 0.0
        %2890 = vmatprep.subr.mxu0 0.0
        %2891 = vmatpush1.msra.mxu0 0.0
        %2892 = vmatprep.subr.mxu0 0.0
        %2893 = vmatpush1.msra.mxu0 0.0
        %2894 = vmatprep.subr.mxu0 0.0
        %2895 = vmatpush1.msra.mxu0 0.0
        %2896 = vmatprep.subr.mxu0 0.0
        %2897 = vmatpush1.msra.mxu0 0.0
        %2898 = vmatprep.subr.mxu0 0.0
        %2899 = vmatpush1.msra.mxu0 0.0
        %2900 = vmatprep.subr.mxu0 0.0
        %2901 = vmatpush1.msra.mxu0 0.0
        %2902 = vmatprep.subr.mxu0 0.0
        %2903 = vmatpush1.msra.mxu0 0.0
        %2904 = vmatprep.subr.mxu0 0.0
        %2905 = vmatpush1.msra.mxu0 0.0
        %2906 = vmatprep.subr.mxu0 0.0
        %2907 = vmatpush1.msra.mxu0 0.0
        %2908 = vmatprep.subr.mxu0 0.0
        %2909 = vmatpush1.msra.mxu0 0.0
        %2910 = vmatprep.mubr.f32.mxu0 0.0
        %2911 = vmatmul.mubr.f32.gmra.mrb[0].mxu0 %v2505
        %v2912 = vpop.f32.mrb[0].mxu0
        %v2913 = vadd.f32 %v2769, %v2912
        %v2914 = vpop.f32.mrb[0].mxu0
        %v2915 = vadd.f32 %v2773, %v2914
        %2916 = vdwg.mxu0
        %2917 = vmatprep.subr.mxu0 %v2509
        %2918 = vmatpush1.msra.mxu0 %v2508
        %2919 = vmatprep.subr.mxu0 %v2525
        %2920 = vmatpush1.msra.mxu0 %v2524
        %2921 = vmatprep.subr.mxu0 %v2541
        %2922 = vmatpush1.msra.mxu0 %v2540
        %2923 = vmatprep.subr.mxu0 %v2557
        %2924 = vmatpush1.msra.mxu0 %v2556
        %2925 = vmatprep.subr.mxu0 %v2573
        %2926 = vmatpush1.msra.mxu0 %v2572
        %2927 = vmatprep.subr.mxu0 %v2589
        %2928 = vmatpush1.msra.mxu0 %v2588
        %2929 = vmatprep.subr.mxu0 %v2605
        %2930 = vmatpush1.msra.mxu0 %v2604
        %2931 = vmatprep.subr.mxu0 %v2621
        %2932 = vmatpush1.msra.mxu0 %v2620
        %2933 = vmatprep.subr.mxu0 %v2637
        %2934 = vmatpush1.msra.mxu0 %v2636
        %2935 = vmatprep.subr.mxu0 %v2653
        %2936 = vmatpush1.msra.mxu0 %v2652
        %2937 = vmatprep.subr.mxu0 %v2669
        %2938 = vmatpush1.msra.mxu0 %v2668
        %2939 = vmatprep.subr.mxu0 %v2685
        %2940 = vmatpush1.msra.mxu0 %v2684
        %2941 = vmatprep.subr.mxu0 %v2701
        %2942 = vmatpush1.msra.mxu0 %v2700
        %2943 = vmatprep.subr.mxu0 %v2717
        %2944 = vmatpush1.msra.mxu0 %v2716
        %2945 = vmatprep.subr.mxu0 %v2733
        %2946 = vmatpush1.msra.mxu0 %v2732
        %2947 = vmatprep.subr.mxu0 %v2749
        %2948 = vmatpush1.msra.mxu0 %v2748
        %2949 = vmatprep.subr.mxu0 0.0
        %2950 = vmatpush1.msra.mxu0 0.0
        %2951 = vmatprep.subr.mxu0 0.0
        %2952 = vmatpush1.msra.mxu0 0.0
        %2953 = vmatprep.subr.mxu0 0.0
        %2954 = vmatpush1.msra.mxu0 0.0
        %2955 = vmatprep.subr.mxu0 0.0
        %2956 = vmatpush1.msra.mxu0 0.0
        %2957 = vmatprep.subr.mxu0 0.0
        %2958 = vmatpush1.msra.mxu0 0.0
        %2959 = vmatprep.subr.mxu0 0.0
        %2960 = vmatpush1.msra.mxu0 0.0
        %2961 = vmatprep.subr.mxu0 0.0
        %2962 = vmatpush1.msra.mxu0 0.0
        %2963 = vmatprep.subr.mxu0 0.0
        %2964 = vmatpush1.msra.mxu0 0.0
        %2965 = vmatprep.subr.mxu0 0.0
        %2966 = vmatpush1.msra.mxu0 0.0
        %2967 = vmatprep.subr.mxu0 0.0
        %2968 = vmatpush1.msra.mxu0 0.0
        %2969 = vmatprep.subr.mxu0 0.0
        %2970 = vmatpush1.msra.mxu0 0.0
        %2971 = vmatprep.subr.mxu0 0.0
        %2972 = vmatpush1.msra.mxu0 0.0
        %2973 = vmatprep.subr.mxu0 0.0
        %2974 = vmatpush1.msra.mxu0 0.0
        %2975 = vmatprep.subr.mxu0 0.0
        %2976 = vmatpush1.msra.mxu0 0.0
        %2977 = vmatprep.subr.mxu0 0.0
        %2978 = vmatpush1.msra.mxu0 0.0
        %2979 = vmatprep.subr.mxu0 0.0
        %2980 = vmatpush1.msra.mxu0 0.0
        %2981 = vmatprep.mubr.f32.mxu0 0.0
        %2982 = vmatmul.mubr.f32.gmra.mrb[0].mxu0 %v2505
        %v2983 = vpop.f32.mrb[0].mxu0
        %v2984 = vadd.f32 %v2777, %v2983
        %v2985 = vpop.f32.mrb[0].mxu0
        %v2986 = vadd.f32 %v2781, %v2985
        %2987 = vdwg.mxu0
        %2988 = vmatprep.subr.mxu0 %v2511
        %2989 = vmatpush1.msra.mxu0 %v2510
        %2990 = vmatprep.subr.mxu0 %v2527
        %2991 = vmatpush1.msra.mxu0 %v2526
        %2992 = vmatprep.subr.mxu0 %v2543
        %2993 = vmatpush1.msra.mxu0 %v2542
        %2994 = vmatprep.subr.mxu0 %v2559
        %2995 = vmatpush1.msra.mxu0 %v2558
        %2996 = vmatprep.subr.mxu0 %v2575
        %2997 = vmatpush1.msra.mxu0 %v2574
        %2998 = vmatprep.subr.mxu0 %v2591
        %2999 = vmatpush1.msra.mxu0 %v2590
        %3000 = vmatprep.subr.mxu0 %v2607
        %3001 = vmatpush1.msra.mxu0 %v2606
        %3002 = vmatprep.subr.mxu0 %v2623
        %3003 = vmatpush1.msra.mxu0 %v2622
        %3004 = vmatprep.subr.mxu0 %v2639
        %3005 = vmatpush1.msra.mxu0 %v2638
        %3006 = vmatprep.subr.mxu0 %v2655
        %3007 = vmatpush1.msra.mxu0 %v2654
        %3008 = vmatprep.subr.mxu0 %v2671
        %3009 = vmatpush1.msra.mxu0 %v2670
        %3010 = vmatprep.subr.mxu0 %v2687
        %3011 = vmatpush1.msra.mxu0 %v2686
        %3012 = vmatprep.subr.mxu0 %v2703
        %3013 = vmatpush1.msra.mxu0 %v2702
        %3014 = vmatprep.subr.mxu0 %v2719
        %3015 = vmatpush1.msra.mxu0 %v2718
        %3016 = vmatprep.subr.mxu0 %v2735
        %3017 = vmatpush1.msra.mxu0 %v2734
        %3018 = vmatprep.subr.mxu0 %v2751
        %3019 = vmatpush1.msra.mxu0 %v2750
        %3020 = vmatprep.subr.mxu0 0.0
        %3021 = vmatpush1.msra.mxu0 0.0
        %3022 = vmatprep.subr.mxu0 0.0
        %3023 = vmatpush1.msra.mxu0 0.0
        %3024 = vmatprep.subr.mxu0 0.0
        %3025 = vmatpush1.msra.mxu0 0.0
        %3026 = vmatprep.subr.mxu0 0.0
        %3027 = vmatpush1.msra.mxu0 0.0
        %3028 = vmatprep.subr.mxu0 0.0
        %3029 = vmatpush1.msra.mxu0 0.0
        %3030 = vmatprep.subr.mxu0 0.0
        %3031 = vmatpush1.msra.mxu0 0.0
        %3032 = vmatprep.subr.mxu0 0.0
        %3033 = vmatpush1.msra.mxu0 0.0
        %3034 = vmatprep.subr.mxu0 0.0
        %3035 = vmatpush1.msra.mxu0 0.0
        %3036 = vmatprep.subr.mxu0 0.0
        %3037 = vmatpush1.msra.mxu0 0.0
        %3038 = vmatprep.subr.mxu0 0.0
        %3039 = vmatpush1.msra.mxu0 0.0
        %3040 = vmatprep.subr.mxu0 0.0
        %3041 = vmatpush1.msra.mxu0 0.0
        %3042 = vmatprep.subr.mxu0 0.0
        %3043 = vmatpush1.msra.mxu0 0.0
        %3044 = vmatprep.subr.mxu0 0.0
        %3045 = vmatpush1.msra.mxu0 0.0
        %3046 = vmatprep.subr.mxu0 0.0
        %3047 = vmatpush1.msra.mxu0 0.0
        %3048 = vmatprep.subr.mxu0 0.0
        %3049 = vmatpush1.msra.mxu0 0.0
        %3050 = vmatprep.subr.mxu0 0.0
        %3051 = vmatpush1.msra.mxu0 0.0
        %3052 = vmatprep.mubr.f32.mxu0 0.0
        %3053 = vmatmul.mubr.f32.gmra.mrb[0].mxu0 %v2505
        %v3054 = vpop.f32.mrb[0].mxu0
        %v3055 = vadd.f32 %v2785, %v3054
        %v3056 = vpop.f32.mrb[0].mxu0
        %v3057 = vadd.f32 %v2789, %v3056
        %3058 = vdwg.mxu0
        %3059 = vmatprep.subr.mxu0 %v2513
        %3060 = vmatpush1.msra.mxu0 %v2512
        %3061 = vmatprep.subr.mxu0 %v2529
        %3062 = vmatpush1.msra.mxu0 %v2528
        %3063 = vmatprep.subr.mxu0 %v2545
        %3064 = vmatpush1.msra.mxu0 %v2544
        %3065 = vmatprep.subr.mxu0 %v2561
        %3066 = vmatpush1.msra.mxu0 %v2560
        %3067 = vmatprep.subr.mxu0 %v2577
        %3068 = vmatpush1.msra.mxu0 %v2576
        %3069 = vmatprep.subr.mxu0 %v2593
        %3070 = vmatpush1.msra.mxu0 %v2592
        %3071 = vmatprep.subr.mxu0 %v2609
        %3072 = vmatpush1.msra.mxu0 %v2608
        %3073 = vmatprep.subr.mxu0 %v2625
        %3074 = vmatpush1.msra.mxu0 %v2624
        %3075 = vmatprep.subr.mxu0 %v2641
        %3076 = vmatpush1.msra.mxu0 %v2640
        %3077 = vmatprep.subr.mxu0 %v2657
        %3078 = vmatpush1.msra.mxu0 %v2656
        %3079 = vmatprep.subr.mxu0 %v2673
        %3080 = vmatpush1.msra.mxu0 %v2672
        %3081 = vmatprep.subr.mxu0 %v2689
        %3082 = vmatpush1.msra.mxu0 %v2688
        %3083 = vmatprep.subr.mxu0 %v2705
        %3084 = vmatpush1.msra.mxu0 %v2704
        %3085 = vmatprep.subr.mxu0 %v2721
        %3086 = vmatpush1.msra.mxu0 %v2720
        %3087 = vmatprep.subr.mxu0 %v2737
        %3088 = vmatpush1.msra.mxu0 %v2736
        %3089 = vmatprep.subr.mxu0 %v2753
        %3090 = vmatpush1.msra.mxu0 %v2752
        %3091 = vmatprep.subr.mxu0 0.0
        %3092 = vmatpush1.msra.mxu0 0.0
        %3093 = vmatprep.subr.mxu0 0.0
        %3094 = vmatpush1.msra.mxu0 0.0
        %3095 = vmatprep.subr.mxu0 0.0
        %3096 = vmatpush1.msra.mxu0 0.0
        %3097 = vmatprep.subr.mxu0 0.0
        %3098 = vmatpush1.msra.mxu0 0.0
        %3099 = vmatprep.subr.mxu0 0.0
        %3100 = vmatpush1.msra.mxu0 0.0
        %3101 = vmatprep.subr.mxu0 0.0
        %3102 = vmatpush1.msra.mxu0 0.0
        %3103 = vmatprep.subr.mxu0 0.0
        %3104 = vmatpush1.msra.mxu0 0.0
        %3105 = vmatprep.subr.mxu0 0.0
        %3106 = vmatpush1.msra.mxu0 0.0
        %3107 = vmatprep.subr.mxu0 0.0
        %3108 = vmatpush1.msra.mxu0 0.0
        %3109 = vmatprep.subr.mxu0 0.0
        %3110 = vmatpush1.msra.mxu0 0.0
        %3111 = vmatprep.subr.mxu0 0.0
        %3112 = vmatpush1.msra.mxu0 0.0
        %3113 = vmatprep.subr.mxu0 0.0
        %3114 = vmatpush1.msra.mxu0 0.0
        %3115 = vmatprep.subr.mxu0 0.0
        %3116 = vmatpush1.msra.mxu0 0.0
        %3117 = vmatprep.subr.mxu0 0.0
        %3118 = vmatpush1.msra.mxu0 0.0
        %3119 = vmatprep.subr.mxu0 0.0
        %3120 = vmatpush1.msra.mxu0 0.0
        %3121 = vmatprep.subr.mxu0 0.0
        %3122 = vmatpush1.msra.mxu0 0.0
        %3123 = vmatprep.mubr.f32.mxu0 0.0
        %3124 = vmatmul.mubr.f32.gmra.mrb[0].mxu0 %v2505
        %v3125 = vpop.f32.mrb[0].mxu0
        %v3126 = vadd.f32 %v2793, %v3125
        %v3127 = vpop.f32.mrb[0].mxu0
        %v3128 = vadd.f32 %v2797, %v3127
        %3129 = vdwg.mxu0
        %3130 = vmatprep.subr.mxu0 %v2515
        %3131 = vmatpush1.msra.mxu0 %v2514
        %3132 = vmatprep.subr.mxu0 %v2531
        %3133 = vmatpush1.msra.mxu0 %v2530
        %3134 = vmatprep.subr.mxu0 %v2547
        %3135 = vmatpush1.msra.mxu0 %v2546
        %3136 = vmatprep.subr.mxu0 %v2563
        %3137 = vmatpush1.msra.mxu0 %v2562
        %3138 = vmatprep.subr.mxu0 %v2579
        %3139 = vmatpush1.msra.mxu0 %v2578
        %3140 = vmatprep.subr.mxu0 %v2595
        %3141 = vmatpush1.msra.mxu0 %v2594
        %3142 = vmatprep.subr.mxu0 %v2611
        %3143 = vmatpush1.msra.mxu0 %v2610
        %3144 = vmatprep.subr.mxu0 %v2627
        %3145 = vmatpush1.msra.mxu0 %v2626
        %3146 = vmatprep.subr.mxu0 %v2643
        %3147 = vmatpush1.msra.mxu0 %v2642
        %3148 = vmatprep.subr.mxu0 %v2659
        %3149 = vmatpush1.msra.mxu0 %v2658
        %3150 = vmatprep.subr.mxu0 %v2675
        %3151 = vmatpush1.msra.mxu0 %v2674
        %3152 = vmatprep.subr.mxu0 %v2691
        %3153 = vmatpush1.msra.mxu0 %v2690
        %3154 = vmatprep.subr.mxu0 %v2707
        %3155 = vmatpush1.msra.mxu0 %v2706
        %3156 = vmatprep.subr.mxu0 %v2723
        %3157 = vmatpush1.msra.mxu0 %v2722
        %3158 = vmatprep.subr.mxu0 %v2739
        %3159 = vmatpush1.msra.mxu0 %v2738
        %3160 = vmatprep.subr.mxu0 %v2755
        %3161 = vmatpush1.msra.mxu0 %v2754
        %3162 = vmatprep.subr.mxu0 0.0
        %3163 = vmatpush1.msra.mxu0 0.0
        %3164 = vmatprep.subr.mxu0 0.0
        %3165 = vmatpush1.msra.mxu0 0.0
        %3166 = vmatprep.subr.mxu0 0.0
        %3167 = vmatpush1.msra.mxu0 0.0
        %3168 = vmatprep.subr.mxu0 0.0
        %3169 = vmatpush1.msra.mxu0 0.0
        %3170 = vmatprep.subr.mxu0 0.0
        %3171 = vmatpush1.msra.mxu0 0.0
        %3172 = vmatprep.subr.mxu0 0.0
        %3173 = vmatpush1.msra.mxu0 0.0
        %3174 = vmatprep.subr.mxu0 0.0
        %3175 = vmatpush1.msra.mxu0 0.0
        %3176 = vmatprep.subr.mxu0 0.0
        %3177 = vmatpush1.msra.mxu0 0.0
        %3178 = vmatprep.subr.mxu0 0.0
        %3179 = vmatpush1.msra.mxu0 0.0
        %3180 = vmatprep.subr.mxu0 0.0
        %3181 = vmatpush1.msra.mxu0 0.0
        %3182 = vmatprep.subr.mxu0 0.0
        %3183 = vmatpush1.msra.mxu0 0.0
        %3184 = vmatprep.subr.mxu0 0.0
        %3185 = vmatpush1.msra.mxu0 0.0
        %3186 = vmatprep.subr.mxu0 0.0
        %3187 = vmatpush1.msra.mxu0 0.0
        %3188 = vmatprep.subr.mxu0 0.0
        %3189 = vmatpush1.msra.mxu0 0.0
        %3190 = vmatprep.subr.mxu0 0.0
        %3191 = vmatpush1.msra.mxu0 0.0
        %3192 = vmatprep.subr.mxu0 0.0
        %3193 = vmatpush1.msra.mxu0 0.0
        %3194 = vmatprep.mubr.f32.mxu0 0.0
        %3195 = vmatmul.mubr.f32.gmra.mrb[0].mxu0 %v2505
        %v3196 = vpop.f32.mrb[0].mxu0
        %v3197 = vadd.f32 %v2801, %v3196
        %v3198 = vpop.f32.mrb[0].mxu0
        %v3199 = vadd.f32 %v2805, %v3198
        %3200 = vdwg.mxu0
        %3201 = vmatprep.subr.mxu0 %v2517
        %3202 = vmatpush1.msra.mxu0 %v2516
        %3203 = vmatprep.subr.mxu0 %v2533
        %3204 = vmatpush1.msra.mxu0 %v2532
        %3205 = vmatprep.subr.mxu0 %v2549
        %3206 = vmatpush1.msra.mxu0 %v2548
        %3207 = vmatprep.subr.mxu0 %v2565
        %3208 = vmatpush1.msra.mxu0 %v2564
        %3209 = vmatprep.subr.mxu0 %v2581
        %3210 = vmatpush1.msra.mxu0 %v2580
        %3211 = vmatprep.subr.mxu0 %v2597
        %3212 = vmatpush1.msra.mxu0 %v2596
        %3213 = vmatprep.subr.mxu0 %v2613
        %3214 = vmatpush1.msra.mxu0 %v2612
        %3215 = vmatprep.subr.mxu0 %v2629
        %3216 = vmatpush1.msra.mxu0 %v2628
        %3217 = vmatprep.subr.mxu0 %v2645
        %3218 = vmatpush1.msra.mxu0 %v2644
        %3219 = vmatprep.subr.mxu0 %v2661
        %3220 = vmatpush1.msra.mxu0 %v2660
        %3221 = vmatprep.subr.mxu0 %v2677
        %3222 = vmatpush1.msra.mxu0 %v2676
        %3223 = vmatprep.subr.mxu0 %v2693
        %3224 = vmatpush1.msra.mxu0 %v2692
        %3225 = vmatprep.subr.mxu0 %v2709
        %3226 = vmatpush1.msra.mxu0 %v2708
        %3227 = vmatprep.subr.mxu0 %v2725
        %3228 = vmatpush1.msra.mxu0 %v2724
        %3229 = vmatprep.subr.mxu0 %v2741
        %3230 = vmatpush1.msra.mxu0 %v2740
        %3231 = vmatprep.subr.mxu0 %v2757
        %3232 = vmatpush1.msra.mxu0 %v2756
        %3233 = vmatprep.subr.mxu0 0.0
        %3234 = vmatpush1.msra.mxu0 0.0
        %3235 = vmatprep.subr.mxu0 0.0
        %3236 = vmatpush1.msra.mxu0 0.0
        %3237 = vmatprep.subr.mxu0 0.0
        %3238 = vmatpush1.msra.mxu0 0.0
        %3239 = vmatprep.subr.mxu0 0.0
        %3240 = vmatpush1.msra.mxu0 0.0
        %3241 = vmatprep.subr.mxu0 0.0
        %3242 = vmatpush1.msra.mxu0 0.0
        %3243 = vmatprep.subr.mxu0 0.0
        %3244 = vmatpush1.msra.mxu0 0.0
        %3245 = vmatprep.subr.mxu0 0.0
        %3246 = vmatpush1.msra.mxu0 0.0
        %3247 = vmatprep.subr.mxu0 0.0
        %3248 = vmatpush1.msra.mxu0 0.0
        %3249 = vmatprep.subr.mxu0 0.0
        %3250 = vmatpush1.msra.mxu0 0.0
        %3251 = vmatprep.subr.mxu0 0.0
        %3252 = vmatpush1.msra.mxu0 0.0
        %3253 = vmatprep.subr.mxu0 0.0
        %3254 = vmatpush1.msra.mxu0 0.0
        %3255 = vmatprep.subr.mxu0 0.0
        %3256 = vmatpush1.msra.mxu0 0.0
        %3257 = vmatprep.subr.mxu0 0.0
        %3258 = vmatpush1.msra.mxu0 0.0
        %3259 = vmatprep.subr.mxu0 0.0
        %3260 = vmatpush1.msra.mxu0 0.0
        %3261 = vmatprep.subr.mxu0 0.0
        %3262 = vmatpush1.msra.mxu0 0.0
        %3263 = vmatprep.subr.mxu0 0.0
        %3264 = vmatpush1.msra.mxu0 0.0
        %3265 = vmatprep.mubr.f32.mxu0 0.0
        %3266 = vmatmul.mubr.f32.gmra.mrb[0].mxu0 %v2505
        %v3267 = vpop.f32.mrb[0].mxu0
        %v3268 = vadd.f32 %v2809, %v3267
        %v3269 = vpop.f32.mrb[0].mxu0
        %v3270 = vadd.f32 %v2813, %v3269
        %3271 = vdwg.mxu0
        %3272 = vmatprep.subr.mxu0 %v2519
        %3273 = vmatpush1.msra.mxu0 %v2518
        %3274 = vmatprep.subr.mxu0 %v2535
        %3275 = vmatpush1.msra.mxu0 %v2534
        %3276 = vmatprep.subr.mxu0 %v2551
        %3277 = vmatpush1.msra.mxu0 %v2550
        %3278 = vmatprep.subr.mxu0 %v2567
        %3279 = vmatpush1.msra.mxu0 %v2566
        %3280 = vmatprep.subr.mxu0 %v2583
        %3281 = vmatpush1.msra.mxu0 %v2582
        %3282 = vmatprep.subr.mxu0 %v2599
        %3283 = vmatpush1.msra.mxu0 %v2598
        %3284 = vmatprep.subr.mxu0 %v2615
        %3285 = vmatpush1.msra.mxu0 %v2614
        %3286 = vmatprep.subr.mxu0 %v2631
        %3287 = vmatpush1.msra.mxu0 %v2630
        %3288 = vmatprep.subr.mxu0 %v2647
        %3289 = vmatpush1.msra.mxu0 %v2646
        %3290 = vmatprep.subr.mxu0 %v2663
        %3291 = vmatpush1.msra.mxu0 %v2662
        %3292 = vmatprep.subr.mxu0 %v2679
        %3293 = vmatpush1.msra.mxu0 %v2678
        %3294 = vmatprep.subr.mxu0 %v2695
        %3295 = vmatpush1.msra.mxu0 %v2694
        %3296 = vmatprep.subr.mxu0 %v2711
        %3297 = vmatpush1.msra.mxu0 %v2710
        %3298 = vmatprep.subr.mxu0 %v2727
        %3299 = vmatpush1.msra.mxu0 %v2726
        %3300 = vmatprep.subr.mxu0 %v2743
        %3301 = vmatpush1.msra.mxu0 %v2742
        %3302 = vmatprep.subr.mxu0 %v2759
        %3303 = vmatpush1.msra.mxu0 %v2758
        %3304 = vmatprep.subr.mxu0 0.0
        %3305 = vmatpush1.msra.mxu0 0.0
        %3306 = vmatprep.subr.mxu0 0.0
        %3307 = vmatpush1.msra.mxu0 0.0
        %3308 = vmatprep.subr.mxu0 0.0
        %3309 = vmatpush1.msra.mxu0 0.0
        %3310 = vmatprep.subr.mxu0 0.0
        %3311 = vmatpush1.msra.mxu0 0.0
        %3312 = vmatprep.subr.mxu0 0.0
        %3313 = vmatpush1.msra.mxu0 0.0
        %3314 = vmatprep.subr.mxu0 0.0
        %3315 = vmatpush1.msra.mxu0 0.0
        %3316 = vmatprep.subr.mxu0 0.0
        %3317 = vmatpush1.msra.mxu0 0.0
        %3318 = vmatprep.subr.mxu0 0.0
        %3319 = vmatpush1.msra.mxu0 0.0
        %3320 = vmatprep.subr.mxu0 0.0
        %3321 = vmatpush1.msra.mxu0 0.0
        %3322 = vmatprep.subr.mxu0 0.0
        %3323 = vmatpush1.msra.mxu0 0.0
        %3324 = vmatprep.subr.mxu0 0.0
        %3325 = vmatpush1.msra.mxu0 0.0
        %3326 = vmatprep.subr.mxu0 0.0
        %3327 = vmatpush1.msra.mxu0 0.0
        %3328 = vmatprep.subr.mxu0 0.0
        %3329 = vmatpush1.msra.mxu0 0.0
        %3330 = vmatprep.subr.mxu0 0.0
        %3331 = vmatpush1.msra.mxu0 0.0
        %3332 = vmatprep.subr.mxu0 0.0
        %3333 = vmatpush1.msra.mxu0 0.0
        %3334 = vmatprep.subr.mxu0 0.0
        %3335 = vmatpush1.msra.mxu0 0.0
        %3336 = vmatprep.mubr.f32.mxu0 0.0
        %3337 = vmatmul.mubr.f32.gmra.mrb[0].mxu0 %v2505
        %v3338 = vpop.f32.mrb[0].mxu0
        %v3339 = vadd.f32 %v2817, %v3338
        %v3340 = vpop.f32.mrb[0].mxu0
        %v3341 = vadd.f32 %v2821, %v3340
        %3342 = vdwg.mxu0
        %3343 = vmatprep.subr.mxu0 %v2521
        %3344 = vmatpush1.msra.mxu0 %v2520
        %3345 = vmatprep.subr.mxu0 %v2537
        %3346 = vmatpush1.msra.mxu0 %v2536
        %3347 = vmatprep.subr.mxu0 %v2553
        %3348 = vmatpush1.msra.mxu0 %v2552
        %3349 = vmatprep.subr.mxu0 %v2569
        %3350 = vmatpush1.msra.mxu0 %v2568
        %3351 = vmatprep.subr.mxu0 %v2585
        %3352 = vmatpush1.msra.mxu0 %v2584
        %3353 = vmatprep.subr.mxu0 %v2601
        %3354 = vmatpush1.msra.mxu0 %v2600
        %3355 = vmatprep.subr.mxu0 %v2617
        %3356 = vmatpush1.msra.mxu0 %v2616
        %3357 = vmatprep.subr.mxu0 %v2633
        %3358 = vmatpush1.msra.mxu0 %v2632
        %3359 = vmatprep.subr.mxu0 %v2649
        %3360 = vmatpush1.msra.mxu0 %v2648
        %3361 = vmatprep.subr.mxu0 %v2665
        %3362 = vmatpush1.msra.mxu0 %v2664
        %3363 = vmatprep.subr.mxu0 %v2681
        %3364 = vmatpush1.msra.mxu0 %v2680
        %3365 = vmatprep.subr.mxu0 %v2697
        %3366 = vmatpush1.msra.mxu0 %v2696
        %3367 = vmatprep.subr.mxu0 %v2713
        %3368 = vmatpush1.msra.mxu0 %v2712
        %3369 = vmatprep.subr.mxu0 %v2729
        %3370 = vmatpush1.msra.mxu0 %v2728
        %3371 = vmatprep.subr.mxu0 %v2745
        %3372 = vmatpush1.msra.mxu0 %v2744
        %3373 = vmatprep.subr.mxu0 %v2761
        %3374 = vmatpush1.msra.mxu0 %v2760
        %3375 = vmatprep.subr.mxu0 0.0
        %3376 = vmatpush1.msra.mxu0 0.0
        %3377 = vmatprep.subr.mxu0 0.0
        %3378 = vmatpush1.msra.mxu0 0.0
        %3379 = vmatprep.subr.mxu0 0.0
        %3380 = vmatpush1.msra.mxu0 0.0
        %3381 = vmatprep.subr.mxu0 0.0
        %3382 = vmatpush1.msra.mxu0 0.0
        %3383 = vmatprep.subr.mxu0 0.0
        %3384 = vmatpush1.msra.mxu0 0.0
        %3385 = vmatprep.subr.mxu0 0.0
        %3386 = vmatpush1.msra.mxu0 0.0
        %3387 = vmatprep.subr.mxu0 0.0
        %3388 = vmatpush1.msra.mxu0 0.0
        %3389 = vmatprep.subr.mxu0 0.0
        %3390 = vmatpush1.msra.mxu0 0.0
        %3391 = vmatprep.subr.mxu0 0.0
        %3392 = vmatpush1.msra.mxu0 0.0
        %3393 = vmatprep.subr.mxu0 0.0
        %3394 = vmatpush1.msra.mxu0 0.0
        %3395 = vmatprep.subr.mxu0 0.0
        %3396 = vmatpush1.msra.mxu0 0.0
        %3397 = vmatprep.subr.mxu0 0.0
        %3398 = vmatpush1.msra.mxu0 0.0
        %3399 = vmatprep.subr.mxu0 0.0
        %3400 = vmatpush1.msra.mxu0 0.0
        %3401 = vmatprep.subr.mxu0 0.0
        %3402 = vmatpush1.msra.mxu0 0.0
        %3403 = vmatprep.subr.mxu0 0.0
        %3404 = vmatpush1.msra.mxu0 0.0
        %3405 = vmatprep.subr.mxu0 0.0
        %3406 = vmatpush1.msra.mxu0 0.0
        %3407 = vmatprep.mubr.f32.mxu0 0.0
        %3408 = vmatmul.mubr.f32.gmra.mrb[0].mxu0 %v2505
        %v3409 = vpop.f32.mrb[0].mxu0
        %v3410 = vadd.f32 %v2825, %v3409
        %v3411 = vpop.f32.mrb[0].mxu0
        %v3412 = vadd.f32 %v2829, %v3411
        %3413 = vdwg.mxu0
        %v3414 = vmax.f32 %v2913, 0.0
        %v3415 = vmax.f32 %v2915, 0.0
        %v3416 = vmax.f32 %v2984, 0.0
        %v3417 = vmax.f32 %v2986, 0.0
        %v3418 = vmax.f32 %v3055, 0.0
        %v3419 = vmax.f32 %v3057, 0.0
        %v3420 = vmax.f32 %v3126, 0.0
        %v3421 = vmax.f32 %v3128, 0.0
        %v3422 = vmax.f32 %v3197, 0.0
        %v3423 = vmax.f32 %v3199, 0.0
        %v3424 = vmax.f32 %v3268, 0.0
        %v3425 = vmax.f32 %v3270, 0.0
        %v3426 = vmax.f32 %v3339, 0.0
        %v3427 = vmax.f32 %v3341, 0.0
        %v3428 = vmax.f32 %v3410, 0.0
        %v3429 = vmax.f32 %v3412, 0.0
        %v3430 = vld [vmem:[#allocation25] sm:$0xff]
        %v3431 = vld [vmem:[#allocation25 + $0x8] sm:$0xff]
        %v3432 = vld [vmem:[#allocation25 + $0x10] sm:$0xff]
        %v3433 = vld [vmem:[#allocation25 + $0x18] sm:$0xff]
        %v3434 = vld [vmem:[#allocation25 + $0x20] sm:$0xff]
        %v3435 = vld [vmem:[#allocation25 + $0x28] sm:$0xff]
        %v3436 = vld [vmem:[#allocation25 + $0x30] sm:$0xff]
        %v3437 = vld [vmem:[#allocation25 + $0x38] sm:$0xff]
        %v3438 = vld [vmem:[#allocation25 + $0x40] sm:$0xff]
        %v3439 = vld [vmem:[#allocation25 + $0x48] sm:$0xff]
        %v3440 = vld [vmem:[#allocation25 + $0x50] sm:$0xff]
        %v3441 = vld [vmem:[#allocation25 + $0x58] sm:$0xff]
        %v3442 = vld [vmem:[#allocation25 + $0x60] sm:$0xff]
        %v3443 = vld [vmem:[#allocation25 + $0x68] sm:$0xff]
        %v3444 = vld [vmem:[#allocation25 + $0x70] sm:$0xff]
        %v3445 = vld [vmem:[#allocation25 + $0x78] sm:$0xff]
        %v3446 = vld [vmem:[#allocation25 + $0x80] sm:$0xff]
        %v3447 = vld [vmem:[#allocation25 + $0x88] sm:$0xff]
        %v3448 = vld [vmem:[#allocation25 + $0x90] sm:$0xff]
        %v3449 = vld [vmem:[#allocation25 + $0x98] sm:$0xff]
        %v3450 = vld [vmem:[#allocation25 + $0xa0] sm:$0xff]
        %v3451 = vld [vmem:[#allocation25 + $0xa8] sm:$0xff]
        %v3452 = vld [vmem:[#allocation25 + $0xb0] sm:$0xff]
        %v3453 = vld [vmem:[#allocation25 + $0xb8] sm:$0xff]
        %v3454 = vld [vmem:[#allocation25 + $0xc0] sm:$0xff]
        %v3455 = vld [vmem:[#allocation25 + $0xc8] sm:$0xff]
        %v3456 = vld [vmem:[#allocation25 + $0xd0] sm:$0xff]
        %v3457 = vld [vmem:[#allocation25 + $0xd8] sm:$0xff]
        %v3458 = vld [vmem:[#allocation25 + $0xe0] sm:$0xff]
        %v3459 = vld [vmem:[#allocation25 + $0xe8] sm:$0xff]
        %v3460 = vld [vmem:[#allocation25 + $0xf0] sm:$0xff]
        %v3461 = vld [vmem:[#allocation25 + $0xf8] sm:$0xff]
        %v3462 = vld [vmem:[#allocation25 + $0x100] sm:$0xff]
        %v3463 = vld [vmem:[#allocation25 + $0x108] sm:$0xff]
        %v3464 = vld [vmem:[#allocation25 + $0x110] sm:$0xff]
        %v3465 = vld [vmem:[#allocation25 + $0x118] sm:$0xff]
        %v3466 = vld [vmem:[#allocation25 + $0x120] sm:$0xff]
        %v3467 = vld [vmem:[#allocation25 + $0x128] sm:$0xff]
        %v3468 = vld [vmem:[#allocation25 + $0x130] sm:$0xff]
        %v3469 = vld [vmem:[#allocation25 + $0x138] sm:$0xff]
        %v3470 = vld [vmem:[#allocation25 + $0x140] sm:$0xff]
        %v3471 = vld [vmem:[#allocation25 + $0x148] sm:$0xff]
        %v3472 = vld [vmem:[#allocation25 + $0x150] sm:$0xff]
        %v3473 = vld [vmem:[#allocation25 + $0x158] sm:$0xff]
        %v3474 = vld [vmem:[#allocation25 + $0x160] sm:$0xff]
        %v3475 = vld [vmem:[#allocation25 + $0x168] sm:$0xff]
        %v3476 = vld [vmem:[#allocation25 + $0x170] sm:$0xff]
        %v3477 = vld [vmem:[#allocation25 + $0x178] sm:$0xff]
        %v3478 = vld [vmem:[#allocation25 + $0x180] sm:$0xff]
        %v3479 = vld [vmem:[#allocation25 + $0x188] sm:$0xff]
        %v3480 = vld [vmem:[#allocation25 + $0x190] sm:$0xff]
        %v3481 = vld [vmem:[#allocation25 + $0x198] sm:$0xff]
        %v3482 = vld [vmem:[#allocation25 + $0x1a0] sm:$0xff]
        %v3483 = vld [vmem:[#allocation25 + $0x1a8] sm:$0xff]
        %v3484 = vld [vmem:[#allocation25 + $0x1b0] sm:$0xff]
        %v3485 = vld [vmem:[#allocation25 + $0x1b8] sm:$0xff]
        %v3486 = vld [vmem:[#allocation25 + $0x1c0] sm:$0xff]
        %v3487 = vld [vmem:[#allocation25 + $0x1c8] sm:$0xff]
        %v3488 = vld [vmem:[#allocation25 + $0x1d0] sm:$0xff]
        %v3489 = vld [vmem:[#allocation25 + $0x1d8] sm:$0xff]
        %v3490 = vld [vmem:[#allocation25 + $0x1e0] sm:$0xff]
        %v3491 = vld [vmem:[#allocation25 + $0x1e8] sm:$0xff]
        %v3492 = vld [vmem:[#allocation25 + $0x1f0] sm:$0xff]
        %v3493 = vld [vmem:[#allocation25 + $0x1f8] sm:$0xff]
        %v3494 = vld [vmem:[#allocation25 + $0x200] sm:$0xff]
        %v3495 = vld [vmem:[#allocation25 + $0x208] sm:$0xff]
        %v3496 = vld [vmem:[#allocation25 + $0x210] sm:$0xff]
        %v3497 = vld [vmem:[#allocation25 + $0x218] sm:$0xff]
        %v3498 = vld [vmem:[#allocation25 + $0x220] sm:$0xff]
        %v3499 = vld [vmem:[#allocation25 + $0x228] sm:$0xff]
        %v3500 = vld [vmem:[#allocation25 + $0x230] sm:$0xff]
        %v3501 = vld [vmem:[#allocation25 + $0x238] sm:$0xff]
        %v3502 = vld [vmem:[#allocation25 + $0x240] sm:$0xff]
        %v3503 = vld [vmem:[#allocation25 + $0x248] sm:$0xff]
        %v3504 = vld [vmem:[#allocation25 + $0x250] sm:$0xff]
        %v3505 = vld [vmem:[#allocation25 + $0x258] sm:$0xff]
        %v3506 = vld [vmem:[#allocation25 + $0x260] sm:$0xff]
        %v3507 = vld [vmem:[#allocation25 + $0x268] sm:$0xff]
        %v3508 = vld [vmem:[#allocation25 + $0x270] sm:$0xff]
        %v3509 = vld [vmem:[#allocation25 + $0x278] sm:$0xff]
        %v3510 = vld [vmem:[#allocation25 + $0x280] sm:$0xff]
        %v3511 = vld [vmem:[#allocation25 + $0x288] sm:$0xff]
        %v3512 = vld [vmem:[#allocation25 + $0x290] sm:$0xff]
        %v3513 = vld [vmem:[#allocation25 + $0x298] sm:$0xff]
        %v3514 = vld [vmem:[#allocation25 + $0x2a0] sm:$0xff]
        %v3515 = vld [vmem:[#allocation25 + $0x2a8] sm:$0xff]
        %v3516 = vld [vmem:[#allocation25 + $0x2b0] sm:$0xff]
        %v3517 = vld [vmem:[#allocation25 + $0x2b8] sm:$0xff]
        %v3518 = vld [vmem:[#allocation25 + $0x2c0] sm:$0xff]
        %v3519 = vld [vmem:[#allocation25 + $0x2c8] sm:$0xff]
        %v3520 = vld [vmem:[#allocation25 + $0x2d0] sm:$0xff]
        %v3521 = vld [vmem:[#allocation25 + $0x2d8] sm:$0xff]
        %v3522 = vld [vmem:[#allocation25 + $0x2e0] sm:$0xff]
        %v3523 = vld [vmem:[#allocation25 + $0x2e8] sm:$0xff]
        %v3524 = vld [vmem:[#allocation25 + $0x2f0] sm:$0xff]
        %v3525 = vld [vmem:[#allocation25 + $0x2f8] sm:$0xff]
        %v3526 = vld [vmem:[#allocation25 + $0x300] sm:$0xff]
        %v3527 = vld [vmem:[#allocation25 + $0x308] sm:$0xff]
        %v3528 = vld [vmem:[#allocation25 + $0x310] sm:$0xff]
        %v3529 = vld [vmem:[#allocation25 + $0x318] sm:$0xff]
        %v3530 = vld [vmem:[#allocation25 + $0x320] sm:$0xff]
        %v3531 = vld [vmem:[#allocation25 + $0x328] sm:$0xff]
        %v3532 = vld [vmem:[#allocation25 + $0x330] sm:$0xff]
        %v3533 = vld [vmem:[#allocation25 + $0x338] sm:$0xff]
        %v3534 = vld [vmem:[#allocation25 + $0x340] sm:$0xff]
        %v3535 = vld [vmem:[#allocation25 + $0x348] sm:$0xff]
        %v3536 = vld [vmem:[#allocation25 + $0x350] sm:$0xff]
        %v3537 = vld [vmem:[#allocation25 + $0x358] sm:$0xff]
        %v3538 = vld [vmem:[#allocation25 + $0x360] sm:$0xff]
        %v3539 = vld [vmem:[#allocation25 + $0x368] sm:$0xff]
        %v3540 = vld [vmem:[#allocation25 + $0x370] sm:$0xff]
        %v3541 = vld [vmem:[#allocation25 + $0x378] sm:$0xff]
        %v3542 = vld [vmem:[#allocation25 + $0x380] sm:$0xff]
        %v3543 = vld [vmem:[#allocation25 + $0x388] sm:$0xff]
        %v3544 = vld [vmem:[#allocation25 + $0x390] sm:$0xff]
        %v3545 = vld [vmem:[#allocation25 + $0x398] sm:$0xff]
        %v3546 = vld [vmem:[#allocation25 + $0x3a0] sm:$0xff]
        %v3547 = vld [vmem:[#allocation25 + $0x3a8] sm:$0xff]
        %v3548 = vld [vmem:[#allocation25 + $0x3b0] sm:$0xff]
        %v3549 = vld [vmem:[#allocation25 + $0x3b8] sm:$0xff]
        %v3550 = vld [vmem:[#allocation25 + $0x3c0] sm:$0xff]
        %v3551 = vld [vmem:[#allocation25 + $0x3c8] sm:$0xff]
        %v3552 = vld [vmem:[#allocation25 + $0x3d0] sm:$0xff]
        %v3553 = vld [vmem:[#allocation25 + $0x3d8] sm:$0xff]
        %v3554 = vld [vmem:[#allocation25 + $0x3e0] sm:$0xff]
        %v3555 = vld [vmem:[#allocation25 + $0x3e8] sm:$0xff]
        %v3556 = vld [vmem:[#allocation25 + $0x3f0] sm:$0xff]
        %v3557 = vld [vmem:[#allocation25 + $0x3f8] sm:$0xff]
        %v3558 = vld [vmem:[#allocation25 + $0x400] sm:$0xff]
        %v3559 = vld [vmem:[#allocation25 + $0x408] sm:$0xff]
        %v3560 = vld [vmem:[#allocation25 + $0x410] sm:$0xff]
        %v3561 = vld [vmem:[#allocation25 + $0x418] sm:$0xff]
        %v3562 = vld [vmem:[#allocation25 + $0x420] sm:$0xff]
        %v3563 = vld [vmem:[#allocation25 + $0x428] sm:$0xff]
        %v3564 = vld [vmem:[#allocation25 + $0x430] sm:$0xff]
        %v3565 = vld [vmem:[#allocation25 + $0x438] sm:$0xff]
        %v3566 = vld [vmem:[#allocation25 + $0x440] sm:$0xff]
        %v3567 = vld [vmem:[#allocation25 + $0x448] sm:$0xff]
        %v3568 = vld [vmem:[#allocation25 + $0x450] sm:$0xff]
        %v3569 = vld [vmem:[#allocation25 + $0x458] sm:$0xff]
        %v3570 = vld [vmem:[#allocation25 + $0x460] sm:$0xff]
        %v3571 = vld [vmem:[#allocation25 + $0x468] sm:$0xff]
        %v3572 = vld [vmem:[#allocation25 + $0x470] sm:$0xff]
        %v3573 = vld [vmem:[#allocation25 + $0x478] sm:$0xff]
        %v3574 = vld [vmem:[#allocation25 + $0x480] sm:$0xff]
        %v3575 = vld [vmem:[#allocation25 + $0x488] sm:$0xff]
        %v3576 = vld [vmem:[#allocation25 + $0x490] sm:$0xff]
        %v3577 = vld [vmem:[#allocation25 + $0x498] sm:$0xff]
        %v3578 = vld [vmem:[#allocation25 + $0x4a0] sm:$0xff]
        %v3579 = vld [vmem:[#allocation25 + $0x4a8] sm:$0xff]
        %v3580 = vld [vmem:[#allocation25 + $0x4b0] sm:$0xff]
        %v3581 = vld [vmem:[#allocation25 + $0x4b8] sm:$0xff]
        %v3582 = vld [vmem:[#allocation25 + $0x4c0] sm:$0xff]
        %v3583 = vld [vmem:[#allocation25 + $0x4c8] sm:$0xff]
        %v3584 = vld [vmem:[#allocation25 + $0x4d0] sm:$0xff]
        %v3585 = vld [vmem:[#allocation25 + $0x4d8] sm:$0xff]
        %v3586 = vld [vmem:[#allocation25 + $0x4e0] sm:$0xff]
        %v3587 = vld [vmem:[#allocation25 + $0x4e8] sm:$0xff]
        %v3588 = vld [vmem:[#allocation25 + $0x4f0] sm:$0xff]
        %v3589 = vld [vmem:[#allocation25 + $0x4f8] sm:$0xff]
        %v3590 = vld [vmem:[#allocation25 + $0x500] sm:$0xff]
        %v3591 = vld [vmem:[#allocation25 + $0x508] sm:$0xff]
        %v3592 = vld [vmem:[#allocation25 + $0x510] sm:$0xff]
        %v3593 = vld [vmem:[#allocation25 + $0x518] sm:$0xff]
        %v3594 = vld [vmem:[#allocation25 + $0x520] sm:$0xff]
        %v3595 = vld [vmem:[#allocation25 + $0x528] sm:$0xff]
        %v3596 = vld [vmem:[#allocation25 + $0x530] sm:$0xff]
        %v3597 = vld [vmem:[#allocation25 + $0x538] sm:$0xff]
        %v3598 = vld [vmem:[#allocation25 + $0x540] sm:$0xff]
        %v3599 = vld [vmem:[#allocation25 + $0x548] sm:$0xff]
        %v3600 = vld [vmem:[#allocation25 + $0x550] sm:$0xff]
        %v3601 = vld [vmem:[#allocation25 + $0x558] sm:$0xff]
        %v3602 = vld [vmem:[#allocation25 + $0x560] sm:$0xff]
        %v3603 = vld [vmem:[#allocation25 + $0x568] sm:$0xff]
        %v3604 = vld [vmem:[#allocation25 + $0x570] sm:$0xff]
        %v3605 = vld [vmem:[#allocation25 + $0x578] sm:$0xff]
        %v3606 = vld [vmem:[#allocation25 + $0x580] sm:$0xff]
        %v3607 = vld [vmem:[#allocation25 + $0x588] sm:$0xff]
        %v3608 = vld [vmem:[#allocation25 + $0x590] sm:$0xff]
        %v3609 = vld [vmem:[#allocation25 + $0x598] sm:$0xff]
        %v3610 = vld [vmem:[#allocation25 + $0x5a0] sm:$0xff]
        %v3611 = vld [vmem:[#allocation25 + $0x5a8] sm:$0xff]
        %v3612 = vld [vmem:[#allocation25 + $0x5b0] sm:$0xff]
        %v3613 = vld [vmem:[#allocation25 + $0x5b8] sm:$0xff]
        %v3614 = vld [vmem:[#allocation25 + $0x5c0] sm:$0xff]
        %v3615 = vld [vmem:[#allocation25 + $0x5c8] sm:$0xff]
        %v3616 = vld [vmem:[#allocation25 + $0x5d0] sm:$0xff]
        %v3617 = vld [vmem:[#allocation25 + $0x5d8] sm:$0xff]
        %v3618 = vld [vmem:[#allocation25 + $0x5e0] sm:$0xff]
        %v3619 = vld [vmem:[#allocation25 + $0x5e8] sm:$0xff]
        %v3620 = vld [vmem:[#allocation25 + $0x5f0] sm:$0xff]
        %v3621 = vld [vmem:[#allocation25 + $0x5f8] sm:$0xff]
        %v3622 = vld [vmem:[#allocation25 + $0x600] sm:$0xff]
        %v3623 = vld [vmem:[#allocation25 + $0x608] sm:$0xff]
        %v3624 = vld [vmem:[#allocation25 + $0x610] sm:$0xff]
        %v3625 = vld [vmem:[#allocation25 + $0x618] sm:$0xff]
        %v3626 = vld [vmem:[#allocation25 + $0x620] sm:$0xff]
        %v3627 = vld [vmem:[#allocation25 + $0x628] sm:$0xff]
        %v3628 = vld [vmem:[#allocation25 + $0x630] sm:$0xff]
        %v3629 = vld [vmem:[#allocation25 + $0x638] sm:$0xff]
        %v3630 = vld [vmem:[#allocation25 + $0x640] sm:$0xff]
        %v3631 = vld [vmem:[#allocation25 + $0x648] sm:$0xff]
        %v3632 = vld [vmem:[#allocation25 + $0x650] sm:$0xff]
        %v3633 = vld [vmem:[#allocation25 + $0x658] sm:$0xff]
        %v3634 = vld [vmem:[#allocation25 + $0x660] sm:$0xff]
        %v3635 = vld [vmem:[#allocation25 + $0x668] sm:$0xff]
        %v3636 = vld [vmem:[#allocation25 + $0x670] sm:$0xff]
        %v3637 = vld [vmem:[#allocation25 + $0x678] sm:$0xff]
        %v3638 = vld [vmem:[#allocation25 + $0x680] sm:$0xff]
        %v3639 = vld [vmem:[#allocation25 + $0x688] sm:$0xff]
        %v3640 = vld [vmem:[#allocation25 + $0x690] sm:$0xff]
        %v3641 = vld [vmem:[#allocation25 + $0x698] sm:$0xff]
        %v3642 = vld [vmem:[#allocation25 + $0x6a0] sm:$0xff]
        %v3643 = vld [vmem:[#allocation25 + $0x6a8] sm:$0xff]
        %v3644 = vld [vmem:[#allocation25 + $0x6b0] sm:$0xff]
        %v3645 = vld [vmem:[#allocation25 + $0x6b8] sm:$0xff]
        %v3646 = vld [vmem:[#allocation25 + $0x6c0] sm:$0xff]
        %v3647 = vld [vmem:[#allocation25 + $0x6c8] sm:$0xff]
        %v3648 = vld [vmem:[#allocation25 + $0x6d0] sm:$0xff]
        %v3649 = vld [vmem:[#allocation25 + $0x6d8] sm:$0xff]
        %v3650 = vld [vmem:[#allocation25 + $0x6e0] sm:$0xff]
        %v3651 = vld [vmem:[#allocation25 + $0x6e8] sm:$0xff]
        %v3652 = vld [vmem:[#allocation25 + $0x6f0] sm:$0xff]
        %v3653 = vld [vmem:[#allocation25 + $0x6f8] sm:$0xff]
        %v3654 = vld [vmem:[#allocation25 + $0x700] sm:$0xff]
        %v3655 = vld [vmem:[#allocation25 + $0x708] sm:$0xff]
        %v3656 = vld [vmem:[#allocation25 + $0x710] sm:$0xff]
        %v3657 = vld [vmem:[#allocation25 + $0x718] sm:$0xff]
        %v3658 = vld [vmem:[#allocation25 + $0x720] sm:$0xff]
        %v3659 = vld [vmem:[#allocation25 + $0x728] sm:$0xff]
        %v3660 = vld [vmem:[#allocation25 + $0x730] sm:$0xff]
        %v3661 = vld [vmem:[#allocation25 + $0x738] sm:$0xff]
        %v3662 = vld [vmem:[#allocation25 + $0x740] sm:$0xff]
        %v3663 = vld [vmem:[#allocation25 + $0x748] sm:$0xff]
        %v3664 = vld [vmem:[#allocation25 + $0x750] sm:$0xff]
        %v3665 = vld [vmem:[#allocation25 + $0x758] sm:$0xff]
        %v3666 = vld [vmem:[#allocation25 + $0x760] sm:$0xff]
        %v3667 = vld [vmem:[#allocation25 + $0x768] sm:$0xff]
        %v3668 = vld [vmem:[#allocation25 + $0x770] sm:$0xff]
        %v3669 = vld [vmem:[#allocation25 + $0x778] sm:$0xff]
        %v3670 = vld [vmem:[#allocation25 + $0x780] sm:$0xff]
        %v3671 = vld [vmem:[#allocation25 + $0x788] sm:$0xff]
        %v3672 = vld [vmem:[#allocation25 + $0x790] sm:$0xff]
        %v3673 = vld [vmem:[#allocation25 + $0x798] sm:$0xff]
        %v3674 = vld [vmem:[#allocation25 + $0x7a0] sm:$0xff]
        %v3675 = vld [vmem:[#allocation25 + $0x7a8] sm:$0xff]
        %v3676 = vld [vmem:[#allocation25 + $0x7b0] sm:$0xff]
        %v3677 = vld [vmem:[#allocation25 + $0x7b8] sm:$0xff]
        %v3678 = vld [vmem:[#allocation25 + $0x7c0] sm:$0xff]
        %v3679 = vld [vmem:[#allocation25 + $0x7c8] sm:$0xff]
        %v3680 = vld [vmem:[#allocation25 + $0x7d0] sm:$0xff]
        %v3681 = vld [vmem:[#allocation25 + $0x7d8] sm:$0xff]
        %v3682 = vld [vmem:[#allocation25 + $0x7e0] sm:$0xff]
        %v3683 = vld [vmem:[#allocation25 + $0x7e8] sm:$0xff]
        %v3684 = vld [vmem:[#allocation25 + $0x7f0] sm:$0xff]
        %v3685 = vld [vmem:[#allocation25 + $0x7f8] sm:$0xff]
        %v3686 = vld [vmem:[#allocation27] sm:$0x1]
        %v3688 = vlaneseq
        %v3689 = vshrl.u32 %v3688, 7
        %v3690 = vsub.s32 0, %v3689
        %v3691 = vrot.slane %v3686, %v3690
        %3693 = vmatprep.subr.mxu0 0.0
        %3694 = vmatpush1.msra.mxu0 %v3430
        %3695 = vmatprep.subr.mxu0 0.0
        %3696 = vmatpush1.msra.mxu0 %v3431
        %3697 = vmatprep.subr.mxu0 0.0
        %3698 = vmatpush1.msra.mxu0 %v3432
        %3699 = vmatprep.subr.mxu0 0.0
        %3700 = vmatpush1.msra.mxu0 %v3433
        %3701 = vmatprep.subr.mxu0 0.0
        %3702 = vmatpush1.msra.mxu0 %v3434
        %3703 = vmatprep.subr.mxu0 0.0
        %3704 = vmatpush1.msra.mxu0 %v3435
        %3705 = vmatprep.subr.mxu0 0.0
        %3706 = vmatpush1.msra.mxu0 %v3436
        %3707 = vmatprep.subr.mxu0 0.0
        %3708 = vmatpush1.msra.mxu0 %v3437
        %3709 = vmatprep.subr.mxu0 0.0
        %3710 = vmatpush1.msra.mxu0 %v3438
        %3711 = vmatprep.subr.mxu0 0.0
        %3712 = vmatpush1.msra.mxu0 %v3439
        %3713 = vmatprep.subr.mxu0 0.0
        %3714 = vmatpush1.msra.mxu0 %v3440
        %3715 = vmatprep.subr.mxu0 0.0
        %3716 = vmatpush1.msra.mxu0 %v3441
        %3717 = vmatprep.subr.mxu0 0.0
        %3718 = vmatpush1.msra.mxu0 %v3442
        %3719 = vmatprep.subr.mxu0 0.0
        %3720 = vmatpush1.msra.mxu0 %v3443
        %3721 = vmatprep.subr.mxu0 0.0
        %3722 = vmatpush1.msra.mxu0 %v3444
        %3723 = vmatprep.subr.mxu0 0.0
        %3724 = vmatpush1.msra.mxu0 %v3445
        %3725 = vmatprep.subr.mxu0 0.0
        %3726 = vmatpush1.msra.mxu0 %v3446
        %3727 = vmatprep.subr.mxu0 0.0
        %3728 = vmatpush1.msra.mxu0 %v3447
        %3729 = vmatprep.subr.mxu0 0.0
        %3730 = vmatpush1.msra.mxu0 %v3448
        %3731 = vmatprep.subr.mxu0 0.0
        %3732 = vmatpush1.msra.mxu0 %v3449
        %3733 = vmatprep.subr.mxu0 0.0
        %3734 = vmatpush1.msra.mxu0 %v3450
        %3735 = vmatprep.subr.mxu0 0.0
        %3736 = vmatpush1.msra.mxu0 %v3451
        %3737 = vmatprep.subr.mxu0 0.0
        %3738 = vmatpush1.msra.mxu0 %v3452
        %3739 = vmatprep.subr.mxu0 0.0
        %3740 = vmatpush1.msra.mxu0 %v3453
        %3741 = vmatprep.subr.mxu0 0.0
        %3742 = vmatpush1.msra.mxu0 %v3454
        %3743 = vmatprep.subr.mxu0 0.0
        %3744 = vmatpush1.msra.mxu0 %v3455
        %3745 = vmatprep.subr.mxu0 0.0
        %3746 = vmatpush1.msra.mxu0 %v3456
        %3747 = vmatprep.subr.mxu0 0.0
        %3748 = vmatpush1.msra.mxu0 %v3457
        %3749 = vmatprep.subr.mxu0 0.0
        %3750 = vmatpush1.msra.mxu0 %v3458
        %3751 = vmatprep.subr.mxu0 0.0
        %3752 = vmatpush1.msra.mxu0 %v3459
        %3753 = vmatprep.subr.mxu0 0.0
        %3754 = vmatpush1.msra.mxu0 %v3460
        %3755 = vmatprep.subr.mxu0 0.0
        %3756 = vmatpush1.msra.mxu0 %v3461
        %3757 = vmatprep.mubr.f32.mxu0 %v3415
        %3758 = vmatmul.mubr.f32.gmra.mrb[0].mxu0 %v3414
        %v3759 = vpop.f32.mrb[0].mxu0
        %v3760 = vadd.f32 %v3691, %v3759
        %v3761 = vpop.f32.mrb[0].mxu0
        %3762 = vdwg.mxu0
        %3763 = vmatprep.subr.mxu0 0.0
        %3764 = vmatpush1.msra.mxu0 %v3462
        %3765 = vmatprep.subr.mxu0 0.0
        %3766 = vmatpush1.msra.mxu0 %v3463
        %3767 = vmatprep.subr.mxu0 0.0
        %3768 = vmatpush1.msra.mxu0 %v3464
        %3769 = vmatprep.subr.mxu0 0.0
        %3770 = vmatpush1.msra.mxu0 %v3465
        %3771 = vmatprep.subr.mxu0 0.0
        %3772 = vmatpush1.msra.mxu0 %v3466
        %3773 = vmatprep.subr.mxu0 0.0
        %3774 = vmatpush1.msra.mxu0 %v3467
        %3775 = vmatprep.subr.mxu0 0.0
        %3776 = vmatpush1.msra.mxu0 %v3468
        %3777 = vmatprep.subr.mxu0 0.0
        %3778 = vmatpush1.msra.mxu0 %v3469
        %3779 = vmatprep.subr.mxu0 0.0
        %3780 = vmatpush1.msra.mxu0 %v3470
        %3781 = vmatprep.subr.mxu0 0.0
        %3782 = vmatpush1.msra.mxu0 %v3471
        %3783 = vmatprep.subr.mxu0 0.0
        %3784 = vmatpush1.msra.mxu0 %v3472
        %3785 = vmatprep.subr.mxu0 0.0
        %3786 = vmatpush1.msra.mxu0 %v3473
        %3787 = vmatprep.subr.mxu0 0.0
        %3788 = vmatpush1.msra.mxu0 %v3474
        %3789 = vmatprep.subr.mxu0 0.0
        %3790 = vmatpush1.msra.mxu0 %v3475
        %3791 = vmatprep.subr.mxu0 0.0
        %3792 = vmatpush1.msra.mxu0 %v3476
        %3793 = vmatprep.subr.mxu0 0.0
        %3794 = vmatpush1.msra.mxu0 %v3477
        %3795 = vmatprep.subr.mxu0 0.0
        %3796 = vmatpush1.msra.mxu0 %v3478
        %3797 = vmatprep.subr.mxu0 0.0
        %3798 = vmatpush1.msra.mxu0 %v3479
        %3799 = vmatprep.subr.mxu0 0.0
        %3800 = vmatpush1.msra.mxu0 %v3480
        %3801 = vmatprep.subr.mxu0 0.0
        %3802 = vmatpush1.msra.mxu0 %v3481
        %3803 = vmatprep.subr.mxu0 0.0
        %3804 = vmatpush1.msra.mxu0 %v3482
        %3805 = vmatprep.subr.mxu0 0.0
        %3806 = vmatpush1.msra.mxu0 %v3483
        %3807 = vmatprep.subr.mxu0 0.0
        %3808 = vmatpush1.msra.mxu0 %v3484
        %3809 = vmatprep.subr.mxu0 0.0
        %3810 = vmatpush1.msra.mxu0 %v3485
        %3811 = vmatprep.subr.mxu0 0.0
        %3812 = vmatpush1.msra.mxu0 %v3486
        %3813 = vmatprep.subr.mxu0 0.0
        %3814 = vmatpush1.msra.mxu0 %v3487
        %3815 = vmatprep.subr.mxu0 0.0
        %3816 = vmatpush1.msra.mxu0 %v3488
        %3817 = vmatprep.subr.mxu0 0.0
        %3818 = vmatpush1.msra.mxu0 %v3489
        %3819 = vmatprep.subr.mxu0 0.0
        %3820 = vmatpush1.msra.mxu0 %v3490
        %3821 = vmatprep.subr.mxu0 0.0
        %3822 = vmatpush1.msra.mxu0 %v3491
        %3823 = vmatprep.subr.mxu0 0.0
        %3824 = vmatpush1.msra.mxu0 %v3492
        %3825 = vmatprep.subr.mxu0 0.0
        %3826 = vmatpush1.msra.mxu0 %v3493
        %3827 = vmatprep.mubr.f32.mxu0 %v3417
        %3828 = vmatmul.mubr.f32.gmra.mrb[0].mxu0 %v3416
        %v3829 = vpop.f32.mrb[0].mxu0
        %v3830 = vadd.f32 %v3760, %v3829
        %v3831 = vpop.f32.mrb[0].mxu0
        %3832 = vdwg.mxu0
        %3833 = vmatprep.subr.mxu0 0.0
        %3834 = vmatpush1.msra.mxu0 %v3494
        %3835 = vmatprep.subr.mxu0 0.0
        %3836 = vmatpush1.msra.mxu0 %v3495
        %3837 = vmatprep.subr.mxu0 0.0
        %3838 = vmatpush1.msra.mxu0 %v3496
        %3839 = vmatprep.subr.mxu0 0.0
        %3840 = vmatpush1.msra.mxu0 %v3497
        %3841 = vmatprep.subr.mxu0 0.0
        %3842 = vmatpush1.msra.mxu0 %v3498
        %3843 = vmatprep.subr.mxu0 0.0
        %3844 = vmatpush1.msra.mxu0 %v3499
        %3845 = vmatprep.subr.mxu0 0.0
        %3846 = vmatpush1.msra.mxu0 %v3500
        %3847 = vmatprep.subr.mxu0 0.0
        %3848 = vmatpush1.msra.mxu0 %v3501
        %3849 = vmatprep.subr.mxu0 0.0
        %3850 = vmatpush1.msra.mxu0 %v3502
        %3851 = vmatprep.subr.mxu0 0.0
        %3852 = vmatpush1.msra.mxu0 %v3503
        %3853 = vmatprep.subr.mxu0 0.0
        %3854 = vmatpush1.msra.mxu0 %v3504
        %3855 = vmatprep.subr.mxu0 0.0
        %3856 = vmatpush1.msra.mxu0 %v3505
        %3857 = vmatprep.subr.mxu0 0.0
        %3858 = vmatpush1.msra.mxu0 %v3506
        %3859 = vmatprep.subr.mxu0 0.0
        %3860 = vmatpush1.msra.mxu0 %v3507
        %3861 = vmatprep.subr.mxu0 0.0
        %3862 = vmatpush1.msra.mxu0 %v3508
        %3863 = vmatprep.subr.mxu0 0.0
        %3864 = vmatpush1.msra.mxu0 %v3509
        %3865 = vmatprep.subr.mxu0 0.0
        %3866 = vmatpush1.msra.mxu0 %v3510
        %3867 = vmatprep.subr.mxu0 0.0
        %3868 = vmatpush1.msra.mxu0 %v3511
        %3869 = vmatprep.subr.mxu0 0.0
        %3870 = vmatpush1.msra.mxu0 %v3512
        %3871 = vmatprep.subr.mxu0 0.0
        %3872 = vmatpush1.msra.mxu0 %v3513
        %3873 = vmatprep.subr.mxu0 0.0
        %3874 = vmatpush1.msra.mxu0 %v3514
        %3875 = vmatprep.subr.mxu0 0.0
        %3876 = vmatpush1.msra.mxu0 %v3515
        %3877 = vmatprep.subr.mxu0 0.0
        %3878 = vmatpush1.msra.mxu0 %v3516
        %3879 = vmatprep.subr.mxu0 0.0
        %3880 = vmatpush1.msra.mxu0 %v3517
        %3881 = vmatprep.subr.mxu0 0.0
        %3882 = vmatpush1.msra.mxu0 %v3518
        %3883 = vmatprep.subr.mxu0 0.0
        %3884 = vmatpush1.msra.mxu0 %v3519
        %3885 = vmatprep.subr.mxu0 0.0
        %3886 = vmatpush1.msra.mxu0 %v3520
        %3887 = vmatprep.subr.mxu0 0.0
        %3888 = vmatpush1.msra.mxu0 %v3521
        %3889 = vmatprep.subr.mxu0 0.0
        %3890 = vmatpush1.msra.mxu0 %v3522
        %3891 = vmatprep.subr.mxu0 0.0
        %3892 = vmatpush1.msra.mxu0 %v3523
        %3893 = vmatprep.subr.mxu0 0.0
        %3894 = vmatpush1.msra.mxu0 %v3524
        %3895 = vmatprep.subr.mxu0 0.0
        %3896 = vmatpush1.msra.mxu0 %v3525
        %3897 = vmatprep.mubr.f32.mxu0 %v3419
        %3898 = vmatmul.mubr.f32.gmra.mrb[0].mxu0 %v3418
        %v3899 = vpop.f32.mrb[0].mxu0
        %v3900 = vadd.f32 %v3830, %v3899
        %v3901 = vpop.f32.mrb[0].mxu0
        %3902 = vdwg.mxu0
        %3903 = vmatprep.subr.mxu0 0.0
        %3904 = vmatpush1.msra.mxu0 %v3526
        %3905 = vmatprep.subr.mxu0 0.0
        %3906 = vmatpush1.msra.mxu0 %v3527
        %3907 = vmatprep.subr.mxu0 0.0
        %3908 = vmatpush1.msra.mxu0 %v3528
        %3909 = vmatprep.subr.mxu0 0.0
        %3910 = vmatpush1.msra.mxu0 %v3529
        %3911 = vmatprep.subr.mxu0 0.0
        %3912 = vmatpush1.msra.mxu0 %v3530
        %3913 = vmatprep.subr.mxu0 0.0
        %3914 = vmatpush1.msra.mxu0 %v3531
        %3915 = vmatprep.subr.mxu0 0.0
        %3916 = vmatpush1.msra.mxu0 %v3532
        %3917 = vmatprep.subr.mxu0 0.0
        %3918 = vmatpush1.msra.mxu0 %v3533
        %3919 = vmatprep.subr.mxu0 0.0
        %3920 = vmatpush1.msra.mxu0 %v3534
        %3921 = vmatprep.subr.mxu0 0.0
        %3922 = vmatpush1.msra.mxu0 %v3535
        %3923 = vmatprep.subr.mxu0 0.0
        %3924 = vmatpush1.msra.mxu0 %v3536
        %3925 = vmatprep.subr.mxu0 0.0
        %3926 = vmatpush1.msra.mxu0 %v3537
        %3927 = vmatprep.subr.mxu0 0.0
        %3928 = vmatpush1.msra.mxu0 %v3538
        %3929 = vmatprep.subr.mxu0 0.0
        %3930 = vmatpush1.msra.mxu0 %v3539
        %3931 = vmatprep.subr.mxu0 0.0
        %3932 = vmatpush1.msra.mxu0 %v3540
        %3933 = vmatprep.subr.mxu0 0.0
        %3934 = vmatpush1.msra.mxu0 %v3541
        %3935 = vmatprep.subr.mxu0 0.0
        %3936 = vmatpush1.msra.mxu0 %v3542
        %3937 = vmatprep.subr.mxu0 0.0
        %3938 = vmatpush1.msra.mxu0 %v3543
        %3939 = vmatprep.subr.mxu0 0.0
        %3940 = vmatpush1.msra.mxu0 %v3544
        %3941 = vmatprep.subr.mxu0 0.0
        %3942 = vmatpush1.msra.mxu0 %v3545
        %3943 = vmatprep.subr.mxu0 0.0
        %3944 = vmatpush1.msra.mxu0 %v3546
        %3945 = vmatprep.subr.mxu0 0.0
        %3946 = vmatpush1.msra.mxu0 %v3547
        %3947 = vmatprep.subr.mxu0 0.0
        %3948 = vmatpush1.msra.mxu0 %v3548
        %3949 = vmatprep.subr.mxu0 0.0
        %3950 = vmatpush1.msra.mxu0 %v3549
        %3951 = vmatprep.subr.mxu0 0.0
        %3952 = vmatpush1.msra.mxu0 %v3550
        %3953 = vmatprep.subr.mxu0 0.0
        %3954 = vmatpush1.msra.mxu0 %v3551
        %3955 = vmatprep.subr.mxu0 0.0
        %3956 = vmatpush1.msra.mxu0 %v3552
        %3957 = vmatprep.subr.mxu0 0.0
        %3958 = vmatpush1.msra.mxu0 %v3553
        %3959 = vmatprep.subr.mxu0 0.0
        %3960 = vmatpush1.msra.mxu0 %v3554
        %3961 = vmatprep.subr.mxu0 0.0
        %3962 = vmatpush1.msra.mxu0 %v3555
        %3963 = vmatprep.subr.mxu0 0.0
        %3964 = vmatpush1.msra.mxu0 %v3556
        %3965 = vmatprep.subr.mxu0 0.0
        %3966 = vmatpush1.msra.mxu0 %v3557
        %3967 = vmatprep.mubr.f32.mxu0 %v3421
        %3968 = vmatmul.mubr.f32.gmra.mrb[0].mxu0 %v3420
        %v3969 = vpop.f32.mrb[0].mxu0
        %v3970 = vadd.f32 %v3900, %v3969
        %v3971 = vpop.f32.mrb[0].mxu0
        %3972 = vdwg.mxu0
        %3973 = vmatprep.subr.mxu0 0.0
        %3974 = vmatpush1.msra.mxu0 %v3558
        %3975 = vmatprep.subr.mxu0 0.0
        %3976 = vmatpush1.msra.mxu0 %v3559
        %3977 = vmatprep.subr.mxu0 0.0
        %3978 = vmatpush1.msra.mxu0 %v3560
        %3979 = vmatprep.subr.mxu0 0.0
        %3980 = vmatpush1.msra.mxu0 %v3561
        %3981 = vmatprep.subr.mxu0 0.0
        %3982 = vmatpush1.msra.mxu0 %v3562
        %3983 = vmatprep.subr.mxu0 0.0
        %3984 = vmatpush1.msra.mxu0 %v3563
        %3985 = vmatprep.subr.mxu0 0.0
        %3986 = vmatpush1.msra.mxu0 %v3564
        %3987 = vmatprep.subr.mxu0 0.0
        %3988 = vmatpush1.msra.mxu0 %v3565
        %3989 = vmatprep.subr.mxu0 0.0
        %3990 = vmatpush1.msra.mxu0 %v3566
        %3991 = vmatprep.subr.mxu0 0.0
        %3992 = vmatpush1.msra.mxu0 %v3567
        %3993 = vmatprep.subr.mxu0 0.0
        %3994 = vmatpush1.msra.mxu0 %v3568
        %3995 = vmatprep.subr.mxu0 0.0
        %3996 = vmatpush1.msra.mxu0 %v3569
        %3997 = vmatprep.subr.mxu0 0.0
        %3998 = vmatpush1.msra.mxu0 %v3570
        %3999 = vmatprep.subr.mxu0 0.0
        %4000 = vmatpush1.msra.mxu0 %v3571
        %4001 = vmatprep.subr.mxu0 0.0
        %4002 = vmatpush1.msra.mxu0 %v3572
        %4003 = vmatprep.subr.mxu0 0.0
        %4004 = vmatpush1.msra.mxu0 %v3573
        %4005 = vmatprep.subr.mxu0 0.0
        %4006 = vmatpush1.msra.mxu0 %v3574
        %4007 = vmatprep.subr.mxu0 0.0
        %4008 = vmatpush1.msra.mxu0 %v3575
        %4009 = vmatprep.subr.mxu0 0.0
        %4010 = vmatpush1.msra.mxu0 %v3576
        %4011 = vmatprep.subr.mxu0 0.0
        %4012 = vmatpush1.msra.mxu0 %v3577
        %4013 = vmatprep.subr.mxu0 0.0
        %4014 = vmatpush1.msra.mxu0 %v3578
        %4015 = vmatprep.subr.mxu0 0.0
        %4016 = vmatpush1.msra.mxu0 %v3579
        %4017 = vmatprep.subr.mxu0 0.0
        %4018 = vmatpush1.msra.mxu0 %v3580
        %4019 = vmatprep.subr.mxu0 0.0
        %4020 = vmatpush1.msra.mxu0 %v3581
        %4021 = vmatprep.subr.mxu0 0.0
        %4022 = vmatpush1.msra.mxu0 %v3582
        %4023 = vmatprep.subr.mxu0 0.0
        %4024 = vmatpush1.msra.mxu0 %v3583
        %4025 = vmatprep.subr.mxu0 0.0
        %4026 = vmatpush1.msra.mxu0 %v3584
        %4027 = vmatprep.subr.mxu0 0.0
        %4028 = vmatpush1.msra.mxu0 %v3585
        %4029 = vmatprep.subr.mxu0 0.0
        %4030 = vmatpush1.msra.mxu0 %v3586
        %4031 = vmatprep.subr.mxu0 0.0
        %4032 = vmatpush1.msra.mxu0 %v3587
        %4033 = vmatprep.subr.mxu0 0.0
        %4034 = vmatpush1.msra.mxu0 %v3588
        %4035 = vmatprep.subr.mxu0 0.0
        %4036 = vmatpush1.msra.mxu0 %v3589
        %4037 = vmatprep.mubr.f32.mxu0 %v3423
        %4038 = vmatmul.mubr.f32.gmra.mrb[0].mxu0 %v3422
        %v4039 = vpop.f32.mrb[0].mxu0
        %v4040 = vadd.f32 %v3970, %v4039
        %v4041 = vpop.f32.mrb[0].mxu0
        %4042 = vdwg.mxu0
        %4043 = vmatprep.subr.mxu0 0.0
        %4044 = vmatpush1.msra.mxu0 %v3590
        %4045 = vmatprep.subr.mxu0 0.0
        %4046 = vmatpush1.msra.mxu0 %v3591
        %4047 = vmatprep.subr.mxu0 0.0
        %4048 = vmatpush1.msra.mxu0 %v3592
        %4049 = vmatprep.subr.mxu0 0.0
        %4050 = vmatpush1.msra.mxu0 %v3593
        %4051 = vmatprep.subr.mxu0 0.0
        %4052 = vmatpush1.msra.mxu0 %v3594
        %4053 = vmatprep.subr.mxu0 0.0
        %4054 = vmatpush1.msra.mxu0 %v3595
        %4055 = vmatprep.subr.mxu0 0.0
        %4056 = vmatpush1.msra.mxu0 %v3596
        %4057 = vmatprep.subr.mxu0 0.0
        %4058 = vmatpush1.msra.mxu0 %v3597
        %4059 = vmatprep.subr.mxu0 0.0
        %4060 = vmatpush1.msra.mxu0 %v3598
        %4061 = vmatprep.subr.mxu0 0.0
        %4062 = vmatpush1.msra.mxu0 %v3599
        %4063 = vmatprep.subr.mxu0 0.0
        %4064 = vmatpush1.msra.mxu0 %v3600
        %4065 = vmatprep.subr.mxu0 0.0
        %4066 = vmatpush1.msra.mxu0 %v3601
        %4067 = vmatprep.subr.mxu0 0.0
        %4068 = vmatpush1.msra.mxu0 %v3602
        %4069 = vmatprep.subr.mxu0 0.0
        %4070 = vmatpush1.msra.mxu0 %v3603
        %4071 = vmatprep.subr.mxu0 0.0
        %4072 = vmatpush1.msra.mxu0 %v3604
        %4073 = vmatprep.subr.mxu0 0.0
        %4074 = vmatpush1.msra.mxu0 %v3605
        %4075 = vmatprep.subr.mxu0 0.0
        %4076 = vmatpush1.msra.mxu0 %v3606
        %4077 = vmatprep.subr.mxu0 0.0
        %4078 = vmatpush1.msra.mxu0 %v3607
        %4079 = vmatprep.subr.mxu0 0.0
        %4080 = vmatpush1.msra.mxu0 %v3608
        %4081 = vmatprep.subr.mxu0 0.0
        %4082 = vmatpush1.msra.mxu0 %v3609
        %4083 = vmatprep.subr.mxu0 0.0
        %4084 = vmatpush1.msra.mxu0 %v3610
        %4085 = vmatprep.subr.mxu0 0.0
        %4086 = vmatpush1.msra.mxu0 %v3611
        %4087 = vmatprep.subr.mxu0 0.0
        %4088 = vmatpush1.msra.mxu0 %v3612
        %4089 = vmatprep.subr.mxu0 0.0
        %4090 = vmatpush1.msra.mxu0 %v3613
        %4091 = vmatprep.subr.mxu0 0.0
        %4092 = vmatpush1.msra.mxu0 %v3614
        %4093 = vmatprep.subr.mxu0 0.0
        %4094 = vmatpush1.msra.mxu0 %v3615
        %4095 = vmatprep.subr.mxu0 0.0
        %4096 = vmatpush1.msra.mxu0 %v3616
        %4097 = vmatprep.subr.mxu0 0.0
        %4098 = vmatpush1.msra.mxu0 %v3617
        %4099 = vmatprep.subr.mxu0 0.0
        %4100 = vmatpush1.msra.mxu0 %v3618
        %4101 = vmatprep.subr.mxu0 0.0
        %4102 = vmatpush1.msra.mxu0 %v3619
        %4103 = vmatprep.subr.mxu0 0.0
        %4104 = vmatpush1.msra.mxu0 %v3620
        %4105 = vmatprep.subr.mxu0 0.0
        %4106 = vmatpush1.msra.mxu0 %v3621
        %4107 = vmatprep.mubr.f32.mxu0 %v3425
        %4108 = vmatmul.mubr.f32.gmra.mrb[0].mxu0 %v3424
        %v4109 = vpop.f32.mrb[0].mxu0
        %v4110 = vadd.f32 %v4040, %v4109
        %v4111 = vpop.f32.mrb[0].mxu0
        %4112 = vdwg.mxu0
        %4113 = vmatprep.subr.mxu0 0.0
        %4114 = vmatpush1.msra.mxu0 %v3622
        %4115 = vmatprep.subr.mxu0 0.0
        %4116 = vmatpush1.msra.mxu0 %v3623
        %4117 = vmatprep.subr.mxu0 0.0
        %4118 = vmatpush1.msra.mxu0 %v3624
        %4119 = vmatprep.subr.mxu0 0.0
        %4120 = vmatpush1.msra.mxu0 %v3625
        %4121 = vmatprep.subr.mxu0 0.0
        %4122 = vmatpush1.msra.mxu0 %v3626
        %4123 = vmatprep.subr.mxu0 0.0
        %4124 = vmatpush1.msra.mxu0 %v3627
        %4125 = vmatprep.subr.mxu0 0.0
        %4126 = vmatpush1.msra.mxu0 %v3628
        %4127 = vmatprep.subr.mxu0 0.0
        %4128 = vmatpush1.msra.mxu0 %v3629
        %4129 = vmatprep.subr.mxu0 0.0
        %4130 = vmatpush1.msra.mxu0 %v3630
        %4131 = vmatprep.subr.mxu0 0.0
        %4132 = vmatpush1.msra.mxu0 %v3631
        %4133 = vmatprep.subr.mxu0 0.0
        %4134 = vmatpush1.msra.mxu0 %v3632
        %4135 = vmatprep.subr.mxu0 0.0
        %4136 = vmatpush1.msra.mxu0 %v3633
        %4137 = vmatprep.subr.mxu0 0.0
        %4138 = vmatpush1.msra.mxu0 %v3634
        %4139 = vmatprep.subr.mxu0 0.0
        %4140 = vmatpush1.msra.mxu0 %v3635
        %4141 = vmatprep.subr.mxu0 0.0
        %4142 = vmatpush1.msra.mxu0 %v3636
        %4143 = vmatprep.subr.mxu0 0.0
        %4144 = vmatpush1.msra.mxu0 %v3637
        %4145 = vmatprep.subr.mxu0 0.0
        %4146 = vmatpush1.msra.mxu0 %v3638
        %4147 = vmatprep.subr.mxu0 0.0
        %4148 = vmatpush1.msra.mxu0 %v3639
        %4149 = vmatprep.subr.mxu0 0.0
        %4150 = vmatpush1.msra.mxu0 %v3640
        %4151 = vmatprep.subr.mxu0 0.0
        %4152 = vmatpush1.msra.mxu0 %v3641
        %4153 = vmatprep.subr.mxu0 0.0
        %4154 = vmatpush1.msra.mxu0 %v3642
        %4155 = vmatprep.subr.mxu0 0.0
        %4156 = vmatpush1.msra.mxu0 %v3643
        %4157 = vmatprep.subr.mxu0 0.0
        %4158 = vmatpush1.msra.mxu0 %v3644
        %4159 = vmatprep.subr.mxu0 0.0
        %4160 = vmatpush1.msra.mxu0 %v3645
        %4161 = vmatprep.subr.mxu0 0.0
        %4162 = vmatpush1.msra.mxu0 %v3646
        %4163 = vmatprep.subr.mxu0 0.0
        %4164 = vmatpush1.msra.mxu0 %v3647
        %4165 = vmatprep.subr.mxu0 0.0
        %4166 = vmatpush1.msra.mxu0 %v3648
        %4167 = vmatprep.subr.mxu0 0.0
        %4168 = vmatpush1.msra.mxu0 %v3649
        %4169 = vmatprep.subr.mxu0 0.0
        %4170 = vmatpush1.msra.mxu0 %v3650
        %4171 = vmatprep.subr.mxu0 0.0
        %4172 = vmatpush1.msra.mxu0 %v3651
        %4173 = vmatprep.subr.mxu0 0.0
        %4174 = vmatpush1.msra.mxu0 %v3652
        %4175 = vmatprep.subr.mxu0 0.0
        %4176 = vmatpush1.msra.mxu0 %v3653
        %4177 = vmatprep.mubr.f32.mxu0 %v3427
        %4178 = vmatmul.mubr.f32.gmra.mrb[0].mxu0 %v3426
        %v4179 = vpop.f32.mrb[0].mxu0
        %v4180 = vadd.f32 %v4110, %v4179
        %v4181 = vpop.f32.mrb[0].mxu0
        %4182 = vdwg.mxu0
        %4183 = vmatprep.subr.mxu0 0.0
        %4184 = vmatpush1.msra.mxu0 %v3654
        %4185 = vmatprep.subr.mxu0 0.0
        %4186 = vmatpush1.msra.mxu0 %v3655
        %4187 = vmatprep.subr.mxu0 0.0
        %4188 = vmatpush1.msra.mxu0 %v3656
        %4189 = vmatprep.subr.mxu0 0.0
        %4190 = vmatpush1.msra.mxu0 %v3657
        %4191 = vmatprep.subr.mxu0 0.0
        %4192 = vmatpush1.msra.mxu0 %v3658
        %4193 = vmatprep.subr.mxu0 0.0
        %4194 = vmatpush1.msra.mxu0 %v3659
        %4195 = vmatprep.subr.mxu0 0.0
        %4196 = vmatpush1.msra.mxu0 %v3660
        %4197 = vmatprep.subr.mxu0 0.0
        %4198 = vmatpush1.msra.mxu0 %v3661
        %4199 = vmatprep.subr.mxu0 0.0
        %4200 = vmatpush1.msra.mxu0 %v3662
        %4201 = vmatprep.subr.mxu0 0.0
        %4202 = vmatpush1.msra.mxu0 %v3663
        %4203 = vmatprep.subr.mxu0 0.0
        %4204 = vmatpush1.msra.mxu0 %v3664
        %4205 = vmatprep.subr.mxu0 0.0
        %4206 = vmatpush1.msra.mxu0 %v3665
        %4207 = vmatprep.subr.mxu0 0.0
        %4208 = vmatpush1.msra.mxu0 %v3666
        %4209 = vmatprep.subr.mxu0 0.0
        %4210 = vmatpush1.msra.mxu0 %v3667
        %4211 = vmatprep.subr.mxu0 0.0
        %4212 = vmatpush1.msra.mxu0 %v3668
        %4213 = vmatprep.subr.mxu0 0.0
        %4214 = vmatpush1.msra.mxu0 %v3669
        %4215 = vmatprep.subr.mxu0 0.0
        %4216 = vmatpush1.msra.mxu0 %v3670
        %4217 = vmatprep.subr.mxu0 0.0
        %4218 = vmatpush1.msra.mxu0 %v3671
        %4219 = vmatprep.subr.mxu0 0.0
        %4220 = vmatpush1.msra.mxu0 %v3672
        %4221 = vmatprep.subr.mxu0 0.0
        %4222 = vmatpush1.msra.mxu0 %v3673
        %4223 = vmatprep.subr.mxu0 0.0
        %4224 = vmatpush1.msra.mxu0 %v3674
        %4225 = vmatprep.subr.mxu0 0.0
        %4226 = vmatpush1.msra.mxu0 %v3675
        %4227 = vmatprep.subr.mxu0 0.0
        %4228 = vmatpush1.msra.mxu0 %v3676
        %4229 = vmatprep.subr.mxu0 0.0
        %4230 = vmatpush1.msra.mxu0 %v3677
        %4231 = vmatprep.subr.mxu0 0.0
        %4232 = vmatpush1.msra.mxu0 %v3678
        %4233 = vmatprep.subr.mxu0 0.0
        %4234 = vmatpush1.msra.mxu0 %v3679
        %4235 = vmatprep.subr.mxu0 0.0
        %4236 = vmatpush1.msra.mxu0 %v3680
        %4237 = vmatprep.subr.mxu0 0.0
        %4238 = vmatpush1.msra.mxu0 %v3681
        %4239 = vmatprep.subr.mxu0 0.0
        %4240 = vmatpush1.msra.mxu0 %v3682
        %4241 = vmatprep.subr.mxu0 0.0
        %4242 = vmatpush1.msra.mxu0 %v3683
        %4243 = vmatprep.subr.mxu0 0.0
        %4244 = vmatpush1.msra.mxu0 %v3684
        %4245 = vmatprep.subr.mxu0 0.0
        %4246 = vmatpush1.msra.mxu0 %v3685
        %4247 = vmatprep.mubr.f32.mxu0 %v3429
        %4248 = vmatmul.mubr.f32.gmra.mrb[0].mxu0 %v3428
        %v4249 = vpop.f32.mrb[0].mxu0
        %v4250 = vadd.f32 %v4180, %v4249
        %v4251 = vpop.f32.mrb[0].mxu0
        %4252 = vdwg.mxu0
        %v4253 = vadd.f32 %v2505, %v4250
        %v4254 = vld [vmem:[#allocation28] sm:$0x1]
        %v4255 = vld [vmem:[#allocation30] sm:$0x1]
        %4256 = vadd.xlane.f32.xlu0 %v4253
        %v4257 = vpop.xlane.xlu0 %4256
        %v4258 = vmul.f32 %v4257, 0.03125
        %v4259 = vmul.f32 %v4253, %v4253
        %4260 = vadd.xlane.f32.xlu0 %v4259
        %v4261 = vpop.xlane.xlu0 %4260
        %v4262 = vmul.f32 %v4261, 0.03125
        %v4263 = vmul.f32 %v4258, %v4258
        %v4264 = vsub.f32 %v4262, %v4263
        %v4265 = vsub.f32 %v4253, %v4258
        %v4266 = vadd.f32 %v4264, 1e-05
        %v4267 = vrsqrt.pop %v4266
        %v4268 = vmul.f32 %v4265, %v4267
        %v4270 = vlaneseq
        %v4271 = vshrl.u32 %v4270, 7
        %v4272 = vsub.s32 0, %v4271
        %v4273 = vrot.slane %v4254, %v4272
        %v4275 = vmul.f32 %v4268, %v4273
        %v4277 = vlaneseq
        %v4278 = vshrl.u32 %v4277, 7
        %v4279 = vsub.s32 0, %v4278
        %v4280 = vrot.slane %v4255, %v4279
        %v4282 = vadd.f32 %v4275, %v4280
        %4283 = vst [vmem:[%s789] sm:$0xff] %v4282
        %s4284 = sand.u32 %s426, 1
        %s4285 = scalar_lea.sflag [#allocation6], %s4284
        %s4286 = sand.u32 %s426, 1
        %s4287 = smul.addr %s4286, 8
        %s4288 = scalar_lea.vmem [#allocation31], %s4287
        // Predicated region
        $region161: #{music_transformer_forward.3} parent=87 // pred_check
          %p4289 = pneg %p436
        $region162: #{music_transformer_forward.3} parent=87 // pred_check_branch
          %4291 = sbr.rel (%p4289) target = $region164
        $region163: #{music_transformer_forward.3} parent=87 // pred_region
          %s4293 = ssub.s32 128, 128
          %4294 = vsyncadd %s4285, %s4293
          %s4295 = sadd.s32 %s47, %s46
          %s4296 = smul.addr %s4295, 128
          %s4297 = scalar_lea.hbm %s17, %s4296
          %s4299 = sshll.u32 %s4288, 4
          %s4300 = int_to_ptr.vmem [resolvable:$true] %s4299
          %4302 = dma.vmem_to_hbm [thread:$0]  %s4300, 128, %s4297, %s4285
        $region164: #{music_transformer_forward.3} parent=87 // pred_fallthru
          _
      $region88: #{music_transformer_forward.3} parent=5 // pred_fallthru
        _
      %p4303 = scmp.le.s32.totalorder 2, %s37
      // Predicated region
      $region165: #{music_transformer_forward.3} parent=5 // pred_check
        %p4304 = pneg %p4303
      $region166: #{music_transformer_forward.3} parent=5 // pred_check_branch
        %4306 = sbr.rel (%p4304) target = $region168
      $region167: #{music_transformer_forward.3} parent=5 // pred_region
        %s4307 = ssub.s32 %s37, 2
        // Predicated region
        $region169: #{music_transformer_forward.3} parent=167 // pred_check
          %p4308 = pneg %p442
        $region170: #{music_transformer_forward.3} parent=167 // pred_check_branch
          %4310 = sbr.rel (%p4308) target = $region172
        $region171: #{music_transformer_forward.3} parent=167 // pred_region
          %s4311 = sand.u32 %s427, 1
          %s4312 = scalar_lea.sflag [#allocation6], %s4311
          %s4313 = sand.u32 %s427, 1
          %s4314 = smul.addr %s4313, 8
          %s4315 = scalar_lea.vmem [#allocation31], %s4314
          %4316 = dma.done %s4312, 128
        $region172: #{music_transformer_forward.3} parent=167 // pred_fallthru
          _
      $region168: #{music_transformer_forward.3} parent=5 // pred_fallthru
        _
    $region6: #{music_transformer_forward.3} parent=1 // loop_footer
      %s41 = sadd.s32 1, %s37
    $region7: #{music_transformer_forward.3} parent=1 // loop_footer_branch
      %36 = sbr.rel target = $region3
    $region8: #{music_transformer_forward.3} parent=1 // loop_exit
      _
    %4317 = vsyncpa [#allocation5], 1
    %s4318 = scalar_lea.sflag [#allocation5], 1
    %4319 = vsyncpa %s4318, 1
    %4320 = vsyncpa [#allocation8], 1
    %4321 = vsyncpa [#allocation11], 1
    %4322 = vsyncpa [#allocation14], 1
    %4323 = vsyncpa [#allocation17], 1
    %4324 = vsyncpa [#allocation20], 1
    %4325 = vsyncpa [#allocation23], 1
    %4326 = vsyncpa [#allocation26], 1
    %4327 = vsyncpa [#allocation29], 1
    %4328 = vsyncpa [#allocation6], 1
    %s4329 = scalar_lea.sflag [#allocation6], 1
    %4330 = vsyncpa %s4329, 1

</llo_original>
